<compile_context>
chip_gen: v7x
topology: tpu7x:2x2x1
jax: 0.10.0
libtpu: 0.0.40
codegen_flags: <defaults>
</compile_context>

<pallas_src>
import functools
import math

import jax
import jax.numpy as jnp
from jax.experimental import pallas as pl
from jax.experimental.pallas import tpu as pltpu

_VMEM_LIMIT = 32 * 1024 * 1024
_LN_EPS = 1e-6

_BLOCK_PARAM_NAMES = ('ln1_g_all', 'ln1_b_all', 'wqkv_all', 'bqkv_all',
                      'wproj_all', 'bproj_all', 'ln2_g_all', 'ln2_b_all',
                      'wfc1_all', 'bfc1_all', 'wfc2_all', 'bfc2_all')


# ----------------------------------------------------------------------------
# Shared math helpers (plain jnp): used by BOTH the Pallas kernels and the
# pure-JAX reference so both paths follow identical numerics (bf16 matmul
# operands, f32 accumulation).
# ----------------------------------------------------------------------------
def _layernorm(x, g, b):
    mu = jnp.mean(x, axis=-1, keepdims=True)
    xc = x - mu
    var = jnp.mean(xc * xc, axis=-1, keepdims=True)
    return xc * jax.lax.rsqrt(var + _LN_EPS) * g + b


def _gelu_tanh(x):
    c = 0.7978845608028654  # sqrt(2/pi)
    return 0.5 * x * (1.0 + jnp.tanh(c * (x + 0.044715 * x * x * x)))


def _embed_math(p2d, w_patch, bias_all):
    # p2d: (S, P) bf16 with a zero row in the cls slot; bias_all row 0 = cls + pos[0],
    # rows 1.. = conv_bias + pos[1:]  ->  single matmul covers patch_embed + cat + pos_embed.
    return jnp.dot(p2d, w_patch, preferred_element_type=jnp.float32) + bias_all


def _block_math(x, blk, num_heads):
    (ln1g, ln1b, wqkv, bqkv, wproj, bproj,
     ln2g, ln2b, wfc1, bfc1, wfc2, bfc2) = blk
    S, D = x.shape
    dh = D // num_heads
    scale = 1.0 / math.sqrt(dh)

    # --- multi-head self-attention (pre-norm) ---
    h = _layernorm(x, ln1g, ln1b)
    qkv = jnp.dot(h.astype(jnp.bfloat16), wqkv,
                  preferred_element_type=jnp.float32) + bqkv          # (S, 3D)
    q, k, v = qkv[:, :D], qkv[:, D:2 * D], qkv[:, 2 * D:]

    heads = []
    for hh in range(num_heads):                                       # static unroll
        sl = slice(hh * dh, (hh + 1) * dh)
        qh = q[:, sl].astype(jnp.bfloat16)
        kh = k[:, sl].astype(jnp.bfloat16)
        vh = v[:, sl].astype(jnp.bfloat16)
        s = jnp.einsum('sd,td->st', qh, kh,
                       preferred_element_type=jnp.float32) * scale
        s = s - jnp.max(s, axis=-1, keepdims=True)
        e = jnp.exp(s)
        p = e / jnp.sum(e, axis=-1, keepdims=True)
        heads.append(jnp.dot(p.astype(jnp.bfloat16), vh,
                             preferred_element_type=jnp.float32))
    attn = jnp.concatenate(heads, axis=-1)                            # (S, D)
    attn = jnp.dot(attn.astype(jnp.bfloat16), wproj,
                   preferred_element_type=jnp.float32) + bproj
    x = x + attn

    # --- MLP (pre-norm) ---
    h2 = _layernorm(x, ln2g, ln2b)
    m = jnp.dot(h2.astype(jnp.bfloat16), wfc1,
                preferred_element_type=jnp.float32) + bfc1
    m = _gelu_tanh(m)
    m = jnp.dot(m.astype(jnp.bfloat16), wfc2,
                preferred_element_type=jnp.float32) + bfc2
    return x + m


def _head_math(x, g, b, pool_mat):
    ln = _layernorm(x, g, b)
    # drop cls token + adaptive average pool == one small matmul (pool_mat column 0 is zero)
    return jnp.dot(pool_mat, ln, preferred_element_type=jnp.float32)  # (part, D)


# ----------------------------------------------------------------------------
# Pallas kernels
# ----------------------------------------------------------------------------
def _embed_kernel(pp_ref, w_ref, bias_ref, out_ref):
    out_ref[0] = _embed_math(pp_ref[0], w_ref[...], bias_ref[...])


def _blocks_kernel(x_ref, ln1g_ref, ln1b_ref, wqkv_ref, bqkv_ref, wproj_ref, bproj_ref,
                   ln2g_ref, ln2b_ref, wfc1_ref, bfc1_ref, wfc2_ref, bfc2_ref,
                   out_ref, carry_ref, *, num_heads):
    # grid = (B, depth): batch outer ("parallel"), layers inner ("arbitrary").
    d = pl.program_id(1)

    @pl.when(d == 0)
    def _():
        carry_ref[...] = x_ref[0]

    blk = (ln1g_ref[0], ln1b_ref[0], wqkv_ref[0], bqkv_ref[0],
           wproj_ref[0], bproj_ref[0], ln2g_ref[0], ln2b_ref[0],
           wfc1_ref[0], bfc1_ref[0], wfc2_ref[0], bfc2_ref[0])
    y = _block_math(carry_ref[...], blk, num_heads)
    carry_ref[...] = y

    @pl.when(d == pl.num_programs(1) - 1)
    def _():
        out_ref[0] = y


def _head_kernel(x_ref, g_ref, b_ref, pm_ref, out_ref):
    out_ref[0] = _head_math(x_ref[0], g_ref[...], b_ref[...], pm_ref[...])


# ----------------------------------------------------------------------------
# Wrapper-side preparation (tiny tensors only: image patchify, param folds)
# ----------------------------------------------------------------------------
def _prepare_inputs(x_img, params, patch_size, part):
    B, C, Hi, Wi = x_img.shape
    ps = patch_size
    assert Hi % ps == 0 and Wi % ps == 0, "image size must be divisible by patch size"
    Hg, Wg = Hi // ps, Wi // ps
    N = Hg * Wg
    P = C * ps * ps
    S = N + 1
    assert N % part == 0, "adaptive pool requires part | num_patches"

    # Conv2d(k=ps, s=ps) patch embedding == matmul over flattened (C, ps, ps) patches.
    patches = x_img.reshape(B, C, Hg, ps, Wg, ps).transpose(0, 2, 4, 1, 3, 5).reshape(B, N, P)
    # zero row in the cls-token slot -> cls token + its positional embedding are folded
    # into the additive bias of the patch-embed matmul (no in-kernel concat / offset stores)
    pp = jnp.concatenate([jnp.zeros((B, 1, P), patches.dtype), patches],
                         axis=1).astype(jnp.bfloat16)                       # (B, S, P)
    bias_all = jnp.concatenate(
        [params['cls_token'] + params['pos_embed'][:1],
         params['b_patch'][None, :] + params['pos_embed'][1:]], axis=0)     # (S, D) f32

    # pooling matrix: column 0 (cls) zero; averages contiguous groups of N//part tokens.
    g = N // part
    rows = jnp.arange(part)[:, None]
    cols = jnp.arange(S)[None, :]
    mask = (cols >= 1) & ((cols - 1) // g == rows)
    pool_mat = jnp.where(mask, 1.0 / g, 0.0).astype(jnp.float32)            # (part, S)
    return pp, bias_all, pool_mat


# ----------------------------------------------------------------------------
# Forward pass: 3 pallas_calls (embed, 12 fused blocks, norm+pool head)
# ----------------------------------------------------------------------------
@functools.partial(jax.jit, static_argnames=("patch_size", "num_heads", "part"))
def la_transformer_test_forward(x_img, params, *, patch_size, num_heads, part):
    pp, bias_all, pool_mat = _prepare_inputs(x_img, params, patch_size, part)
    B, S, P = pp.shape
    D = params['w_patch'].shape[1]
    depth = params['wqkv_all'].shape[0]
    Dm = params['wfc1_all'].shape[2]

    cp_parallel = pltpu.CompilerParams(dimension_semantics=("parallel",),
                                       vmem_limit_bytes=_VMEM_LIMIT)

    # 1) patch embedding + cls token + positional embedding (fused, one matmul)
    tokens = pl.pallas_call(
        _embed_kernel,
        out_shape=jax.ShapeDtypeStruct((B, S, D), jnp.float32),
        grid=(B,),
        in_specs=[
            pl.BlockSpec((1, S, P), lambda b: (b, 0, 0)),
            pl.BlockSpec((P, D), lambda b: (0, 0)),
            pl.BlockSpec((S, D), lambda b: (0, 0)),
        ],
        out_specs=pl.BlockSpec((1, S, D), lambda b: (b, 0, 0)),
        compiler_params=cp_parallel,
    )(pp, params['w_patch'], bias_all)

    # 2) all transformer layers in ONE pallas_call; layer weights stream along the
    #    sequential depth axis, the token carry lives in VMEM scratch.
    w_spec = lambda r, c: pl.BlockSpec((1, r, c), lambda b, d: (d, 0, 0))
    tokens = pl.pallas_call(
        functools.partial(_blocks_kernel, num_heads=num_heads),
        out_shape=jax.ShapeDtypeStruct((B, S, D), jnp.float32),
        grid=(B, depth),
        in_specs=[
            pl.BlockSpec((1, S, D), lambda b, d: (b, 0, 0)),   # tokens (read at d == 0)
            w_spec(1, D), w_spec(1, D),                        # ln1 gamma / beta
            w_spec(D, 3 * D), w_spec(1, 3 * D),                # qkv weight / bias
            w_spec(D, D), w_spec(1, D),                        # attn proj weight / bias
            w_spec(1, D), w_spec(1, D),                        # ln2 gamma / beta
            w_spec(D, Dm), w_spec(1, Dm),                      # mlp fc1 weight / bias
            w_spec(Dm, D), w_spec(1, D),                       # mlp fc2 weight / bias
        ],
        out_specs=pl.BlockSpec((1, S, D), lambda b, d: (b, 0, 0)),
        scratch_shapes=[pltpu.VMEM((S, D), jnp.float32)],
        compiler_params=pltpu.CompilerParams(
            dimension_semantics=("parallel", "arbitrary"),
            vmem_limit_bytes=_VMEM_LIMIT),
    )(tokens,
      params['ln1_g_all'], params['ln1_b_all'],
      params['wqkv_all'], params['bqkv_all'],
      params['wproj_all'], params['bproj_all'],
      params['ln2_g_all'], params['ln2_b_all'],
      params['wfc1_all'], params['bfc1_all'],
      params['wfc2_all'], params['bfc2_all'])

    # 3) final LayerNorm + (drop cls + part-average pool) as one matmul, lane-dense output
    pooled = pl.pallas_call(
        _head_kernel,
        out_shape=jax.ShapeDtypeStruct((B, part, D), jnp.float32),
        grid=(B,),
        in_specs=[
            pl.BlockSpec((1, S, D), lambda b: (b, 0, 0)),
            pl.BlockSpec((1, D), lambda b: (0, 0)),
            pl.BlockSpec((1, D), lambda b: (0, 0)),
            pl.BlockSpec((part, S), lambda b: (0, 0)),
        ],
        out_specs=pl.BlockSpec((1, part, D), lambda b: (b, 0, 0)),
        compiler_params=cp_parallel,
    )(tokens, params['ln_g'], params['ln_b'], pool_mat)

    # y = x.permute(0, 2, 1): tiny (B, part, D) -> (B, D, part), kept outside the kernel so
    # the kernel output stays lane-dense (D = multiple of 128 on the lane axis).
    return jnp.transpose(pooled, (0, 2, 1))


# ----------------------------------------------------------------------------
# Parameters (structure of vit_base_patch16; random init stands in for pretrained)
# ----------------------------------------------------------------------------
def make_params(key, *, in_chans, patch_size, embed_dim, depth, mlp_ratio, num_patches):
    D, Dm = embed_dim, mlp_ratio * embed_dim
    P = in_chans * patch_size * patch_size
    S = num_patches + 1
    ks = jax.random.split(key, 18)
    nrm = lambda k, shape, std=0.02: std * jax.random.normal(k, shape, jnp.float32)
    return dict(
        w_patch=nrm(ks[0], (P, D)).astype(jnp.bfloat16),   # Conv2d patch embed as matmul
        b_patch=nrm(ks[1], (D,)),
        cls_token=nrm(ks[2], (1, D)),
        pos_embed=nrm(ks[3], (S, D)),
        ln_g=1.0 + nrm(ks[4], (1, D)),                     # final LayerNorm
        ln_b=nrm(ks[5], (1, D)),
        ln1_g_all=1.0 + nrm(ks[6], (depth, 1, D)),
        ln1_b_all=nrm(ks[7], (depth, 1, D)),
        wqkv_all=nrm(ks[8], (depth, D, 3 * D)).astype(jnp.bfloat16),
        bqkv_all=nrm(ks[9], (depth, 1, 3 * D)),
        wproj_all=nrm(ks[10], (depth, D, D)).astype(jnp.bfloat16),
        bproj_all=nrm(ks[11], (depth, 1, D)),
        ln2_g_all=1.0 + nrm(ks[12], (depth, 1, D)),
        ln2_b_all=nrm(ks[13], (depth, 1, D)),
        wfc1_all=nrm(ks[14], (depth, D, Dm)).astype(jnp.bfloat16),
        bfc1_all=nrm(ks[15], (depth, 1, Dm)),
        wfc2_all=nrm(ks[16], (depth, Dm, D)).astype(jnp.bfloat16),
        bfc2_all=nrm(ks[17], (depth, 1, D)),
    )


# ----------------------------------------------------------------------------
# Pure-JAX reference (same math helpers -> identical numerics); jitted + vmapped
# over batch so the correctness check compiles/runs quickly.
# ----------------------------------------------------------------------------
@functools.partial(jax.jit, static_argnames=("patch_size", "num_heads", "part"))
def reference_forward(x_img, params, *, patch_size, num_heads, part):
    pp, bias_all, pool_mat = _prepare_inputs(x_img, params, patch_size, part)
    depth = params['wqkv_all'].shape[0]
    x = jax.vmap(lambda p: _embed_math(p, params['w_patch'], bias_all))(pp)
    for d in range(depth):
        blk = tuple(params[n][d] for n in _BLOCK_PARAM_NAMES)
        x = jax.vmap(lambda t, _blk=blk: _block_math(t, _blk, num_heads))(x)
    out = jax.vmap(lambda t: _head_math(t, params['ln_g'], params['ln_b'], pool_mat))(x)
    return jnp.transpose(out, (0, 2, 1))


if __name__ == "__main__":
    key = jax.random.PRNGKey(0)
    k_x, k_p = jax.random.split(key)

    # Small demo config keeping the module structure (real model: 224x224 image, D=768,
    # 12 heads, S=197, part=14, depth=12, mlp_ratio=4).
    B, C, H, W = 2, 3, 32, 32
    patch_size = 16
    embed_dim, depth, num_heads, mlp_ratio = 128, 12, 2, 4
    part = 2
    num_patches = (H // patch_size) * (W // patch_size)

    x_img = jax.random.normal(k_x, (B, C, H, W), jnp.float32)
    params = make_params(k_p, in_chans=C, patch_size=patch_size, embed_dim=embed_dim,
                         depth=depth, mlp_ratio=mlp_ratio, num_patches=num_patches)

    out = la_transformer_test_forward(x_img, params, patch_size=patch_size,
                                      num_heads=num_heads, part=part)
    out = jax.block_until_ready(out)

    ref = reference_forward(x_img, params, patch_size=patch_size,
                            num_heads=num_heads, part=part)
    ref = jax.block_until_ready(ref)

    assert out.shape == (B, embed_dim, part), f"bad output shape {out.shape}"
    assert jnp.allclose(out, ref, atol=5e-3, rtol=5e-3), "Pallas output mismatch vs reference"

    print("KERNEL_OK")
</pallas_src>

<mosaic_0001>
module attributes {stable_mosaic.version = 11 : i64} {
  func.func @_embed_kernel(%arg0: i32, %arg1: memref<1x5x768xbf16, #tpu.memory_space<vmem>>, %arg2: memref<768x128xbf16, #tpu.memory_space<vmem>>, %arg3: memref<5x128xf32, #tpu.memory_space<vmem>>, %arg4: memref<1x5x128xf32, #tpu.memory_space<vmem>>) attributes {dimension_semantics = [#tpu.dimension_semantics<parallel>], iteration_bounds = array<i64: 2>, scalar_prefetch = 0 : i64, scratch_operands = 0 : i64, tpu.core_type = #tpu.core_type<tc>, window_params = [{transform_indices = @transform_0, window_bounds = array<i64: 1, 5, 768>}, {pipeline_mode = #tpu.pipeline_mode<synchronous>, transform_indices = @transform_1, window_bounds = array<i64: 768, 128>}, {pipeline_mode = #tpu.pipeline_mode<synchronous>, transform_indices = @transform_2, window_bounds = array<i64: 5, 128>}, {transform_indices = @transform_3, window_bounds = array<i64: 1, 5, 128>}]} {
    %c0 = arith.constant 0 : index
    %c0_0 = arith.constant 0 : index
    %c0_1 = arith.constant 0 : index
    %0 = vector.load %arg1[%c0, %c0_0, %c0_1] : memref<1x5x768xbf16, #tpu.memory_space<vmem>>, vector<1x5x768xbf16>
    %1 = vector.shape_cast %0 : vector<1x5x768xbf16> to vector<5x768xbf16>
    %c0_2 = arith.constant 0 : index
    %c0_3 = arith.constant 0 : index
    %2 = vector.load %arg2[%c0_2, %c0_3] : memref<768x128xbf16, #tpu.memory_space<vmem>>, vector<768x128xbf16>
    %c0_4 = arith.constant 0 : index
    %c0_5 = arith.constant 0 : index
    %3 = vector.load %arg3[%c0_4, %c0_5] : memref<5x128xf32, #tpu.memory_space<vmem>>, vector<5x128xf32>
    %cst = arith.constant dense<0.000000e+00> : vector<5x128xf32>
    %4 = tpu.matmul %1, %2, %cst {dimension_numbers = #tpu.dot_dimension_numbers<[1], [0], [0], [1], [0, 0, 1, 1], [], []>} : vector<5x768xbf16>, vector<768x128xbf16>, vector<5x128xf32> -> vector<5x128xf32>
    %5 = arith.addf %4, %3 : vector<5x128xf32>
    %c0_6 = arith.constant 0 : index
    %c0_7 = arith.constant 0 : index
    %c0_8 = arith.constant 0 : index
    %6 = vector.load %arg4[%c0_6, %c0_7, %c0_8] : memref<1x5x128xf32, #tpu.memory_space<vmem>>, vector<1x5x128xf32>
    %7 = vector.shape_cast %6 : vector<1x5x128xf32> to vector<5x128xf32>
    %8 = vector.shape_cast %5 : vector<5x128xf32> to vector<1x5x128xf32>
    tpu.vector_store %arg4[%c0_6, %c0_7, %c0_8], %8 {strides = array<i32>} : memref<1x5x128xf32, #tpu.memory_space<vmem>>, vector<1x5x128xf32>,
    return
  }
  func.func @transform_0(%arg0: i32) -> (i32, i32, i32) {
    %c0_i32 = arith.constant 0 : i32
    %c0_i32_0 = arith.constant 0 : i32
    %c0_i32_1 = arith.constant 0 : i32
    return %arg0, %c0_i32, %c0_i32_0 : i32, i32, i32
  }
  func.func @transform_1(%arg0: i32) -> (i32, i32) {
    %c0_i32 = arith.constant 0 : i32
    %c0_i32_0 = arith.constant 0 : i32
    %c0_i32_1 = arith.constant 0 : i32
    return %c0_i32, %c0_i32_0 : i32, i32
  }
  func.func @transform_2(%arg0: i32) -> (i32, i32) {
    %c0_i32 = arith.constant 0 : i32
    %c0_i32_0 = arith.constant 0 : i32
    %c0_i32_1 = arith.constant 0 : i32
    return %c0_i32, %c0_i32_0 : i32, i32
  }
  func.func @transform_3(%arg0: i32) -> (i32, i32, i32) {
    %c0_i32 = arith.constant 0 : i32
    %c0_i32_0 = arith.constant 0 : i32
    %c0_i32_1 = arith.constant 0 : i32
    return %arg0, %c0_i32, %c0_i32_0 : i32, i32, i32
  }
}

module attributes {stable_mosaic.version = 11 : i64} {
  func.func @_blocks_kernel(%arg0: i32, %arg1: i32, %arg2: memref<1x5x128xf32, #tpu.memory_space<vmem>>, %arg3: memref<1x1x128xf32, #tpu.memory_space<vmem>>, %arg4: memref<1x1x128xf32, #tpu.memory_space<vmem>>, %arg5: memref<1x128x384xbf16, #tpu.memory_space<vmem>>, %arg6: memref<1x1x384xf32, #tpu.memory_space<vmem>>, %arg7: memref<1x128x128xbf16, #tpu.memory_space<vmem>>, %arg8: memref<1x1x128xf32, #tpu.memory_space<vmem>>, %arg9: memref<1x1x128xf32, #tpu.memory_space<vmem>>, %arg10: memref<1x1x128xf32, #tpu.memory_space<vmem>>, %arg11: memref<1x128x512xbf16, #tpu.memory_space<vmem>>, %arg12: memref<1x1x512xf32, #tpu.memory_space<vmem>>, %arg13: memref<1x512x128xbf16, #tpu.memory_space<vmem>>, %arg14: memref<1x1x128xf32, #tpu.memory_space<vmem>>, %arg15: memref<1x5x128xf32, #tpu.memory_space<vmem>>, %arg16: memref<5x128xf32, #tpu.memory_space<vmem>>) attributes {dimension_semantics = [#tpu.dimension_semantics<parallel>, #tpu.dimension_semantics<arbitrary>], iteration_bounds = array<i64: 2, 12>, scalar_prefetch = 0 : i64, scratch_operands = 1 : i64, tpu.core_type = #tpu.core_type<tc>, window_params = [{transform_indices = @transform_0, window_bounds = array<i64: 1, 5, 128>}, {transform_indices = @transform_1, window_bounds = array<i64: 1, 1, 128>}, {transform_indices = @transform_2, window_bounds = array<i64: 1, 1, 128>}, {transform_indices = @transform_3, window_bounds = array<i64: 1, 128, 384>}, {transform_indices = @transform_4, window_bounds = array<i64: 1, 1, 384>}, {transform_indices = @transform_5, window_bounds = array<i64: 1, 128, 128>}, {transform_indices = @transform_6, window_bounds = array<i64: 1, 1, 128>}, {transform_indices = @transform_7, window_bounds = array<i64: 1, 1, 128>}, {transform_indices = @transform_8, window_bounds = array<i64: 1, 1, 128>}, {transform_indices = @transform_9, window_bounds = array<i64: 1, 128, 512>}, {transform_indices = @transform_10, window_bounds = array<i64: 1, 1, 512>}, {transform_indices = @transform_11, window_bounds = array<i64: 1, 512, 128>}, {transform_indices = @transform_12, window_bounds = array<i64: 1, 1, 128>}, {transform_indices = @transform_13, window_bounds = array<i64: 1, 5, 128>}]} {
    %c0_i32 = arith.constant 0 : i32
    %0 = arith.cmpi eq, %arg1, %c0_i32 : i32
    %1 = arith.extui %0 : i1 to i32
    %c0_i32_0 = arith.constant 0 : i32
    %2 = arith.cmpi ne, %1, %c0_i32_0 : i32
    scf.if %2 {
      %c0_68 = arith.constant 0 : index
      %c0_69 = arith.constant 0 : index
      %c0_70 = arith.constant 0 : index
      %147 = vector.load %arg2[%c0_68, %c0_69, %c0_70] : memref<1x5x128xf32, #tpu.memory_space<vmem>>, vector<1x5x128xf32>
      %148 = vector.shape_cast %147 : vector<1x5x128xf32> to vector<5x128xf32>
      %c0_71 = arith.constant 0 : index
      %c0_72 = arith.constant 0 : index
      %149 = vector.load %arg16[%c0_71, %c0_72] : memref<5x128xf32, #tpu.memory_space<vmem>>, vector<5x128xf32>
      tpu.vector_store %arg16[%c0_71, %c0_72], %148 {strides = array<i32>} : memref<5x128xf32, #tpu.memory_space<vmem>>, vector<5x128xf32>,
    } else {
    }
    %c0 = arith.constant 0 : index
    %c0_1 = arith.constant 0 : index
    %c0_2 = arith.constant 0 : index
    %3 = vector.load %arg3[%c0, %c0_1, %c0_2] : memref<1x1x128xf32, #tpu.memory_space<vmem>>, vector<1x1x128xf32>
    %4 = vector.shape_cast %3 : vector<1x1x128xf32> to vector<1x128xf32>
    %c0_3 = arith.constant 0 : index
    %c0_4 = arith.constant 0 : index
    %c0_5 = arith.constant 0 : index
    %5 = vector.load %arg4[%c0_3, %c0_4, %c0_5] : memref<1x1x128xf32, #tpu.memory_space<vmem>>, vector<1x1x128xf32>
    %6 = vector.shape_cast %5 : vector<1x1x128xf32> to vector<1x128xf32>
    %c0_6 = arith.constant 0 : index
    %c0_7 = arith.constant 0 : index
    %c0_8 = arith.constant 0 : index
    %7 = vector.load %arg5[%c0_6, %c0_7, %c0_8] : memref<1x128x384xbf16, #tpu.memory_space<vmem>>, vector<1x128x384xbf16>
    %8 = vector.shape_cast %7 : vector<1x128x384xbf16> to vector<128x384xbf16>
    %c0_9 = arith.constant 0 : index
    %c0_10 = arith.constant 0 : index
    %c0_11 = arith.constant 0 : index
    %9 = vector.load %arg6[%c0_9, %c0_10, %c0_11] : memref<1x1x384xf32, #tpu.memory_space<vmem>>, vector<1x1x384xf32>
    %10 = vector.shape_cast %9 : vector<1x1x384xf32> to vector<1x384xf32>
    %c0_12 = arith.constant 0 : index
    %c0_13 = arith.constant 0 : index
    %c0_14 = arith.constant 0 : index
    %11 = vector.load %arg7[%c0_12, %c0_13, %c0_14] : memref<1x128x128xbf16, #tpu.memory_space<vmem>>, vector<1x128x128xbf16>
    %12 = vector.shape_cast %11 : vector<1x128x128xbf16> to vector<128x128xbf16>
    %c0_15 = arith.constant 0 : index
    %c0_16 = arith.constant 0 : index
    %c0_17 = arith.constant 0 : index
    %13 = vector.load %arg8[%c0_15, %c0_16, %c0_17] : memref<1x1x128xf32, #tpu.memory_space<vmem>>, vector<1x1x128xf32>
    %14 = vector.shape_cast %13 : vector<1x1x128xf32> to vector<1x128xf32>
    %c0_18 = arith.constant 0 : index
    %c0_19 = arith.constant 0 : index
    %c0_20 = arith.constant 0 : index
    %15 = vector.load %arg9[%c0_18, %c0_19, %c0_20] : memref<1x1x128xf32, #tpu.memory_space<vmem>>, vector<1x1x128xf32>
    %16 = vector.shape_cast %15 : vector<1x1x128xf32> to vector<1x128xf32>
    %c0_21 = arith.constant 0 : index
    %c0_22 = arith.constant 0 : index
    %c0_23 = arith.constant 0 : index
    %17 = vector.load %arg10[%c0_21, %c0_22, %c0_23] : memref<1x1x128xf32, #tpu.memory_space<vmem>>, vector<1x1x128xf32>
    %18 = vector.shape_cast %17 : vector<1x1x128xf32> to vector<1x128xf32>
    %c0_24 = arith.constant 0 : index
    %c0_25 = arith.constant 0 : index
    %c0_26 = arith.constant 0 : index
    %19 = vector.load %arg11[%c0_24, %c0_25, %c0_26] : memref<1x128x512xbf16, #tpu.memory_space<vmem>>, vector<1x128x512xbf16>
    %20 = vector.shape_cast %19 : vector<1x128x512xbf16> to vector<128x512xbf16>
    %c0_27 = arith.constant 0 : index
    %c0_28 = arith.constant 0 : index
    %c0_29 = arith.constant 0 : index
    %21 = vector.load %arg12[%c0_27, %c0_28, %c0_29] : memref<1x1x512xf32, #tpu.memory_space<vmem>>, vector<1x1x512xf32>
    %22 = vector.shape_cast %21 : vector<1x1x512xf32> to vector<1x512xf32>
    %c0_30 = arith.constant 0 : index
    %c0_31 = arith.constant 0 : index
    %c0_32 = arith.constant 0 : index
    %23 = vector.load %arg13[%c0_30, %c0_31, %c0_32] : memref<1x512x128xbf16, #tpu.memory_space<vmem>>, vector<1x512x128xbf16>
    %24 = vector.shape_cast %23 : vector<1x512x128xbf16> to vector<512x128xbf16>
    %c0_33 = arith.constant 0 : index
    %c0_34 = arith.constant 0 : index
    %c0_35 = arith.constant 0 : index
    %25 = vector.load %arg14[%c0_33, %c0_34, %c0_35] : memref<1x1x128xf32, #tpu.memory_space<vmem>>, vector<1x1x128xf32>
    %26 = vector.shape_cast %25 : vector<1x1x128xf32> to vector<1x128xf32>
    %c0_36 = arith.constant 0 : index
    %c0_37 = arith.constant 0 : index
    %27 = vector.load %arg16[%c0_36, %c0_37] : memref<5x128xf32, #tpu.memory_space<vmem>>, vector<5x128xf32>
    %cst = arith.constant dense<0.000000e+00> : vector<5xf32>
    %28 = vector.multi_reduction <add>, %27, %cst [1] : vector<5x128xf32> to vector<5xf32>
    %29 = vector.shape_cast %28 : vector<5xf32> to vector<5x1xf32>
    %cst_38 = arith.constant 1.280000e+02 : f32
    %30 = vector.broadcast %cst_38 : f32 to vector<5x1xf32>
    %31 = arith.divf %29, %30 : vector<5x1xf32>
    %32 = vector.broadcast %31 : vector<5x1xf32> to vector<5x128xf32>
    %33 = arith.subf %27, %32 : vector<5x128xf32>
    %34 = arith.mulf %33, %33 : vector<5x128xf32>
    %cst_39 = arith.constant dense<0.000000e+00> : vector<5xf32>
    %35 = vector.multi_reduction <add>, %34, %cst_39 [1] : vector<5x128xf32> to vector<5xf32>
    %36 = vector.shape_cast %35 : vector<5xf32> to vector<5x1xf32>
    %cst_40 = arith.constant 1.280000e+02 : f32
    %37 = vector.broadcast %cst_40 : f32 to vector<5x1xf32>
    %38 = arith.divf %36, %37 : vector<5x1xf32>
    %cst_41 = arith.constant 9.99999997E-7 : f32
    %39 = vector.broadcast %cst_41 : f32 to vector<5x1xf32>
    %40 = arith.addf %38, %39 : vector<5x1xf32>
    %41 = math.rsqrt %40 : vector<5x1xf32>
    %42 = vector.broadcast %41 : vector<5x1xf32> to vector<5x128xf32>
    %43 = arith.mulf %33, %42 : vector<5x128xf32>
    %44 = vector.broadcast %4 : vector<1x128xf32> to vector<5x128xf32>
    %45 = arith.mulf %43, %44 : vector<5x128xf32>
    %46 = vector.broadcast %6 : vector<1x128xf32> to vector<5x128xf32>
    %47 = arith.addf %45, %46 : vector<5x128xf32>
    %48 = arith.truncf %47 : vector<5x128xf32> to vector<5x128xbf16>
    %cst_42 = arith.constant dense<0.000000e+00> : vector<5x384xf32>
    %49 = tpu.matmul %48, %8, %cst_42 {dimension_numbers = #tpu.dot_dimension_numbers<[1], [0], [0], [1], [0, 0, 1, 1], [], []>} : vector<5x128xbf16>, vector<128x384xbf16>, vector<5x384xf32> -> vector<5x384xf32>
    %50 = vector.broadcast %10 : vector<1x384xf32> to vector<5x384xf32>
    %51 = arith.addf %49, %50 : vector<5x384xf32>
    %52 = vector.extract_strided_slice %51 {offsets = [0, 0], sizes = [5, 128], strides = [1, 1]} : vector<5x384xf32> to vector<5x128xf32>
    %53 = vector.extract_strided_slice %51 {offsets = [0, 128], sizes = [5, 128], strides = [1, 1]} : vector<5x384xf32> to vector<5x128xf32>
    %54 = vector.extract_strided_slice %51 {offsets = [0, 256], sizes = [5, 128], strides = [1, 1]} : vector<5x384xf32> to vector<5x128xf32>
    %55 = vector.extract_strided_slice %52 {offsets = [0, 0], sizes = [5, 64], strides = [1, 1]} : vector<5x128xf32> to vector<5x64xf32>
    %56 = arith.truncf %55 : vector<5x64xf32> to vector<5x64xbf16>
    %57 = vector.extract_strided_slice %53 {offsets = [0, 0], sizes = [5, 64], strides = [1, 1]} : vector<5x128xf32> to vector<5x64xf32>
    %58 = arith.truncf %57 : vector<5x64xf32> to vector<5x64xbf16>
    %59 = vector.extract_strided_slice %54 {offsets = [0, 0], sizes = [5, 64], strides = [1, 1]} : vector<5x128xf32> to vector<5x64xf32>
    %60 = arith.truncf %59 : vector<5x64xf32> to vector<5x64xbf16>
    "tpu.trace_start"() <{level = 10 : i32, message = "sd,td->st"}> : () -> ()
    %cst_43 = arith.constant dense<0.000000e+00> : vector<5x5xf32>
    %61 = tpu.matmul %56, %58, %cst_43 {dimension_numbers = #tpu.dot_dimension_numbers<[1], [1], [0], [0], [0, 0, 1, 0], [], []>} : vector<5x64xbf16>, vector<5x64xbf16>, vector<5x5xf32> -> vector<5x5xf32>
    "tpu.trace_stop"() : () -> ()
    %cst_44 = arith.constant 1.250000e-01 : f32
    %62 = vector.broadcast %cst_44 : f32 to vector<5x5xf32>
    %63 = arith.mulf %61, %62 : vector<5x5xf32>
    %cst_45 = arith.constant dense<0xFF800000> : vector<5xf32>
    %64 = vector.multi_reduction <maximumf>, %63, %cst_45 [1] : vector<5x5xf32> to vector<5xf32>
    %65 = vector.shape_cast %64 : vector<5xf32> to vector<5x1xf32>
    %66 = vector.broadcast %65 : vector<5x1xf32> to vector<5x5xf32>
    %67 = arith.subf %63, %66 : vector<5x5xf32>
    %68 = math.exp %67 : vector<5x5xf32>
    %cst_46 = arith.constant dense<0.000000e+00> : vector<5xf32>
    %69 = vector.multi_reduction <add>, %68, %cst_46 [1] : vector<5x5xf32> to vector<5xf32>
    %70 = vector.shape_cast %69 : vector<5xf32> to vector<5x1xf32>
    %71 = vector.broadcast %70 : vector<5x1xf32> to vector<5x5xf32>
    %72 = arith.divf %68, %71 : vector<5x5xf32>
    %73 = arith.truncf %72 : vector<5x5xf32> to vector<5x5xbf16>
    %cst_47 = arith.constant dense<0.000000e+00> : vector<5x64xf32>
    %74 = tpu.matmul %73, %60, %cst_47 {dimension_numbers = #tpu.dot_dimension_numbers<[1], [0], [0], [1], [0, 0, 1, 1], [], []>} : vector<5x5xbf16>, vector<5x64xbf16>, vector<5x64xf32> -> vector<5x64xf32>
    %75 = vector.extract_strided_slice %52 {offsets = [0, 64], sizes = [5, 64], strides = [1, 1]} : vector<5x128xf32> to vector<5x64xf32>
    %76 = arith.truncf %75 : vector<5x64xf32> to vector<5x64xbf16>
    %77 = vector.extract_strided_slice %53 {offsets = [0, 64], sizes = [5, 64], strides = [1, 1]} : vector<5x128xf32> to vector<5x64xf32>
    %78 = arith.truncf %77 : vector<5x64xf32> to vector<5x64xbf16>
    %79 = vector.extract_strided_slice %54 {offsets = [0, 64], sizes = [5, 64], strides = [1, 1]} : vector<5x128xf32> to vector<5x64xf32>
    %80 = arith.truncf %79 : vector<5x64xf32> to vector<5x64xbf16>
    "tpu.trace_start"() <{level = 10 : i32, message = "sd,td->st"}> : () -> ()
    %cst_48 = arith.constant dense<0.000000e+00> : vector<5x5xf32>
    %81 = tpu.matmul %76, %78, %cst_48 {dimension_numbers = #tpu.dot_dimension_numbers<[1], [1], [0], [0], [0, 0, 1, 0], [], []>} : vector<5x64xbf16>, vector<5x64xbf16>, vector<5x5xf32> -> vector<5x5xf32>
    "tpu.trace_stop"() : () -> ()
    %cst_49 = arith.constant 1.250000e-01 : f32
    %82 = vector.broadcast %cst_49 : f32 to vector<5x5xf32>
    %83 = arith.mulf %81, %82 : vector<5x5xf32>
    %cst_50 = arith.constant dense<0xFF800000> : vector<5xf32>
    %84 = vector.multi_reduction <maximumf>, %83, %cst_50 [1] : vector<5x5xf32> to vector<5xf32>
    %85 = vector.shape_cast %84 : vector<5xf32> to vector<5x1xf32>
    %86 = vector.broadcast %85 : vector<5x1xf32> to vector<5x5xf32>
    %87 = arith.subf %83, %86 : vector<5x5xf32>
    %88 = math.exp %87 : vector<5x5xf32>
    %cst_51 = arith.constant dense<0.000000e+00> : vector<5xf32>
    %89 = vector.multi_reduction <add>, %88, %cst_51 [1] : vector<5x5xf32> to vector<5xf32>
    %90 = vector.shape_cast %89 : vector<5xf32> to vector<5x1xf32>
    %91 = vector.broadcast %90 : vector<5x1xf32> to vector<5x5xf32>
    %92 = arith.divf %88, %91 : vector<5x5xf32>
    %93 = arith.truncf %92 : vector<5x5xf32> to vector<5x5xbf16>
    %cst_52 = arith.constant dense<0.000000e+00> : vector<5x64xf32>
    %94 = tpu.matmul %93, %80, %cst_52 {dimension_numbers = #tpu.dot_dimension_numbers<[1], [0], [0], [1], [0, 0, 1, 1], [], []>} : vector<5x5xbf16>, vector<5x64xbf16>, vector<5x64xf32> -> vector<5x64xf32>
    %95 = tpu.concatenate %74, %94 in 1 : vector<5x64xf32>, vector<5x64xf32> -> vector<5x128xf32>
    %96 = arith.truncf %95 : vector<5x128xf32> to vector<5x128xbf16>
    %cst_53 = arith.constant dense<0.000000e+00> : vector<5x128xf32>
    %97 = tpu.matmul %96, %12, %cst_53 {dimension_numbers = #tpu.dot_dimension_numbers<[1], [0], [0], [1], [0, 0, 1, 1], [], []>} : vector<5x128xbf16>, vector<128x128xbf16>, vector<5x128xf32> -> vector<5x128xf32>
    %98 = vector.broadcast %14 : vector<1x128xf32> to vector<5x128xf32>
    %99 = arith.addf %97, %98 : vector<5x128xf32>
    %100 = arith.addf %27, %99 : vector<5x128xf32>
    %cst_54 = arith.constant dense<0.000000e+00> : vector<5xf32>
    %101 = vector.multi_reduction <add>, %100, %cst_54 [1] : vector<5x128xf32> to vector<5xf32>
    %102 = vector.shape_cast %101 : vector<5xf32> to vector<5x1xf32>
    %cst_55 = arith.constant 1.280000e+02 : f32
    %103 = vector.broadcast %cst_55 : f32 to vector<5x1xf32>
    %104 = arith.divf %102, %103 : vector<5x1xf32>
    %105 = vector.broadcast %104 : vector<5x1xf32> to vector<5x128xf32>
    %106 = arith.subf %100, %105 : vector<5x128xf32>
    %107 = arith.mulf %106, %106 : vector<5x128xf32>
    %cst_56 = arith.constant dense<0.000000e+00> : vector<5xf32>
    %108 = vector.multi_reduction <add>, %107, %cst_56 [1] : vector<5x128xf32> to vector<5xf32>
    %109 = vector.shape_cast %108 : vector<5xf32> to vector<5x1xf32>
    %cst_57 = arith.constant 1.280000e+02 : f32
    %110 = vector.broadcast %cst_57 : f32 to vector<5x1xf32>
    %111 = arith.divf %109, %110 : vector<5x1xf32>
    %cst_58 = arith.constant 9.99999997E-7 : f32
    %112 = vector.broadcast %cst_58 : f32 to vector<5x1xf32>
    %113 = arith.addf %111, %112 : vector<5x1xf32>
    %114 = math.rsqrt %113 : vector<5x1xf32>
    %115 = vector.broadcast %114 : vector<5x1xf32> to vector<5x128xf32>
    %116 = arith.mulf %106, %115 : vector<5x128xf32>
    %117 = vector.broadcast %16 : vector<1x128xf32> to vector<5x128xf32>
    %118 = arith.mulf %116, %117 : vector<5x128xf32>
    %119 = vector.broadcast %18 : vector<1x128xf32> to vector<5x128xf32>
    %120 = arith.addf %118, %119 : vector<5x128xf32>
    %121 = arith.truncf %120 : vector<5x128xf32> to vector<5x128xbf16>
    %cst_59 = arith.constant dense<0.000000e+00> : vector<5x512xf32>
    %122 = tpu.matmul %121, %20, %cst_59 {dimension_numbers = #tpu.dot_dimension_numbers<[1], [0], [0], [1], [0, 0, 1, 1], [], []>} : vector<5x128xbf16>, vector<128x512xbf16>, vector<5x512xf32> -> vector<5x512xf32>
    %123 = vector.broadcast %22 : vector<1x512xf32> to vector<5x512xf32>
    %124 = arith.addf %122, %123 : vector<5x512xf32>
    %cst_60 = arith.constant 5.000000e-01 : f32
    %125 = vector.broadcast %cst_60 : f32 to vector<5x512xf32>
    %126 = arith.mulf %125, %124 : vector<5x512xf32>
    %cst_61 = arith.constant 4.471500e-02 : f32
    %127 = vector.broadcast %cst_61 : f32 to vector<5x512xf32>
    %128 = arith.mulf %127, %124 : vector<5x512xf32>
    %129 = arith.mulf %128, %124 : vector<5x512xf32>
    %130 = arith.mulf %129, %124 : vector<5x512xf32>
    %131 = arith.addf %124, %130 : vector<5x512xf32>
    %cst_62 = arith.constant 0.797884583 : f32
    %132 = vector.broadcast %cst_62 : f32 to vector<5x512xf32>
    %133 = arith.mulf %132, %131 : vector<5x512xf32>
    %134 = math.tanh %133 : vector<5x512xf32>
    %cst_63 = arith.constant 1.000000e+00 : f32
    %135 = vector.broadcast %cst_63 : f32 to vector<5x512xf32>
    %136 = arith.addf %135, %134 : vector<5x512xf32>
    %137 = arith.mulf %126, %136 : vector<5x512xf32>
    %138 = arith.truncf %137 : vector<5x512xf32> to vector<5x512xbf16>
    %cst_64 = arith.constant dense<0.000000e+00> : vector<5x128xf32>
    %139 = tpu.matmul %138, %24, %cst_64 {dimension_numbers = #tpu.dot_dimension_numbers<[1], [0], [0], [1], [0, 0, 1, 1], [], []>} : vector<5x512xbf16>, vector<512x128xbf16>, vector<5x128xf32> -> vector<5x128xf32>
    %140 = vector.broadcast %26 : vector<1x128xf32> to vector<5x128xf32>
    %141 = arith.addf %139, %140 : vector<5x128xf32>
    %142 = arith.addf %100, %141 : vector<5x128xf32>
    %c0_65 = arith.constant 0 : index
    %c0_66 = arith.constant 0 : index
    %143 = vector.load %arg16[%c0_65, %c0_66] : memref<5x128xf32, #tpu.memory_space<vmem>>, vector<5x128xf32>
    tpu.vector_store %arg16[%c0_65, %c0_66], %142 {strides = array<i32>} : memref<5x128xf32, #tpu.memory_space<vmem>>, vector<5x128xf32>,
    %c11_i32 = arith.constant 11 : i32
    %144 = arith.cmpi eq, %arg1, %c11_i32 : i32
    %145 = arith.extui %144 : i1 to i32
    %c0_i32_67 = arith.constant 0 : i32
    %146 = arith.cmpi ne, %145, %c0_i32_67 : i32
    scf.if %146 {
      %c0_68 = arith.constant 0 : index
      %c0_69 = arith.constant 0 : index
      %c0_70 = arith.constant 0 : index
      %147 = vector.load %arg15[%c0_68, %c0_69, %c0_70] : memref<1x5x128xf32, #tpu.memory_space<vmem>>, vector<1x5x128xf32>
      %148 = vector.shape_cast %147 : vector<1x5x128xf32> to vector<5x128xf32>
      %149 = vector.shape_cast %142 : vector<5x128xf32> to vector<1x5x128xf32>
      tpu.vector_store %arg15[%c0_68, %c0_69, %c0_70], %149 {strides = array<i32>} : memref<1x5x128xf32, #tpu.memory_space<vmem>>, vector<1x5x128xf32>,
    } else {
    }
    return
  }
  func.func @transform_0(%arg0: i32, %arg1: i32) -> (i32, i32, i32) {
    %c0_i32 = arith.constant 0 : i32
    %c0_i32_0 = arith.constant 0 : i32
    %c0_i32_1 = arith.constant 0 : i32
    return %arg0, %c0_i32, %c0_i32_0 : i32, i32, i32
  }
  func.func @transform_1(%arg0: i32, %arg1: i32) -> (i32, i32, i32) {
    %c0_i32 = arith.constant 0 : i32
    %c0_i32_0 = arith.constant 0 : i32
    %c0_i32_1 = arith.constant 0 : i32
    return %arg1, %c0_i32, %c0_i32_0 : i32, i32, i32
  }
  func.func @transform_2(%arg0: i32, %arg1: i32) -> (i32, i32, i32) {
    %c0_i32 = arith.constant 0 : i32
    %c0_i32_0 = arith.constant 0 : i32
    %c0_i32_1 = arith.constant 0 : i32
    return %arg1, %c0_i32, %c0_i32_0 : i32, i32, i32
  }
  func.func @transform_3(%arg0: i32, %arg1: i32) -> (i32, i32, i32) {
    %c0_i32 = arith.constant 0 : i32
    %c0_i32_0 = arith.constant 0 : i32
    %c0_i32_1 = arith.constant 0 : i32
    return %arg1, %c0_i32, %c0_i32_0 : i32, i32, i32
  }
  func.func @transform_4(%arg0: i32, %arg1: i32) -> (i32, i32, i32) {
    %c0_i32 = arith.constant 0 : i32
    %c0_i32_0 = arith.constant 0 : i32
    %c0_i32_1 = arith.constant 0 : i32
    return %arg1, %c0_i32, %c0_i32_0 : i32, i32, i32
  }
  func.func @transform_5(%arg0: i32, %arg1: i32) -> (i32, i32, i32) {
    %c0_i32 = arith.constant 0 : i32
    %c0_i32_0 = arith.constant 0 : i32
    %c0_i32_1 = arith.constant 0 : i32
    return %arg1, %c0_i32, %c0_i32_0 : i32, i32, i32
  }
  func.func @transform_6(%arg0: i32, %arg1: i32) -> (i32, i32, i32) {
    %c0_i32 = arith.constant 0 : i32
    %c0_i32_0 = arith.constant 0 : i32
    %c0_i32_1 = arith.constant 0 : i32
    return %arg1, %c0_i32, %c0_i32_0 : i32, i32, i32
  }
  func.func @transform_7(%arg0: i32, %arg1: i32) -> (i32, i32, i32) {
    %c0_i32 = arith.constant 0 : i32
    %c0_i32_0 = arith.constant 0 : i32
    %c0_i32_1 = arith.constant 0 : i32
    return %arg1, %c0_i32, %c0_i32_0 : i32, i32, i32
  }
  func.func @transform_8(%arg0: i32, %arg1: i32) -> (i32, i32, i32) {
    %c0_i32 = arith.constant 0 : i32
    %c0_i32_0 = arith.constant 0 : i32
    %c0_i32_1 = arith.constant 0 : i32
    return %arg1, %c0_i32, %c0_i32_0 : i32, i32, i32
  }
  func.func @transform_9(%arg0: i32, %arg1: i32) -> (i32, i32, i32) {
    %c0_i32 = arith.constant 0 : i32
    %c0_i32_0 = arith.constant 0 : i32
    %c0_i32_1 = arith.constant 0 : i32
    return %arg1, %c0_i32, %c0_i32_0 : i32, i32, i32
  }
  func.func @transform_10(%arg0: i32, %arg1: i32) -> (i32, i32, i32) {
    %c0_i32 = arith.constant 0 : i32
    %c0_i32_0 = arith.constant 0 : i32
    %c0_i32_1 = arith.constant 0 : i32
    return %arg1, %c0_i32, %c0_i32_0 : i32, i32, i32
  }
  func.func @transform_11(%arg0: i32, %arg1: i32) -> (i32, i32, i32) {
    %c0_i32 = arith.constant 0 : i32
    %c0_i32_0 = arith.constant 0 : i32
    %c0_i32_1 = arith.constant 0 : i32
    return %arg1, %c0_i32, %c0_i32_0 : i32, i32, i32
  }
  func.func @transform_12(%arg0: i32, %arg1: i32) -> (i32, i32, i32) {
    %c0_i32 = arith.constant 0 : i32
    %c0_i32_0 = arith.constant 0 : i32
    %c0_i32_1 = arith.constant 0 : i32
    return %arg1, %c0_i32, %c0_i32_0 : i32, i32, i32
  }
  func.func @transform_13(%arg0: i32, %arg1: i32) -> (i32, i32, i32) {
    %c0_i32 = arith.constant 0 : i32
    %c0_i32_0 = arith.constant 0 : i32
    %c0_i32_1 = arith.constant 0 : i32
    return %arg0, %c0_i32, %c0_i32_0 : i32, i32, i32
  }
}

module attributes {stable_mosaic.version = 11 : i64} {
  func.func @_head_kernel(%arg0: i32, %arg1: memref<1x5x128xf32, #tpu.memory_space<vmem>>, %arg2: memref<1x128xf32, #tpu.memory_space<vmem>>, %arg3: memref<1x128xf32, #tpu.memory_space<vmem>>, %arg4: memref<2x5xf32, #tpu.memory_space<vmem>>, %arg5: memref<1x2x128xf32, #tpu.memory_space<vmem>>) attributes {dimension_semantics = [#tpu.dimension_semantics<parallel>], iteration_bounds = array<i64: 2>, scalar_prefetch = 0 : i64, scratch_operands = 0 : i64, tpu.core_type = #tpu.core_type<tc>, window_params = [{transform_indices = @transform_0, window_bounds = array<i64: 1, 5, 128>}, {pipeline_mode = #tpu.pipeline_mode<synchronous>, transform_indices = @transform_1, window_bounds = array<i64: 1, 128>}, {pipeline_mode = #tpu.pipeline_mode<synchronous>, transform_indices = @transform_2, window_bounds = array<i64: 1, 128>}, {pipeline_mode = #tpu.pipeline_mode<synchronous>, transform_indices = @transform_3, window_bounds = array<i64: 2, 5>}, {transform_indices = @transform_4, window_bounds = array<i64: 1, 2, 128>}]} {
    %c0 = arith.constant 0 : index
    %c0_0 = arith.constant 0 : index
    %c0_1 = arith.constant 0 : index
    %0 = vector.load %arg1[%c0, %c0_0, %c0_1] : memref<1x5x128xf32, #tpu.memory_space<vmem>>, vector<1x5x128xf32>
    %1 = vector.shape_cast %0 : vector<1x5x128xf32> to vector<5x128xf32>
    %c0_2 = arith.constant 0 : index
    %c0_3 = arith.constant 0 : index
    %2 = vector.load %arg2[%c0_2, %c0_3] : memref<1x128xf32, #tpu.memory_space<vmem>>, vector<1x128xf32>
    %c0_4 = arith.constant 0 : index
    %c0_5 = arith.constant 0 : index
    %3 = vector.load %arg3[%c0_4, %c0_5] : memref<1x128xf32, #tpu.memory_space<vmem>>, vector<1x128xf32>
    %c0_6 = arith.constant 0 : index
    %c0_7 = arith.constant 0 : index
    %4 = vector.load %arg4[%c0_6, %c0_7] : memref<2x5xf32, #tpu.memory_space<vmem>>, vector<2x5xf32>
    %cst = arith.constant dense<0.000000e+00> : vector<5xf32>
    %5 = vector.multi_reduction <add>, %1, %cst [1] : vector<5x128xf32> to vector<5xf32>
    %6 = vector.shape_cast %5 : vector<5xf32> to vector<5x1xf32>
    %cst_8 = arith.constant 1.280000e+02 : f32
    %7 = vector.broadcast %cst_8 : f32 to vector<5x1xf32>
    %8 = arith.divf %6, %7 : vector<5x1xf32>
    %9 = vector.broadcast %8 : vector<5x1xf32> to vector<5x128xf32>
    %10 = arith.subf %1, %9 : vector<5x128xf32>
    %11 = arith.mulf %10, %10 : vector<5x128xf32>
    %cst_9 = arith.constant dense<0.000000e+00> : vector<5xf32>
    %12 = vector.multi_reduction <add>, %11, %cst_9 [1] : vector<5x128xf32> to vector<5xf32>
    %13 = vector.shape_cast %12 : vector<5xf32> to vector<5x1xf32>
    %cst_10 = arith.constant 1.280000e+02 : f32
    %14 = vector.broadcast %cst_10 : f32 to vector<5x1xf32>
    %15 = arith.divf %13, %14 : vector<5x1xf32>
    %cst_11 = arith.constant 9.99999997E-7 : f32
    %16 = vector.broadcast %cst_11 : f32 to vector<5x1xf32>
    %17 = arith.addf %15, %16 : vector<5x1xf32>
    %18 = math.rsqrt %17 : vector<5x1xf32>
    %19 = vector.broadcast %18 : vector<5x1xf32> to vector<5x128xf32>
    %20 = arith.mulf %10, %19 : vector<5x128xf32>
    %21 = vector.broadcast %2 : vector<1x128xf32> to vector<5x128xf32>
    %22 = arith.mulf %20, %21 : vector<5x128xf32>
    %23 = vector.broadcast %3 : vector<1x128xf32> to vector<5x128xf32>
    %24 = arith.addf %22, %23 : vector<5x128xf32>
    %cst_12 = arith.constant dense<0.000000e+00> : vector<2x128xf32>
    %25 = tpu.matmul %4, %24, %cst_12 {dimension_numbers = #tpu.dot_dimension_numbers<[1], [0], [0], [1], [0, 0, 1, 1], [], []>} : vector<2x5xf32>, vector<5x128xf32>, vector<2x128xf32> -> vector<2x128xf32>
    %c0_13 = arith.constant 0 : index
    %c0_14 = arith.constant 0 : index
    %c0_15 = arith.constant 0 : index
    %26 = vector.load %arg5[%c0_13, %c0_14, %c0_15] : memref<1x2x128xf32, #tpu.memory_space<vmem>>, vector<1x2x128xf32>
    %27 = vector.shape_cast %26 : vector<1x2x128xf32> to vector<2x128xf32>
    %28 = vector.shape_cast %25 : vector<2x128xf32> to vector<1x2x128xf32>
    tpu.vector_store %arg5[%c0_13, %c0_14, %c0_15], %28 {strides = array<i32>} : memref<1x2x128xf32, #tpu.memory_space<vmem>>, vector<1x2x128xf32>,
    return
  }
  func.func @transform_0(%arg0: i32) -> (i32, i32, i32) {
    %c0_i32 = arith.constant 0 : i32
    %c0_i32_0 = arith.constant 0 : i32
    %c0_i32_1 = arith.constant 0 : i32
    return %arg0, %c0_i32, %c0_i32_0 : i32, i32, i32
  }
  func.func @transform_1(%arg0: i32) -> (i32, i32) {
    %c0_i32 = arith.constant 0 : i32
    %c0_i32_0 = arith.constant 0 : i32
    %c0_i32_1 = arith.constant 0 : i32
    return %c0_i32, %c0_i32_0 : i32, i32
  }
  func.func @transform_2(%arg0: i32) -> (i32, i32) {
    %c0_i32 = arith.constant 0 : i32
    %c0_i32_0 = arith.constant 0 : i32
    %c0_i32_1 = arith.constant 0 : i32
    return %c0_i32, %c0_i32_0 : i32, i32
  }
  func.func @transform_3(%arg0: i32) -> (i32, i32) {
    %c0_i32 = arith.constant 0 : i32
    %c0_i32_0 = arith.constant 0 : i32
    %c0_i32_1 = arith.constant 0 : i32
    return %c0_i32, %c0_i32_0 : i32, i32
  }
  func.func @transform_4(%arg0: i32) -> (i32, i32, i32) {
    %c0_i32 = arith.constant 0 : i32
    %c0_i32_0 = arith.constant 0 : i32
    %c0_i32_1 = arith.constant 0 : i32
    return %arg0, %c0_i32, %c0_i32_0 : i32, i32, i32
  }
}

</mosaic_0001>

<llo_original>
// kernel: la_transformer_test_forward.5
$region0: #{la_transformer_test_forward.5}
  #allocation0 [shape = 'u32[]', space=smem, size = 0x4, offset = 0x4, fixed_abs, tag = 'smem constant byte address 0x4 - core index']
  #allocation1 [shape = 'u32[144,128]{1,0:T(1,128)}', space=vmem, size = 0x12000, scoped, tag = 'internal scratch']
  %s0 = inlined_call_operand.vmem [shape: f32[2,5,128], index: 0, kind: input, shape index: {}]
  %s1 = inlined_call_operand.vmem [shape: f32[1,128], index: 1, kind: input, shape index: {}]
  %s2 = inlined_call_operand.vmem [shape: f32[1,128], index: 2, kind: input, shape index: {}]
  %s3 = inlined_call_operand.vmem [shape: f32[2,5], index: 3, kind: input, shape index: {}]
  %s4 = inlined_call_operand.hbm [shape: f32[2,2,128], index: 4, kind: output, shape index: {}]
  %s5 = sld [smem:[#allocation0]]
  $region49: #{la_transformer_test_forward.5} parent=0
    _
  %s7 = ssub.s32 1, %s5
  %s8 = scalar_select 0, %s7, %s5
  $region1: #{la_transformer_test_forward.5} parent=0
    #allocation2 [shape = 'u8[2048]{0}', space=vmem, size = 0x800, scoped, tag = 'output window, operand 0']
    #allocation3 [shape = 's32[2]{0}', space=sflag, size = 0x8, scoped, tag = 'scoped memory for la_transformer_test_forward.5']
    %9 = vsyncpa [#allocation3], 0
    %s10 = scalar_lea.sflag [#allocation3], 1
    %11 = vsyncpa %s10, 0
    loop: start=0, step=1, limit=4
    $region2: #{la_transformer_test_forward.5} parent=1 // loop_pre_header
      _
    $region3: #{la_transformer_test_forward.5} parent=1 // loop_header
      %s13 = sphi 0, %s17
      %p14 = scmp.ge.s32.totalorder %s13, 4
      %s23 = sphi 0, %s25
      %s26 = sphi 0, %s23
      %s27 = sphi 0, %s26
      %s43 = sphi 0, %s27
      %s47 = sphi 0, %s47
      %s49 = sphi 0, %s47
      %s50 = sphi 0, %s49
      %s64 = sphi 0, %s50
      %s68 = sphi 0, %s68
      %s70 = sphi 0, %s68
      %s71 = sphi 0, %s70
      %s85 = sphi 0, %s71
      %s89 = sphi 0, %s89
      %s91 = sphi 0, %s89
      %s92 = sphi 0, %s91
      %s106 = sphi 0, %s92
      %s112 = sphi 0, %s114
      %s115 = sphi 0, %s112
      %s116 = sphi 0, %s115
      %s132 = sphi 0, %s116
    $region4: #{la_transformer_test_forward.5} parent=1 // loop_header_branch
      %16 = sbr.rel (%p14) target = $region8
    $region5: #{la_transformer_test_forward.5} parent=1 // loop_body
      %s18 = ssub.s32 %s13, 1
      %s19 = ssub.s32 %s13, 2
      %s20 = sadd.s32 %s13, 1
      %s21 = ssub.s32 %s13, %s20
      %p22 = scmp.eq.s32.totalorder %s21, 0
      %s24 = sadd.s32 %s23, 1
      %s25 = scalar_select %p22, %s23, %s24
      %p28 = pneg %p22
      %p29 = scmp.eq.s32.totalorder %s13, 1
      %p30 = por %p28, %p29
      %p31 = scmp.ne.s32.totalorder %s23, %s26
      %p32 = scmp.eq.s32.totalorder %s13, 0
      %p33 = por %p31, %p32
      %p34 = scmp.ne.s32.totalorder %s23, %s26
      %p35 = scmp.eq.s32.totalorder %s18, 1
      %p36 = por %p34, %p35
      %p37 = scmp.ne.s32.totalorder %s26, %s27
      %p38 = scmp.eq.s32.totalorder %s18, 0
      %p39 = por %p37, %p38
      %p40 = scmp.ne.s32.totalorder %s26, %s27
      %p41 = scmp.eq.s32.totalorder %s19, 1
      %p42 = por %p40, %p41
      %p44 = scmp.ne.s32.totalorder %s27, %s43
      %p45 = scmp.eq.s32.totalorder %s19, 0
      %p46 = por %p44, %p45
      %s48 = sadd.s32 %s47, 1
      %p51 = scmp.eq.s32.totalorder %s13, 1
      %p52 = scmp.ne.s32.totalorder %s47, %s49
      %p53 = scmp.eq.s32.totalorder %s13, 0
      %p54 = por %p52, %p53
      %p55 = scmp.ne.s32.totalorder %s47, %s49
      %p56 = scmp.eq.s32.totalorder %s18, 1
      %p57 = por %p55, %p56
      %p58 = scmp.ne.s32.totalorder %s49, %s50
      %p59 = scmp.eq.s32.totalorder %s18, 0
      %p60 = por %p58, %p59
      %p61 = scmp.ne.s32.totalorder %s49, %s50
      %p62 = scmp.eq.s32.totalorder %s19, 1
      %p63 = por %p61, %p62
      %p65 = scmp.ne.s32.totalorder %s50, %s64
      %p66 = scmp.eq.s32.totalorder %s19, 0
      %p67 = por %p65, %p66
      %s69 = sadd.s32 %s68, 1
      %p72 = scmp.eq.s32.totalorder %s13, 1
      %p73 = scmp.ne.s32.totalorder %s68, %s70
      %p74 = scmp.eq.s32.totalorder %s13, 0
      %p75 = por %p73, %p74
      %p76 = scmp.ne.s32.totalorder %s68, %s70
      %p77 = scmp.eq.s32.totalorder %s18, 1
      %p78 = por %p76, %p77
      %p79 = scmp.ne.s32.totalorder %s70, %s71
      %p80 = scmp.eq.s32.totalorder %s18, 0
      %p81 = por %p79, %p80
      %p82 = scmp.ne.s32.totalorder %s70, %s71
      %p83 = scmp.eq.s32.totalorder %s19, 1
      %p84 = por %p82, %p83
      %p86 = scmp.ne.s32.totalorder %s71, %s85
      %p87 = scmp.eq.s32.totalorder %s19, 0
      %p88 = por %p86, %p87
      %s90 = sadd.s32 %s89, 1
      %p93 = scmp.eq.s32.totalorder %s13, 1
      %p94 = scmp.ne.s32.totalorder %s89, %s91
      %p95 = scmp.eq.s32.totalorder %s13, 0
      %p96 = por %p94, %p95
      %p97 = scmp.ne.s32.totalorder %s89, %s91
      %p98 = scmp.eq.s32.totalorder %s18, 1
      %p99 = por %p97, %p98
      %p100 = scmp.ne.s32.totalorder %s91, %s92
      %p101 = scmp.eq.s32.totalorder %s18, 0
      %p102 = por %p100, %p101
      %p103 = scmp.ne.s32.totalorder %s91, %s92
      %p104 = scmp.eq.s32.totalorder %s19, 1
      %p105 = por %p103, %p104
      %p107 = scmp.ne.s32.totalorder %s92, %s106
      %p108 = scmp.eq.s32.totalorder %s19, 0
      %p109 = por %p107, %p108
      %s110 = ssub.s32 %s13, %s20
      %p111 = scmp.eq.s32.totalorder %s110, 0
      %s113 = sadd.s32 %s112, 1
      %s114 = scalar_select %p111, %s112, %s113
      %p117 = pneg %p111
      %p118 = scmp.eq.s32.totalorder %s13, 1
      %p119 = por %p117, %p118
      %p120 = scmp.ne.s32.totalorder %s112, %s115
      %p121 = scmp.eq.s32.totalorder %s13, 0
      %p122 = por %p120, %p121
      %p123 = scmp.ne.s32.totalorder %s112, %s115
      %p124 = scmp.eq.s32.totalorder %s18, 1
      %p125 = por %p123, %p124
      %p126 = scmp.ne.s32.totalorder %s115, %s116
      %p127 = scmp.eq.s32.totalorder %s18, 0
      %p128 = por %p126, %p127
      %p129 = scmp.ne.s32.totalorder %s115, %s116
      %p130 = scmp.eq.s32.totalorder %s19, 1
      %p131 = por %p129, %p130
      %p133 = scmp.ne.s32.totalorder %s116, %s132
      %p134 = scmp.eq.s32.totalorder %s19, 0
      %p135 = por %p133, %p134
      %p136 = scmp.le.s32.totalorder 1, %s13
      %p137 = scmp.lt.s32.totalorder %s13, 3
      %p138 = pnand %p136, %p137
      %p139 = pneg %p138
      // Predicated region
      $region9: #{la_transformer_test_forward.5} parent=5 // pred_check
        _
      $region10: #{la_transformer_test_forward.5} parent=5 // pred_check_branch
        %141 = sbr.rel (%p138) target = $region12
      $region11: #{la_transformer_test_forward.5} parent=5 // pred_region
        %s142 = ssub.s32 %s13, 1
        // Predicated region
        $region13: #{la_transformer_test_forward.5} parent=11 // pred_check
          %p143 = pneg %p60
        $region14: #{la_transformer_test_forward.5} parent=11 // pred_check_branch
          %145 = sbr.rel (%p143) target = $region16
        $region15: #{la_transformer_test_forward.5} parent=11 // pred_region
          _
        $region16: #{la_transformer_test_forward.5} parent=11 // pred_fallthru
          _
        // Predicated region
        $region17: #{la_transformer_test_forward.5} parent=11 // pred_check
          %p146 = pneg %p81
        $region18: #{la_transformer_test_forward.5} parent=11 // pred_check_branch
          %148 = sbr.rel (%p146) target = $region20
        $region19: #{la_transformer_test_forward.5} parent=11 // pred_region
          _
        $region20: #{la_transformer_test_forward.5} parent=11 // pred_fallthru
          _
        // Predicated region
        $region21: #{la_transformer_test_forward.5} parent=11 // pred_check
          %p149 = pneg %p102
        $region22: #{la_transformer_test_forward.5} parent=11 // pred_check_branch
          %151 = sbr.rel (%p149) target = $region24
        $region23: #{la_transformer_test_forward.5} parent=11 // pred_region
          _
        $region24: #{la_transformer_test_forward.5} parent=11 // pred_fallthru
          _
      $region12: #{la_transformer_test_forward.5} parent=5 // pred_fallthru
        _
      %p152 = scmp.lt.s32.totalorder %s13, 2
      // Predicated region
      $region25: #{la_transformer_test_forward.5} parent=5 // pred_check
        %p153 = pneg %p152
      $region26: #{la_transformer_test_forward.5} parent=5 // pred_check_branch
        %155 = sbr.rel (%p153) target = $region28
      $region27: #{la_transformer_test_forward.5} parent=5 // pred_region
        // Predicated region
        $region29: #{la_transformer_test_forward.5} parent=27 // pred_check
          %p156 = pneg %p33
        $region30: #{la_transformer_test_forward.5} parent=27 // pred_check_branch
          %158 = sbr.rel (%p156) target = $region32
        $region31: #{la_transformer_test_forward.5} parent=27 // pred_region
          %p159 = scmp.lt.s32.totalorder %s13, 1
          %s160 = scalar_select %p159, %s13, 1
          %s161 = smul.addr %s160, 8
          %s162 = scalar_lea.vmem %s0, %s161
        $region32: #{la_transformer_test_forward.5} parent=27 // pred_fallthru
          _
      $region28: #{la_transformer_test_forward.5} parent=5 // pred_fallthru
        _
      %p163 = scmp.le.s32.totalorder 1, %s13
      %p164 = scmp.lt.s32.totalorder %s13, 3
      %p165 = pnand %p163, %p164
      %p166 = pneg %p165
      // Predicated region
      $region33: #{la_transformer_test_forward.5} parent=5 // pred_check
        _
      $region34: #{la_transformer_test_forward.5} parent=5 // pred_check_branch
        %168 = sbr.rel (%p165) target = $region36
      $region35: #{la_transformer_test_forward.5} parent=5 // pred_region
        %s169 = ssub.s32 %s13, 1
        %p170 = scmp.lt.s32.totalorder %s18, 1
        %s171 = scalar_select %p170, %s18, 1
        %s172 = smul.addr %s171, 8
        %s173 = scalar_lea.vmem %s0, %s172
        %p174 = pneg %p39
        %p175 = pneg %p36
        %p176 = pneg %p60
        %p177 = pneg %p57
        %p178 = pneg %p81
        %p179 = pneg %p78
        %p180 = pneg %p102
        %p181 = pneg %p99
        %p182 = pneg %p128
        %p183 = pneg %p125
        %s184 = sand.u32 %s115, 1
        %s185 = scalar_lea.sflag [#allocation3], %s184
        %s186 = sand.u32 %s115, 1
        %s187 = smul.addr %s186, 2
        %s188 = scalar_lea.vmem [#allocation2], %s187
        %p189 = scmp.lt.s32.totalorder %s18, 1
        %s190 = scalar_select %p189, %s18, 1
        %s191 = smul.addr %s190, 8
        %s192 = scalar_lea.vmem %s0, %s191
        %v193 = vld [vmem:[%s192] sm:$0x1f]
        %v194 = vld [vmem:[%s1] sm:$0x1]
        %v195 = vld [vmem:[%s2] sm:$0x1]
        %v196 = vld [vmem:[%s3] sm:$0x3]
        %vm197 = vcmask 1044480
        %v198 = vsel %vm197, %v193, 0.0
        %199 = vadd.xlane.f32.xlu0 %v198
        %v200 = vpop.xlane.xlu0 %199
        %v201 = vrcp.pop 128.0
        %v202 = vmul.f32 %v200, %v201
        %v203 = vsub.f32 %v193, %v202
        %v204 = vmul.f32 %v203, %v203
        %v205 = vsel %vm197, %v204, 0.0
        %206 = vadd.xlane.f32.xlu0 %v205
        %v207 = vpop.xlane.xlu0 %206
        %v208 = vmul.f32 %v207, %v201
        %v209 = vadd.f32 %v208, 1e-06
        %v210 = vrsqrt.pop %v209
        %v211 = vmul.f32 %v203, %v210
        %v213 = vlaneseq
        %v214 = vshrl.u32 %v213, 7
        %v215 = vsub.s32 0, %v214
        %v216 = vrot.slane %v194, %v215
        %v218 = vmul.f32 %v211, %v216
        %v220 = vlaneseq
        %v221 = vshrl.u32 %v220, 7
        %v222 = vsub.s32 0, %v221
        %v223 = vrot.slane %v195, %v222
        %v225 = vadd.f32 %v218, %v223
        %vm226 = vcmask 39936
        %v228 = vsel %vm226, %v196, 0
        %v231 = vsel %vm197, %v225, 0
        %233 = vmatprep.subr.mxu0 0.0
        %234 = vmatpush1.msra.mxu0 %v231
        %235 = vmatprep.subr.mxu0 0.0
        %236 = vmatpush1.msra.mxu0 0.0
        %237 = vmatprep.subr.mxu0 0.0
        %238 = vmatpush1.msra.mxu0 0.0
        %239 = vmatprep.subr.mxu0 0.0
        %240 = vmatpush1.msra.mxu0 0.0
        %241 = vmatprep.subr.mxu0 0.0
        %242 = vmatpush1.msra.mxu0 0.0
        %243 = vmatprep.subr.mxu0 0.0
        %244 = vmatpush1.msra.mxu0 0.0
        %245 = vmatprep.subr.mxu0 0.0
        %246 = vmatpush1.msra.mxu0 0.0
        %247 = vmatprep.subr.mxu0 0.0
        %248 = vmatpush1.msra.mxu0 0.0
        %249 = vmatprep.subr.mxu0 0.0
        %250 = vmatpush1.msra.mxu0 0.0
        %251 = vmatprep.subr.mxu0 0.0
        %252 = vmatpush1.msra.mxu0 0.0
        %253 = vmatprep.subr.mxu0 0.0
        %254 = vmatpush1.msra.mxu0 0.0
        %255 = vmatprep.subr.mxu0 0.0
        %256 = vmatpush1.msra.mxu0 0.0
        %257 = vmatprep.subr.mxu0 0.0
        %258 = vmatpush1.msra.mxu0 0.0
        %259 = vmatprep.subr.mxu0 0.0
        %260 = vmatpush1.msra.mxu0 0.0
        %261 = vmatprep.subr.mxu0 0.0
        %262 = vmatpush1.msra.mxu0 0.0
        %263 = vmatprep.subr.mxu0 0.0
        %264 = vmatpush1.msra.mxu0 0.0
        %265 = vmatprep.subr.mxu0 0.0
        %266 = vmatpush1.msra.mxu0 0.0
        %267 = vmatprep.subr.mxu0 0.0
        %268 = vmatpush1.msra.mxu0 0.0
        %269 = vmatprep.subr.mxu0 0.0
        %270 = vmatpush1.msra.mxu0 0.0
        %271 = vmatprep.subr.mxu0 0.0
        %272 = vmatpush1.msra.mxu0 0.0
        %273 = vmatprep.subr.mxu0 0.0
        %274 = vmatpush1.msra.mxu0 0.0
        %275 = vmatprep.subr.mxu0 0.0
        %276 = vmatpush1.msra.mxu0 0.0
        %277 = vmatprep.subr.mxu0 0.0
        %278 = vmatpush1.msra.mxu0 0.0
        %279 = vmatprep.subr.mxu0 0.0
        %280 = vmatpush1.msra.mxu0 0.0
        %281 = vmatprep.subr.mxu0 0.0
        %282 = vmatpush1.msra.mxu0 0.0
        %283 = vmatprep.subr.mxu0 0.0
        %284 = vmatpush1.msra.mxu0 0.0
        %285 = vmatprep.subr.mxu0 0.0
        %286 = vmatpush1.msra.mxu0 0.0
        %287 = vmatprep.subr.mxu0 0.0
        %288 = vmatpush1.msra.mxu0 0.0
        %289 = vmatprep.subr.mxu0 0.0
        %290 = vmatpush1.msra.mxu0 0.0
        %291 = vmatprep.subr.mxu0 0.0
        %292 = vmatpush1.msra.mxu0 0.0
        %293 = vmatprep.subr.mxu0 0.0
        %294 = vmatpush1.msra.mxu0 0.0
        %295 = vmatprep.subr.mxu0 0.0
        %296 = vmatpush1.msra.mxu0 0.0
        %297 = vmatprep.mubr.f32.mxu0 0.0
        %298 = vmatmul.mubr.f32.gmra.mrb[0].mxu0 %v228
        %v299 = vpop.f32.mrb[0].mxu0
        %v300 = vadd.f32 0.0, %v299
        %v301 = vpop.f32.mrb[0].mxu0
        %302 = vdwg.mxu0
        %303 = vst [vmem:[%s188] sm:$0x3] %v300
        %s304 = sand.u32 %s115, 1
        %s305 = scalar_lea.sflag [#allocation3], %s304
        %s306 = sand.u32 %s115, 1
        %s307 = smul.addr %s306, 2
        %s308 = scalar_lea.vmem [#allocation2], %s307
        // Predicated region
        $region37: #{la_transformer_test_forward.5} parent=35 // pred_check
          %p309 = pneg %p125
        $region38: #{la_transformer_test_forward.5} parent=35 // pred_check_branch
          %311 = sbr.rel (%p309) target = $region40
        $region39: #{la_transformer_test_forward.5} parent=35 // pred_region
          %s313 = ssub.s32 32, 32
          %314 = vsyncadd %s305, %s313
          %s315 = smul.addr %s18, 32
          %s316 = scalar_lea.hbm %s4, %s315
          %s318 = sshll.u32 %s308, 4
          %s319 = int_to_ptr.vmem [resolvable:$true] %s318
          %321 = dma.vmem_to_hbm [thread:$0]  %s319, 32, %s316, %s305
        $region40: #{la_transformer_test_forward.5} parent=35 // pred_fallthru
          _
      $region36: #{la_transformer_test_forward.5} parent=5 // pred_fallthru
        _
      %p322 = scmp.le.s32.totalorder 2, %s13
      // Predicated region
      $region41: #{la_transformer_test_forward.5} parent=5 // pred_check
        %p323 = pneg %p322
      $region42: #{la_transformer_test_forward.5} parent=5 // pred_check_branch
        %325 = sbr.rel (%p323) target = $region44
      $region43: #{la_transformer_test_forward.5} parent=5 // pred_region
        %s326 = ssub.s32 %s13, 2
        // Predicated region
        $region45: #{la_transformer_test_forward.5} parent=43 // pred_check
          %p327 = pneg %p131
        $region46: #{la_transformer_test_forward.5} parent=43 // pred_check_branch
          %329 = sbr.rel (%p327) target = $region48
        $region47: #{la_transformer_test_forward.5} parent=43 // pred_region
          %s330 = sand.u32 %s116, 1
          %s331 = scalar_lea.sflag [#allocation3], %s330
          %s332 = sand.u32 %s116, 1
          %s333 = smul.addr %s332, 2
          %s334 = scalar_lea.vmem [#allocation2], %s333
          %335 = dma.done %s331, 32
        $region48: #{la_transformer_test_forward.5} parent=43 // pred_fallthru
          _
      $region44: #{la_transformer_test_forward.5} parent=5 // pred_fallthru
        _
    $region6: #{la_transformer_test_forward.5} parent=1 // loop_footer
      %s17 = sadd.s32 1, %s13
    $region7: #{la_transformer_test_forward.5} parent=1 // loop_footer_branch
      %12 = sbr.rel target = $region3
    $region8: #{la_transformer_test_forward.5} parent=1 // loop_exit
      _
    %336 = vsyncpa [#allocation3], 1
    %s337 = scalar_lea.sflag [#allocation3], 1
    %338 = vsyncpa %s337, 1

// kernel: la_transformer_test_forward.3
$region0: #{la_transformer_test_forward.3}
  #allocation0 [shape = 'u32[]', space=smem, size = 0x4, offset = 0x4, fixed_abs, tag = 'smem constant byte address 0x4 - core index']
  #allocation1 [shape = 'u32[144,128]{1,0:T(1,128)}', space=vmem, size = 0x12000, scoped, tag = 'internal scratch']
  %s0 = inlined_call_operand.vmem [shape: bf16[2,5,768], index: 0, kind: input, shape index: {}]
  %s1 = inlined_call_operand.hbm [shape: bf16[768,128], index: 1, kind: input, shape index: {}]
  %s2 = inlined_call_operand.vmem [shape: f32[5,128], index: 2, kind: input, shape index: {}]
  %s3 = inlined_call_operand.vmem [shape: f32[2,5,128], index: 3, kind: output, shape index: {}]
  %s4 = sld [smem:[#allocation0]]
  $region49: #{la_transformer_test_forward.3} parent=0
    _
  %s6 = ssub.s32 1, %s4
  %s7 = scalar_select 0, %s6, %s4
  $region1: #{la_transformer_test_forward.3} parent=0
    #allocation2 [shape = 'u8[196608]{0}', space=vmem, size = 0x30000, scoped, tag = 'input window, operand 1, single buffered']
    #allocation3 [shape = 's32[2]{0}', space=sflag, size = 0x8, scoped, tag = 'scoped memory for la_transformer_test_forward.3']
    %8 = vsyncpa [#allocation3], 0
    loop: start=0, step=1, limit=4
    $region2: #{la_transformer_test_forward.3} parent=1 // loop_pre_header
      _
    $region3: #{la_transformer_test_forward.3} parent=1 // loop_header
      %s10 = sphi 0, %s14
      %p11 = scmp.ge.s32.totalorder %s10, 4
      %s20 = sphi 0, %s22
      %s23 = sphi 0, %s20
      %s24 = sphi 0, %s23
      %s40 = sphi 0, %s24
      %s44 = sphi 0, %s44
      %s46 = sphi 0, %s44
      %s47 = sphi 0, %s46
      %s61 = sphi 0, %s47
      %s65 = sphi 0, %s65
      %s67 = sphi 0, %s65
      %s68 = sphi 0, %s67
      %s82 = sphi 0, %s68
      %s88 = sphi 0, %s90
      %s91 = sphi 0, %s88
      %s92 = sphi 0, %s91
      %s108 = sphi 0, %s92
    $region4: #{la_transformer_test_forward.3} parent=1 // loop_header_branch
      %13 = sbr.rel (%p11) target = $region8
    $region5: #{la_transformer_test_forward.3} parent=1 // loop_body
      %s15 = ssub.s32 %s10, 1
      %s16 = ssub.s32 %s10, 2
      %s17 = sadd.s32 %s10, 1
      %s18 = ssub.s32 %s10, %s17
      %p19 = scmp.eq.s32.totalorder %s18, 0
      %s21 = sadd.s32 %s20, 1
      %s22 = scalar_select %p19, %s20, %s21
      %p25 = pneg %p19
      %p26 = scmp.eq.s32.totalorder %s10, 1
      %p27 = por %p25, %p26
      %p28 = scmp.ne.s32.totalorder %s20, %s23
      %p29 = scmp.eq.s32.totalorder %s10, 0
      %p30 = por %p28, %p29
      %p31 = scmp.ne.s32.totalorder %s20, %s23
      %p32 = scmp.eq.s32.totalorder %s15, 1
      %p33 = por %p31, %p32
      %p34 = scmp.ne.s32.totalorder %s23, %s24
      %p35 = scmp.eq.s32.totalorder %s15, 0
      %p36 = por %p34, %p35
      %p37 = scmp.ne.s32.totalorder %s23, %s24
      %p38 = scmp.eq.s32.totalorder %s16, 1
      %p39 = por %p37, %p38
      %p41 = scmp.ne.s32.totalorder %s24, %s40
      %p42 = scmp.eq.s32.totalorder %s16, 0
      %p43 = por %p41, %p42
      %s45 = sadd.s32 %s44, 1
      %p48 = scmp.eq.s32.totalorder %s10, 1
      %p49 = scmp.ne.s32.totalorder %s44, %s46
      %p50 = scmp.eq.s32.totalorder %s10, 0
      %p51 = por %p49, %p50
      %p52 = scmp.ne.s32.totalorder %s44, %s46
      %p53 = scmp.eq.s32.totalorder %s15, 1
      %p54 = por %p52, %p53
      %p55 = scmp.ne.s32.totalorder %s46, %s47
      %p56 = scmp.eq.s32.totalorder %s15, 0
      %p57 = por %p55, %p56
      %p58 = scmp.ne.s32.totalorder %s46, %s47
      %p59 = scmp.eq.s32.totalorder %s16, 1
      %p60 = por %p58, %p59
      %p62 = scmp.ne.s32.totalorder %s47, %s61
      %p63 = scmp.eq.s32.totalorder %s16, 0
      %p64 = por %p62, %p63
      %s66 = sadd.s32 %s65, 1
      %p69 = scmp.eq.s32.totalorder %s10, 1
      %p70 = scmp.ne.s32.totalorder %s65, %s67
      %p71 = scmp.eq.s32.totalorder %s10, 0
      %p72 = por %p70, %p71
      %p73 = scmp.ne.s32.totalorder %s65, %s67
      %p74 = scmp.eq.s32.totalorder %s15, 1
      %p75 = por %p73, %p74
      %p76 = scmp.ne.s32.totalorder %s67, %s68
      %p77 = scmp.eq.s32.totalorder %s15, 0
      %p78 = por %p76, %p77
      %p79 = scmp.ne.s32.totalorder %s67, %s68
      %p80 = scmp.eq.s32.totalorder %s16, 1
      %p81 = por %p79, %p80
      %p83 = scmp.ne.s32.totalorder %s68, %s82
      %p84 = scmp.eq.s32.totalorder %s16, 0
      %p85 = por %p83, %p84
      %s86 = ssub.s32 %s10, %s17
      %p87 = scmp.eq.s32.totalorder %s86, 0
      %s89 = sadd.s32 %s88, 1
      %s90 = scalar_select %p87, %s88, %s89
      %p93 = pneg %p87
      %p94 = scmp.eq.s32.totalorder %s10, 1
      %p95 = por %p93, %p94
      %p96 = scmp.ne.s32.totalorder %s88, %s91
      %p97 = scmp.eq.s32.totalorder %s10, 0
      %p98 = por %p96, %p97
      %p99 = scmp.ne.s32.totalorder %s88, %s91
      %p100 = scmp.eq.s32.totalorder %s15, 1
      %p101 = por %p99, %p100
      %p102 = scmp.ne.s32.totalorder %s91, %s92
      %p103 = scmp.eq.s32.totalorder %s15, 0
      %p104 = por %p102, %p103
      %p105 = scmp.ne.s32.totalorder %s91, %s92
      %p106 = scmp.eq.s32.totalorder %s16, 1
      %p107 = por %p105, %p106
      %p109 = scmp.ne.s32.totalorder %s92, %s108
      %p110 = scmp.eq.s32.totalorder %s16, 0
      %p111 = por %p109, %p110
      %p112 = scmp.le.s32.totalorder 1, %s10
      %p113 = scmp.lt.s32.totalorder %s10, 3
      %p114 = pnand %p112, %p113
      %p115 = pneg %p114
      // Predicated region
      $region9: #{la_transformer_test_forward.3} parent=5 // pred_check
        _
      $region10: #{la_transformer_test_forward.3} parent=5 // pred_check_branch
        %117 = sbr.rel (%p114) target = $region12
      $region11: #{la_transformer_test_forward.3} parent=5 // pred_region
        %s118 = ssub.s32 %s10, 1
        // Predicated region
        $region13: #{la_transformer_test_forward.3} parent=11 // pred_check
          %p119 = pneg %p57
        $region14: #{la_transformer_test_forward.3} parent=11 // pred_check_branch
          %121 = sbr.rel (%p119) target = $region16
        $region15: #{la_transformer_test_forward.3} parent=11 // pred_region
          %s123 = ssub.s32 6144, 6144
          %124 = vsyncadd [#allocation3], %s123
          %s125 = sshll.u32 [#allocation2], 4
          %s126 = int_to_ptr.vmem [resolvable:$true] %s125
          %131 = dma.hbm_to_vmem [thread:$0]  %s1, 6144, %s126, [#allocation3], 64, 64, 4
        $region16: #{la_transformer_test_forward.3} parent=11 // pred_fallthru
          _
        // Predicated region
        $region17: #{la_transformer_test_forward.3} parent=11 // pred_check
          %p132 = pneg %p78
        $region18: #{la_transformer_test_forward.3} parent=11 // pred_check_branch
          %134 = sbr.rel (%p132) target = $region20
        $region19: #{la_transformer_test_forward.3} parent=11 // pred_region
          _
        $region20: #{la_transformer_test_forward.3} parent=11 // pred_fallthru
          _
      $region12: #{la_transformer_test_forward.3} parent=5 // pred_fallthru
        _
      %p135 = scmp.lt.s32.totalorder %s10, 2
      // Predicated region
      $region21: #{la_transformer_test_forward.3} parent=5 // pred_check
        %p136 = pneg %p135
      $region22: #{la_transformer_test_forward.3} parent=5 // pred_check_branch
        %138 = sbr.rel (%p136) target = $region24
      $region23: #{la_transformer_test_forward.3} parent=5 // pred_region
        // Predicated region
        $region25: #{la_transformer_test_forward.3} parent=23 // pred_check
          %p139 = pneg %p30
        $region26: #{la_transformer_test_forward.3} parent=23 // pred_check_branch
          %141 = sbr.rel (%p139) target = $region28
        $region27: #{la_transformer_test_forward.3} parent=23 // pred_region
          %p142 = scmp.lt.s32.totalorder %s10, 1
          %s143 = scalar_select %p142, %s10, 1
          %s144 = smul.addr %s143, 6
          %s145 = smul.addr %s144, 4
          %s146 = scalar_lea.vmem %s0, %s145
        $region28: #{la_transformer_test_forward.3} parent=23 // pred_fallthru
          _
      $region24: #{la_transformer_test_forward.3} parent=5 // pred_fallthru
        _
      %p147 = scmp.le.s32.totalorder 1, %s10
      %p148 = scmp.lt.s32.totalorder %s10, 3
      %p149 = pnand %p147, %p148
      %p150 = pneg %p149
      // Predicated region
      $region29: #{la_transformer_test_forward.3} parent=5 // pred_check
        _
      $region30: #{la_transformer_test_forward.3} parent=5 // pred_check_branch
        %152 = sbr.rel (%p149) target = $region32
      $region31: #{la_transformer_test_forward.3} parent=5 // pred_region
        %s153 = ssub.s32 %s10, 1
        // Predicated region
        $region33: #{la_transformer_test_forward.3} parent=31 // pred_check
          %p154 = pneg %p57
        $region34: #{la_transformer_test_forward.3} parent=31 // pred_check_branch
          %156 = sbr.rel (%p154) target = $region36
        $region35: #{la_transformer_test_forward.3} parent=31 // pred_region
          %157 = dma.done [#allocation3], 6144
        $region36: #{la_transformer_test_forward.3} parent=31 // pred_fallthru
          _
        %p158 = scmp.lt.s32.totalorder %s15, 1
        %s159 = scalar_select %p158, %s15, 1
        %s160 = smul.addr %s159, 6
        %s161 = smul.addr %s160, 4
        %s162 = scalar_lea.vmem %s0, %s161
        %p163 = pneg %p36
        %p164 = pneg %p33
        %p165 = pneg %p57
        %p166 = pneg %p54
        %p167 = pneg %p78
        %p168 = pneg %p75
        %p169 = pneg %p104
        %p170 = pneg %p101
        %p171 = scmp.lt.s32.totalorder %s15, 1
        %s172 = scalar_select %p171, %s15, 1
        %s173 = smul.addr %s172, 8
        %s174 = scalar_lea.vmem %s3, %s173
        %p175 = scmp.lt.s32.totalorder %s15, 1
        %s176 = scalar_select %p175, %s15, 1
        %s177 = smul.addr %s176, 6
        %s178 = smul.addr %s177, 4
        %s179 = scalar_lea.vmem %s0, %s178
        %p180 = scmp.lt.s32.totalorder %s15, 1
        %s181 = scalar_select %p180, %s15, 1
        %s182 = smul.addr %s181, 8
        %s183 = scalar_lea.vmem %s3, %s182
        %v185 = vld [vmem:[%s179] sm:$0x77]
        %v186 = vld [vmem:[%s179 + $0x8] sm:$0x77]
        %v187 = vld [vmem:[%s179 + $0x10] sm:$0x77]
        %v188 = vld [vmem:[#allocation2] sm:$0xf]
        %v189 = vld [vmem:[#allocation2 + $0x4] sm:$0xf]
        %v190 = vld [vmem:[#allocation2 + $0x8] sm:$0xf]
        %v191 = vld [vmem:[#allocation2 + $0xc] sm:$0xf]
        %v192 = vld [vmem:[#allocation2 + $0x10] sm:$0xf]
        %v193 = vld [vmem:[#allocation2 + $0x14] sm:$0xf]
        %v194 = vld [vmem:[#allocation2 + $0x18] sm:$0xf]
        %v195 = vld [vmem:[#allocation2 + $0x1c] sm:$0xf]
        %v196 = vld [vmem:[#allocation2 + $0x20] sm:$0xf]
        %v197 = vld [vmem:[#allocation2 + $0x24] sm:$0xf]
        %v198 = vld [vmem:[#allocation2 + $0x28] sm:$0xf]
        %v199 = vld [vmem:[#allocation2 + $0x2c] sm:$0xf]
        %v200 = vld [vmem:[#allocation2 + $0x30] sm:$0xf]
        %v201 = vld [vmem:[#allocation2 + $0x34] sm:$0xf]
        %v202 = vld [vmem:[#allocation2 + $0x38] sm:$0xf]
        %v203 = vld [vmem:[#allocation2 + $0x3c] sm:$0xf]
        %v204 = vld [vmem:[#allocation2 + $0x40] sm:$0xf]
        %v205 = vld [vmem:[#allocation2 + $0x44] sm:$0xf]
        %v206 = vld [vmem:[#allocation2 + $0x48] sm:$0xf]
        %v207 = vld [vmem:[#allocation2 + $0x4c] sm:$0xf]
        %v208 = vld [vmem:[#allocation2 + $0x50] sm:$0xf]
        %v209 = vld [vmem:[#allocation2 + $0x54] sm:$0xf]
        %v210 = vld [vmem:[#allocation2 + $0x58] sm:$0xf]
        %v211 = vld [vmem:[#allocation2 + $0x5c] sm:$0xf]
        %v212 = vld [vmem:[#allocation2 + $0x60] sm:$0xf]
        %v213 = vld [vmem:[#allocation2 + $0x64] sm:$0xf]
        %v214 = vld [vmem:[#allocation2 + $0x68] sm:$0xf]
        %v215 = vld [vmem:[#allocation2 + $0x6c] sm:$0xf]
        %v216 = vld [vmem:[#allocation2 + $0x70] sm:$0xf]
        %v217 = vld [vmem:[#allocation2 + $0x74] sm:$0xf]
        %v218 = vld [vmem:[#allocation2 + $0x78] sm:$0xf]
        %v219 = vld [vmem:[#allocation2 + $0x7c] sm:$0xf]
        %v220 = vld [vmem:[#allocation2 + $0x80] sm:$0xf]
        %v221 = vld [vmem:[#allocation2 + $0x84] sm:$0xf]
        %v222 = vld [vmem:[#allocation2 + $0x88] sm:$0xf]
        %v223 = vld [vmem:[#allocation2 + $0x8c] sm:$0xf]
        %v224 = vld [vmem:[#allocation2 + $0x90] sm:$0xf]
        %v225 = vld [vmem:[#allocation2 + $0x94] sm:$0xf]
        %v226 = vld [vmem:[#allocation2 + $0x98] sm:$0xf]
        %v227 = vld [vmem:[#allocation2 + $0x9c] sm:$0xf]
        %v228 = vld [vmem:[#allocation2 + $0xa0] sm:$0xf]
        %v229 = vld [vmem:[#allocation2 + $0xa4] sm:$0xf]
        %v230 = vld [vmem:[#allocation2 + $0xa8] sm:$0xf]
        %v231 = vld [vmem:[#allocation2 + $0xac] sm:$0xf]
        %v232 = vld [vmem:[#allocation2 + $0xb0] sm:$0xf]
        %v233 = vld [vmem:[#allocation2 + $0xb4] sm:$0xf]
        %v234 = vld [vmem:[#allocation2 + $0xb8] sm:$0xf]
        %v235 = vld [vmem:[#allocation2 + $0xbc] sm:$0xf]
        %v236 = vld [vmem:[#allocation2 + $0xc0] sm:$0xf]
        %v237 = vld [vmem:[#allocation2 + $0xc4] sm:$0xf]
        %v238 = vld [vmem:[#allocation2 + $0xc8] sm:$0xf]
        %v239 = vld [vmem:[#allocation2 + $0xcc] sm:$0xf]
        %v240 = vld [vmem:[#allocation2 + $0xd0] sm:$0xf]
        %v241 = vld [vmem:[#allocation2 + $0xd4] sm:$0xf]
        %v242 = vld [vmem:[#allocation2 + $0xd8] sm:$0xf]
        %v243 = vld [vmem:[#allocation2 + $0xdc] sm:$0xf]
        %v244 = vld [vmem:[#allocation2 + $0xe0] sm:$0xf]
        %v245 = vld [vmem:[#allocation2 + $0xe4] sm:$0xf]
        %v246 = vld [vmem:[#allocation2 + $0xe8] sm:$0xf]
        %v247 = vld [vmem:[#allocation2 + $0xec] sm:$0xf]
        %v248 = vld [vmem:[#allocation2 + $0xf0] sm:$0xf]
        %v249 = vld [vmem:[#allocation2 + $0xf4] sm:$0xf]
        %v250 = vld [vmem:[#allocation2 + $0xf8] sm:$0xf]
        %v251 = vld [vmem:[#allocation2 + $0xfc] sm:$0xf]
        %v252 = vld [vmem:[#allocation2 + $0x100] sm:$0xf]
        %v253 = vld [vmem:[#allocation2 + $0x104] sm:$0xf]
        %v254 = vld [vmem:[#allocation2 + $0x108] sm:$0xf]
        %v255 = vld [vmem:[#allocation2 + $0x10c] sm:$0xf]
        %v256 = vld [vmem:[#allocation2 + $0x110] sm:$0xf]
        %v257 = vld [vmem:[#allocation2 + $0x114] sm:$0xf]
        %v258 = vld [vmem:[#allocation2 + $0x118] sm:$0xf]
        %v259 = vld [vmem:[#allocation2 + $0x11c] sm:$0xf]
        %v260 = vld [vmem:[#allocation2 + $0x120] sm:$0xf]
        %v261 = vld [vmem:[#allocation2 + $0x124] sm:$0xf]
        %v262 = vld [vmem:[#allocation2 + $0x128] sm:$0xf]
        %v263 = vld [vmem:[#allocation2 + $0x12c] sm:$0xf]
        %v264 = vld [vmem:[#allocation2 + $0x130] sm:$0xf]
        %v265 = vld [vmem:[#allocation2 + $0x134] sm:$0xf]
        %v266 = vld [vmem:[#allocation2 + $0x138] sm:$0xf]
        %v267 = vld [vmem:[#allocation2 + $0x13c] sm:$0xf]
        %v268 = vld [vmem:[#allocation2 + $0x140] sm:$0xf]
        %v269 = vld [vmem:[#allocation2 + $0x144] sm:$0xf]
        %v270 = vld [vmem:[#allocation2 + $0x148] sm:$0xf]
        %v271 = vld [vmem:[#allocation2 + $0x14c] sm:$0xf]
        %v272 = vld [vmem:[#allocation2 + $0x150] sm:$0xf]
        %v273 = vld [vmem:[#allocation2 + $0x154] sm:$0xf]
        %v274 = vld [vmem:[#allocation2 + $0x158] sm:$0xf]
        %v275 = vld [vmem:[#allocation2 + $0x15c] sm:$0xf]
        %v276 = vld [vmem:[#allocation2 + $0x160] sm:$0xf]
        %v277 = vld [vmem:[#allocation2 + $0x164] sm:$0xf]
        %v278 = vld [vmem:[#allocation2 + $0x168] sm:$0xf]
        %v279 = vld [vmem:[#allocation2 + $0x16c] sm:$0xf]
        %v280 = vld [vmem:[#allocation2 + $0x170] sm:$0xf]
        %v281 = vld [vmem:[#allocation2 + $0x174] sm:$0xf]
        %v282 = vld [vmem:[#allocation2 + $0x178] sm:$0xf]
        %v283 = vld [vmem:[#allocation2 + $0x17c] sm:$0xf]
        %v284 = vld [vmem:[%s2] sm:$0x1f]
        %v288 = vunpack.c.l.b16 %v185
        %v289 = vunpack.c.h.b16 %v185
        %v290 = vunpack.c.l.b16 %v186
        %v291 = vunpack.c.h.b16 %v186
        %v292 = vunpack.c.l.b16 %v187
        %v293 = vunpack.c.h.b16 %v187
        %v294 = vpack.c.b16 %v288, %v288
        %v295 = vpack.c.b16 %v289, %v289
        %v296 = vpack.c.b16 %v290, %v290
        %v297 = vpack.c.b16 %v291, %v291
        %v298 = vpack.c.b16 %v292, %v292
        %v299 = vpack.c.b16 %v293, %v293
        %v402 = vunpack.c.l.b16 %v188
        %v403 = vunpack.c.l.b16 %v189
        %v404 = vunpack.c.l.b16 %v190
        %v405 = vunpack.c.l.b16 %v191
        %v406 = vunpack.c.l.b16 %v192
        %v407 = vunpack.c.l.b16 %v193
        %v408 = vunpack.c.l.b16 %v194
        %v409 = vunpack.c.l.b16 %v195
        %v410 = vunpack.c.l.b16 %v196
        %v411 = vunpack.c.l.b16 %v197
        %v412 = vunpack.c.l.b16 %v198
        %v413 = vunpack.c.l.b16 %v199
        %v414 = vunpack.c.l.b16 %v200
        %v415 = vunpack.c.l.b16 %v201
        %v416 = vunpack.c.l.b16 %v202
        %v417 = vunpack.c.l.b16 %v203
        %v418 = vunpack.c.l.b16 %v204
        %v419 = vunpack.c.l.b16 %v205
        %v420 = vunpack.c.l.b16 %v206
        %v421 = vunpack.c.l.b16 %v207
        %v422 = vunpack.c.l.b16 %v208
        %v423 = vunpack.c.l.b16 %v209
        %v424 = vunpack.c.l.b16 %v210
        %v425 = vunpack.c.l.b16 %v211
        %v426 = vunpack.c.l.b16 %v212
        %v427 = vunpack.c.l.b16 %v213
        %v428 = vunpack.c.l.b16 %v214
        %v429 = vunpack.c.l.b16 %v215
        %v430 = vunpack.c.l.b16 %v216
        %v431 = vunpack.c.l.b16 %v217
        %v432 = vunpack.c.l.b16 %v218
        %v433 = vunpack.c.l.b16 %v219
        %v434 = vunpack.c.l.b16 %v220
        %v435 = vunpack.c.l.b16 %v221
        %v436 = vunpack.c.l.b16 %v222
        %v437 = vunpack.c.l.b16 %v223
        %v438 = vunpack.c.l.b16 %v224
        %v439 = vunpack.c.l.b16 %v225
        %v440 = vunpack.c.l.b16 %v226
        %v441 = vunpack.c.l.b16 %v227
        %v442 = vunpack.c.l.b16 %v228
        %v443 = vunpack.c.l.b16 %v229
        %v444 = vunpack.c.l.b16 %v230
        %v445 = vunpack.c.l.b16 %v231
        %v446 = vunpack.c.l.b16 %v232
        %v447 = vunpack.c.l.b16 %v233
        %v448 = vunpack.c.l.b16 %v234
        %v449 = vunpack.c.l.b16 %v235
        %v450 = vunpack.c.l.b16 %v236
        %v451 = vunpack.c.l.b16 %v237
        %v452 = vunpack.c.l.b16 %v238
        %v453 = vunpack.c.l.b16 %v239
        %v454 = vunpack.c.l.b16 %v240
        %v455 = vunpack.c.l.b16 %v241
        %v456 = vunpack.c.l.b16 %v242
        %v457 = vunpack.c.l.b16 %v243
        %v458 = vunpack.c.l.b16 %v244
        %v459 = vunpack.c.l.b16 %v245
        %v460 = vunpack.c.l.b16 %v246
        %v461 = vunpack.c.l.b16 %v247
        %v462 = vunpack.c.l.b16 %v248
        %v463 = vunpack.c.l.b16 %v249
        %v464 = vunpack.c.l.b16 %v250
        %v465 = vunpack.c.l.b16 %v251
        %v466 = vunpack.c.l.b16 %v252
        %v467 = vunpack.c.l.b16 %v253
        %v468 = vunpack.c.l.b16 %v254
        %v469 = vunpack.c.l.b16 %v255
        %v470 = vunpack.c.l.b16 %v256
        %v471 = vunpack.c.l.b16 %v257
        %v472 = vunpack.c.l.b16 %v258
        %v473 = vunpack.c.l.b16 %v259
        %v474 = vunpack.c.l.b16 %v260
        %v475 = vunpack.c.l.b16 %v261
        %v476 = vunpack.c.l.b16 %v262
        %v477 = vunpack.c.l.b16 %v263
        %v478 = vunpack.c.l.b16 %v264
        %v479 = vunpack.c.l.b16 %v265
        %v480 = vunpack.c.l.b16 %v266
        %v481 = vunpack.c.l.b16 %v267
        %v482 = vunpack.c.l.b16 %v268
        %v483 = vunpack.c.l.b16 %v269
        %v484 = vunpack.c.l.b16 %v270
        %v485 = vunpack.c.l.b16 %v271
        %v486 = vunpack.c.l.b16 %v272
        %v487 = vunpack.c.l.b16 %v273
        %v488 = vunpack.c.l.b16 %v274
        %v489 = vunpack.c.l.b16 %v275
        %v490 = vunpack.c.l.b16 %v276
        %v491 = vunpack.c.l.b16 %v277
        %v492 = vunpack.c.l.b16 %v278
        %v493 = vunpack.c.l.b16 %v279
        %v494 = vunpack.c.l.b16 %v280
        %v495 = vunpack.c.l.b16 %v281
        %v496 = vunpack.c.l.b16 %v282
        %v497 = vunpack.c.l.b16 %v283
        %v498 = vpack.c.b16 %v403, %v402
        %v499 = vpack.c.b16 %v405, %v404
        %v500 = vpack.c.b16 %v407, %v406
        %v501 = vpack.c.b16 %v409, %v408
        %v502 = vpack.c.b16 %v411, %v410
        %v503 = vpack.c.b16 %v413, %v412
        %v504 = vpack.c.b16 %v415, %v414
        %v505 = vpack.c.b16 %v417, %v416
        %v506 = vpack.c.b16 %v419, %v418
        %v507 = vpack.c.b16 %v421, %v420
        %v508 = vpack.c.b16 %v423, %v422
        %v509 = vpack.c.b16 %v425, %v424
        %v510 = vpack.c.b16 %v427, %v426
        %v511 = vpack.c.b16 %v429, %v428
        %v512 = vpack.c.b16 %v431, %v430
        %v513 = vpack.c.b16 %v433, %v432
        %v514 = vpack.c.b16 %v435, %v434
        %v515 = vpack.c.b16 %v437, %v436
        %v516 = vpack.c.b16 %v439, %v438
        %v517 = vpack.c.b16 %v441, %v440
        %v518 = vpack.c.b16 %v443, %v442
        %v519 = vpack.c.b16 %v445, %v444
        %v520 = vpack.c.b16 %v447, %v446
        %v521 = vpack.c.b16 %v449, %v448
        %v522 = vpack.c.b16 %v451, %v450
        %v523 = vpack.c.b16 %v453, %v452
        %v524 = vpack.c.b16 %v455, %v454
        %v525 = vpack.c.b16 %v457, %v456
        %v526 = vpack.c.b16 %v459, %v458
        %v527 = vpack.c.b16 %v461, %v460
        %v528 = vpack.c.b16 %v463, %v462
        %v529 = vpack.c.b16 %v465, %v464
        %v530 = vpack.c.b16 %v467, %v466
        %v531 = vpack.c.b16 %v469, %v468
        %v532 = vpack.c.b16 %v471, %v470
        %v533 = vpack.c.b16 %v473, %v472
        %v534 = vpack.c.b16 %v475, %v474
        %v535 = vpack.c.b16 %v477, %v476
        %v536 = vpack.c.b16 %v479, %v478
        %v537 = vpack.c.b16 %v481, %v480
        %v538 = vpack.c.b16 %v483, %v482
        %v539 = vpack.c.b16 %v485, %v484
        %v540 = vpack.c.b16 %v487, %v486
        %v541 = vpack.c.b16 %v489, %v488
        %v542 = vpack.c.b16 %v491, %v490
        %v543 = vpack.c.b16 %v493, %v492
        %v544 = vpack.c.b16 %v495, %v494
        %v545 = vpack.c.b16 %v497, %v496
        %594 = vmatprep.subr.bf16.mxu0 0
        %595 = vmatpush1.bf16.msra.mxu0 %v498
        %596 = vmatprep.subr.bf16.mxu0 0
        %597 = vmatpush1.bf16.msra.mxu0 %v499
        %598 = vmatprep.subr.bf16.mxu0 0
        %599 = vmatpush1.bf16.msra.mxu0 %v500
        %600 = vmatprep.subr.bf16.mxu0 0
        %601 = vmatpush1.bf16.msra.mxu0 %v501
        %602 = vmatprep.subr.bf16.mxu0 0
        %603 = vmatpush1.bf16.msra.mxu0 %v502
        %604 = vmatprep.subr.bf16.mxu0 0
        %605 = vmatpush1.bf16.msra.mxu0 %v503
        %606 = vmatprep.subr.bf16.mxu0 0
        %607 = vmatpush1.bf16.msra.mxu0 %v504
        %608 = vmatprep.subr.bf16.mxu0 0
        %609 = vmatpush1.bf16.msra.mxu0 %v505
        %610 = vmatprep.subr.bf16.mxu0 0
        %611 = vmatpush1.bf16.msra.mxu0 %v506
        %612 = vmatprep.subr.bf16.mxu0 0
        %613 = vmatpush1.bf16.msra.mxu0 %v507
        %614 = vmatprep.subr.bf16.mxu0 0
        %615 = vmatpush1.bf16.msra.mxu0 %v508
        %616 = vmatprep.subr.bf16.mxu0 0
        %617 = vmatpush1.bf16.msra.mxu0 %v509
        %618 = vmatprep.subr.bf16.mxu0 0
        %619 = vmatpush1.bf16.msra.mxu0 %v510
        %620 = vmatprep.subr.bf16.mxu0 0
        %621 = vmatpush1.bf16.msra.mxu0 %v511
        %622 = vmatprep.subr.bf16.mxu0 0
        %623 = vmatpush1.bf16.msra.mxu0 %v512
        %624 = vmatprep.subr.bf16.mxu0 0
        %625 = vmatpush1.bf16.msra.mxu0 %v513
        %626 = vmatprep.mubr.bf16.mxu0 %v295
        %627 = vmatmul.mubr.bf16.gmra.mrb[0].mxu0 %v294
        %v628 = vpop.f32.mrb[0].mxu0
        %v629 = vadd.f32 %v284, %v628
        %v630 = vpop.f32.mrb[0].mxu0
        %v631 = vpop.f32.mrb[0].mxu0
        %v632 = vpop.f32.mrb[0].mxu0
        %633 = vdwg.mxu0
        %634 = vmatprep.subr.bf16.mxu0 0
        %635 = vmatpush1.bf16.msra.mxu0 %v514
        %636 = vmatprep.subr.bf16.mxu0 0
        %637 = vmatpush1.bf16.msra.mxu0 %v515
        %638 = vmatprep.subr.bf16.mxu0 0
        %639 = vmatpush1.bf16.msra.mxu0 %v516
        %640 = vmatprep.subr.bf16.mxu0 0
        %641 = vmatpush1.bf16.msra.mxu0 %v517
        %642 = vmatprep.subr.bf16.mxu0 0
        %643 = vmatpush1.bf16.msra.mxu0 %v518
        %644 = vmatprep.subr.bf16.mxu0 0
        %645 = vmatpush1.bf16.msra.mxu0 %v519
        %646 = vmatprep.subr.bf16.mxu0 0
        %647 = vmatpush1.bf16.msra.mxu0 %v520
        %648 = vmatprep.subr.bf16.mxu0 0
        %649 = vmatpush1.bf16.msra.mxu0 %v521
        %650 = vmatprep.subr.bf16.mxu0 0
        %651 = vmatpush1.bf16.msra.mxu0 %v522
        %652 = vmatprep.subr.bf16.mxu0 0
        %653 = vmatpush1.bf16.msra.mxu0 %v523
        %654 = vmatprep.subr.bf16.mxu0 0
        %655 = vmatpush1.bf16.msra.mxu0 %v524
        %656 = vmatprep.subr.bf16.mxu0 0
        %657 = vmatpush1.bf16.msra.mxu0 %v525
        %658 = vmatprep.subr.bf16.mxu0 0
        %659 = vmatpush1.bf16.msra.mxu0 %v526
        %660 = vmatprep.subr.bf16.mxu0 0
        %661 = vmatpush1.bf16.msra.mxu0 %v527
        %662 = vmatprep.subr.bf16.mxu0 0
        %663 = vmatpush1.bf16.msra.mxu0 %v528
        %664 = vmatprep.subr.bf16.mxu0 0
        %665 = vmatpush1.bf16.msra.mxu0 %v529
        %666 = vmatprep.mubr.bf16.mxu0 %v297
        %667 = vmatmul.mubr.bf16.gmra.mrb[0].mxu0 %v296
        %v668 = vpop.f32.mrb[0].mxu0
        %v669 = vadd.f32 %v629, %v668
        %v670 = vpop.f32.mrb[0].mxu0
        %v671 = vpop.f32.mrb[0].mxu0
        %v672 = vpop.f32.mrb[0].mxu0
        %673 = vdwg.mxu0
        %674 = vmatprep.subr.bf16.mxu0 0
        %675 = vmatpush1.bf16.msra.mxu0 %v530
        %676 = vmatprep.subr.bf16.mxu0 0
        %677 = vmatpush1.bf16.msra.mxu0 %v531
        %678 = vmatprep.subr.bf16.mxu0 0
        %679 = vmatpush1.bf16.msra.mxu0 %v532
        %680 = vmatprep.subr.bf16.mxu0 0
        %681 = vmatpush1.bf16.msra.mxu0 %v533
        %682 = vmatprep.subr.bf16.mxu0 0
        %683 = vmatpush1.bf16.msra.mxu0 %v534
        %684 = vmatprep.subr.bf16.mxu0 0
        %685 = vmatpush1.bf16.msra.mxu0 %v535
        %686 = vmatprep.subr.bf16.mxu0 0
        %687 = vmatpush1.bf16.msra.mxu0 %v536
        %688 = vmatprep.subr.bf16.mxu0 0
        %689 = vmatpush1.bf16.msra.mxu0 %v537
        %690 = vmatprep.subr.bf16.mxu0 0
        %691 = vmatpush1.bf16.msra.mxu0 %v538
        %692 = vmatprep.subr.bf16.mxu0 0
        %693 = vmatpush1.bf16.msra.mxu0 %v539
        %694 = vmatprep.subr.bf16.mxu0 0
        %695 = vmatpush1.bf16.msra.mxu0 %v540
        %696 = vmatprep.subr.bf16.mxu0 0
        %697 = vmatpush1.bf16.msra.mxu0 %v541
        %698 = vmatprep.subr.bf16.mxu0 0
        %699 = vmatpush1.bf16.msra.mxu0 %v542
        %700 = vmatprep.subr.bf16.mxu0 0
        %701 = vmatpush1.bf16.msra.mxu0 %v543
        %702 = vmatprep.subr.bf16.mxu0 0
        %703 = vmatpush1.bf16.msra.mxu0 %v544
        %704 = vmatprep.subr.bf16.mxu0 0
        %705 = vmatpush1.bf16.msra.mxu0 %v545
        %706 = vmatprep.mubr.bf16.mxu0 %v299
        %707 = vmatmul.mubr.bf16.gmra.mrb[0].mxu0 %v298
        %v708 = vpop.f32.mrb[0].mxu0
        %v709 = vadd.f32 %v669, %v708
        %v710 = vpop.f32.mrb[0].mxu0
        %v711 = vpop.f32.mrb[0].mxu0
        %v712 = vpop.f32.mrb[0].mxu0
        %713 = vdwg.mxu0
        %714 = vst [vmem:[%s183] sm:$0x1f] %v709
        %p715 = scmp.lt.s32.totalorder %s15, 1
        %s716 = scalar_select %p715, %s15, 1
        %s717 = smul.addr %s716, 8
        %s718 = scalar_lea.vmem %s3, %s717
        // Predicated region
        $region37: #{la_transformer_test_forward.3} parent=31 // pred_check
          %p719 = pneg %p101
        $region38: #{la_transformer_test_forward.3} parent=31 // pred_check_branch
          %721 = sbr.rel (%p719) target = $region40
        $region39: #{la_transformer_test_forward.3} parent=31 // pred_region
          _
        $region40: #{la_transformer_test_forward.3} parent=31 // pred_fallthru
          _
      $region32: #{la_transformer_test_forward.3} parent=5 // pred_fallthru
        _
      %p722 = scmp.le.s32.totalorder 2, %s10
      // Predicated region
      $region41: #{la_transformer_test_forward.3} parent=5 // pred_check
        %p723 = pneg %p722
      $region42: #{la_transformer_test_forward.3} parent=5 // pred_check_branch
        %725 = sbr.rel (%p723) target = $region44
      $region43: #{la_transformer_test_forward.3} parent=5 // pred_region
        %s726 = ssub.s32 %s10, 2
        // Predicated region
        $region45: #{la_transformer_test_forward.3} parent=43 // pred_check
          %p727 = pneg %p107
        $region46: #{la_transformer_test_forward.3} parent=43 // pred_check_branch
          %729 = sbr.rel (%p727) target = $region48
        $region47: #{la_transformer_test_forward.3} parent=43 // pred_region
          %p730 = scmp.lt.s32.totalorder %s16, 1
          %s731 = scalar_select %p730, %s16, 1
          %s732 = smul.addr %s731, 8
          %s733 = scalar_lea.vmem %s3, %s732
        $region48: #{la_transformer_test_forward.3} parent=43 // pred_fallthru
          _
      $region44: #{la_transformer_test_forward.3} parent=5 // pred_fallthru
        _
    $region6: #{la_transformer_test_forward.3} parent=1 // loop_footer
      %s14 = sadd.s32 1, %s10
    $region7: #{la_transformer_test_forward.3} parent=1 // loop_footer_branch
      %9 = sbr.rel target = $region3
    $region8: #{la_transformer_test_forward.3} parent=1 // loop_exit
      _
    %734 = vsyncpa [#allocation3], 1
    %s735 = scalar_lea.sflag [#allocation3], 1
    %736 = vsyncpa %s735, 1

// kernel: la_transformer_test_forward.4
$region0: #{la_transformer_test_forward.4}
  #allocation0 [shape = 'u32[]', space=smem, size = 0x4, offset = 0x4, fixed_abs, tag = 'smem constant byte address 0x4 - core index']
  #allocation1 [shape = 'u32[144,128]{1,0:T(1,128)}', space=vmem, size = 0x12000, scoped, tag = 'internal scratch']
  #allocation2 [shape = 'f32[5,128]{1,0:T(8,128)}', space=vmem, size = 0x1000, scoped, tag = 'scratch operand']
  %s0 = inlined_call_operand.vmem [shape: f32[2,5,128], index: 0, kind: input, shape index: {}]
  %s1 = inlined_call_operand.hbm [shape: f32[12,1,128], index: 1, kind: input, shape index: {}]
  %s2 = inlined_call_operand.hbm [shape: f32[12,1,128], index: 2, kind: input, shape index: {}]
  %s3 = inlined_call_operand.hbm [shape: bf16[12,128,384], index: 3, kind: input, shape index: {}]
  %s4 = inlined_call_operand.hbm [shape: f32[12,1,384], index: 4, kind: input, shape index: {}]
  %s5 = inlined_call_operand.hbm [shape: bf16[12,128,128], index: 5, kind: input, shape index: {}]
  %s6 = inlined_call_operand.hbm [shape: f32[12,1,128], index: 6, kind: input, shape index: {}]
  %s7 = inlined_call_operand.hbm [shape: f32[12,1,128], index: 7, kind: input, shape index: {}]
  %s8 = inlined_call_operand.hbm [shape: f32[12,1,128], index: 8, kind: input, shape index: {}]
  %s9 = inlined_call_operand.hbm [shape: bf16[12,128,512], index: 9, kind: input, shape index: {}]
  %s10 = inlined_call_operand.hbm [shape: f32[12,1,512], index: 10, kind: input, shape index: {}]
  %s11 = inlined_call_operand.hbm [shape: bf16[12,512,128], index: 11, kind: input, shape index: {}]
  %s12 = inlined_call_operand.hbm [shape: f32[12,1,128], index: 12, kind: input, shape index: {}]
  %s13 = inlined_call_operand.vmem [shape: f32[2,5,128], index: 13, kind: output, shape index: {}]
  %s14 = sld [smem:[#allocation0]]
  $region141: #{la_transformer_test_forward.4} parent=0
    _
  %s16 = ssub.s32 1, %s14
  %s17 = scalar_select 0, %s16, %s14
  $region1: #{la_transformer_test_forward.4} parent=0
    #allocation3 [shape = 'u8[1024]{0}', space=vmem, size = 0x400, scoped, tag = 'input window, operand 1']
    #allocation4 [shape = 's32[2]{0}', space=sflag, size = 0x8, scoped, tag = 'scoped memory for la_transformer_test_forward.4']
    #allocation5 [shape = 'u8[1024]{0}', space=vmem, size = 0x400, scoped, tag = 'input window, operand 2']
    #allocation6 [shape = 's32[2]{0}', space=sflag, size = 0x8, scoped, tag = 'scoped memory for la_transformer_test_forward.4']
    #allocation7 [shape = 'u8[196608]{0}', space=vmem, size = 0x30000, scoped, tag = 'input window, operand 3']
    #allocation8 [shape = 'u8[3072]{0}', space=vmem, size = 0xc00, scoped, tag = 'input window, operand 4']
    #allocation9 [shape = 's32[2]{0}', space=sflag, size = 0x8, scoped, tag = 'scoped memory for la_transformer_test_forward.4']
    #allocation10 [shape = 'u8[65536]{0}', space=vmem, size = 0x10000, scoped, tag = 'input window, operand 5']
    #allocation11 [shape = 'u8[1024]{0}', space=vmem, size = 0x400, scoped, tag = 'input window, operand 6']
    #allocation12 [shape = 's32[2]{0}', space=sflag, size = 0x8, scoped, tag = 'scoped memory for la_transformer_test_forward.4']
    #allocation13 [shape = 'u8[1024]{0}', space=vmem, size = 0x400, scoped, tag = 'input window, operand 7']
    #allocation14 [shape = 'u8[1024]{0}', space=vmem, size = 0x400, scoped, tag = 'input window, operand 8']
    #allocation15 [shape = 's32[2]{0}', space=sflag, size = 0x8, scoped, tag = 'scoped memory for la_transformer_test_forward.4']
    #allocation16 [shape = 'u8[262144]{0}', space=vmem, size = 0x40000, scoped, tag = 'input window, operand 9']
    #allocation17 [shape = 'u8[4096]{0}', space=vmem, size = 0x1000, scoped, tag = 'input window, operand 10']
    #allocation18 [shape = 's32[2]{0}', space=sflag, size = 0x8, scoped, tag = 'scoped memory for la_transformer_test_forward.4']
    #allocation19 [shape = 'u8[262144]{0}', space=vmem, size = 0x40000, scoped, tag = 'input window, operand 11']
    #allocation20 [shape = 'u8[1024]{0}', space=vmem, size = 0x400, scoped, tag = 'input window, operand 12']
    #allocation21 [shape = 's32[2]{0}', space=sflag, size = 0x8, scoped, tag = 'scoped memory for la_transformer_test_forward.4']
    %18 = vsyncpa [#allocation4], 0
    %s19 = scalar_lea.sflag [#allocation4], 1
    %20 = vsyncpa %s19, 0
    %21 = vsyncpa [#allocation6], 0
    %s22 = scalar_lea.sflag [#allocation6], 1
    %23 = vsyncpa %s22, 0
    %24 = vsyncpa [#allocation9], 0
    %s25 = scalar_lea.sflag [#allocation9], 1
    %26 = vsyncpa %s25, 0
    %27 = vsyncpa [#allocation12], 0
    %s28 = scalar_lea.sflag [#allocation12], 1
    %29 = vsyncpa %s28, 0
    %30 = vsyncpa [#allocation15], 0
    %s31 = scalar_lea.sflag [#allocation15], 1
    %32 = vsyncpa %s31, 0
    %33 = vsyncpa [#allocation18], 0
    %s34 = scalar_lea.sflag [#allocation18], 1
    %35 = vsyncpa %s34, 0
    %36 = vsyncpa [#allocation21], 0
    %s37 = scalar_lea.sflag [#allocation21], 1
    %38 = vsyncpa %s37, 0
    loop: start=0, step=1, limit=26
    $region2: #{la_transformer_test_forward.4} parent=1 // loop_pre_header
      _
    $region3: #{la_transformer_test_forward.4} parent=1 // loop_header
      %s40 = sphi 0, %s44
      %p41 = scmp.ge.s32.totalorder %s40, 26
      %s47 = sphi 0, %s59
      %s48 = sphi 0, %s55
      %s49 = sphi 0, %s47
      %s50 = sphi 0, %s48
      %s51 = sphi 0, %s49
      %s52 = sphi 0, %s50
      %s62 = sphi 0, %s64
      %s65 = sphi 0, %s62
      %s66 = sphi 0, %s65
      %s82 = sphi 0, %s66
      %s88 = sphi 0, %s90
      %s91 = sphi 0, %s88
      %s92 = sphi 0, %s91
      %s108 = sphi 0, %s92
      %s114 = sphi 0, %s116
      %s117 = sphi 0, %s114
      %s118 = sphi 0, %s117
      %s134 = sphi 0, %s118
      %s140 = sphi 0, %s142
      %s143 = sphi 0, %s140
      %s144 = sphi 0, %s143
      %s160 = sphi 0, %s144
      %s166 = sphi 0, %s168
      %s169 = sphi 0, %s166
      %s170 = sphi 0, %s169
      %s186 = sphi 0, %s170
      %s192 = sphi 0, %s194
      %s195 = sphi 0, %s192
      %s196 = sphi 0, %s195
      %s212 = sphi 0, %s196
      %s218 = sphi 0, %s220
      %s221 = sphi 0, %s218
      %s222 = sphi 0, %s221
      %s238 = sphi 0, %s222
      %s244 = sphi 0, %s246
      %s247 = sphi 0, %s244
      %s248 = sphi 0, %s247
      %s264 = sphi 0, %s248
      %s270 = sphi 0, %s272
      %s273 = sphi 0, %s270
      %s274 = sphi 0, %s273
      %s290 = sphi 0, %s274
      %s296 = sphi 0, %s298
      %s299 = sphi 0, %s296
      %s300 = sphi 0, %s299
      %s316 = sphi 0, %s300
      %s322 = sphi 0, %s324
      %s325 = sphi 0, %s322
      %s326 = sphi 0, %s325
      %s342 = sphi 0, %s326
      %s348 = sphi 0, %s350
      %s351 = sphi 0, %s348
      %s352 = sphi 0, %s351
      %s368 = sphi 0, %s352
      %s374 = sphi 0, %s376
      %s377 = sphi 0, %s374
      %s378 = sphi 0, %s377
      %s394 = sphi 0, %s378
      %s400 = sphi 0, %s402
      %s403 = sphi 0, %s400
      %s404 = sphi 0, %s403
      %s420 = sphi 0, %s404
    $region4: #{la_transformer_test_forward.4} parent=1 // loop_header_branch
      %43 = sbr.rel (%p41) target = $region8
    $region5: #{la_transformer_test_forward.4} parent=1 // loop_body
      %s45 = ssub.s32 %s40, 1
      %s46 = ssub.s32 %s40, 2
      %s53 = sadd.s32 1, %s48
      %p54 = scmp.ge.s32.totalorder %s53, 12
      %s55 = scalar_select %p54, 0, %s53
      %s56 = sadd.s32 1, %s47
      %s57 = scalar_select %p54, %s56, %s47
      %p58 = scmp.ge.s32.totalorder %s57, 2
      %s59 = scalar_select %p58, 0, %s57
      %s60 = ssub.s32 %s47, %s59
      %p61 = scmp.eq.s32.totalorder %s60, 0
      %s63 = sadd.s32 %s62, 1
      %s64 = scalar_select %p61, %s62, %s63
      %p67 = pneg %p61
      %p68 = scmp.eq.s32.totalorder %s40, 23
      %p69 = por %p67, %p68
      %p70 = scmp.ne.s32.totalorder %s62, %s65
      %p71 = scmp.eq.s32.totalorder %s40, 0
      %p72 = por %p70, %p71
      %p73 = scmp.ne.s32.totalorder %s62, %s65
      %p74 = scmp.eq.s32.totalorder %s45, 23
      %p75 = por %p73, %p74
      %p76 = scmp.ne.s32.totalorder %s65, %s66
      %p77 = scmp.eq.s32.totalorder %s45, 0
      %p78 = por %p76, %p77
      %p79 = scmp.ne.s32.totalorder %s65, %s66
      %p80 = scmp.eq.s32.totalorder %s46, 23
      %p81 = por %p79, %p80
      %p83 = scmp.ne.s32.totalorder %s66, %s82
      %p84 = scmp.eq.s32.totalorder %s46, 0
      %p85 = por %p83, %p84
      %s86 = ssub.s32 %s48, %s55
      %p87 = scmp.eq.s32.totalorder %s86, 0
      %s89 = sadd.s32 %s88, 1
      %s90 = scalar_select %p87, %s88, %s89
      %p93 = pneg %p87
      %p94 = scmp.eq.s32.totalorder %s40, 23
      %p95 = por %p93, %p94
      %p96 = scmp.ne.s32.totalorder %s88, %s91
      %p97 = scmp.eq.s32.totalorder %s40, 0
      %p98 = por %p96, %p97
      %p99 = scmp.ne.s32.totalorder %s88, %s91
      %p100 = scmp.eq.s32.totalorder %s45, 23
      %p101 = por %p99, %p100
      %p102 = scmp.ne.s32.totalorder %s91, %s92
      %p103 = scmp.eq.s32.totalorder %s45, 0
      %p104 = por %p102, %p103
      %p105 = scmp.ne.s32.totalorder %s91, %s92
      %p106 = scmp.eq.s32.totalorder %s46, 23
      %p107 = por %p105, %p106
      %p109 = scmp.ne.s32.totalorder %s92, %s108
      %p110 = scmp.eq.s32.totalorder %s46, 0
      %p111 = por %p109, %p110
      %s112 = ssub.s32 %s48, %s55
      %p113 = scmp.eq.s32.totalorder %s112, 0
      %s115 = sadd.s32 %s114, 1
      %s116 = scalar_select %p113, %s114, %s115
      %p119 = pneg %p113
      %p120 = scmp.eq.s32.totalorder %s40, 23
      %p121 = por %p119, %p120
      %p122 = scmp.ne.s32.totalorder %s114, %s117
      %p123 = scmp.eq.s32.totalorder %s40, 0
      %p124 = por %p122, %p123
      %p125 = scmp.ne.s32.totalorder %s114, %s117
      %p126 = scmp.eq.s32.totalorder %s45, 23
      %p127 = por %p125, %p126
      %p128 = scmp.ne.s32.totalorder %s117, %s118
      %p129 = scmp.eq.s32.totalorder %s45, 0
      %p130 = por %p128, %p129
      %p131 = scmp.ne.s32.totalorder %s117, %s118
      %p132 = scmp.eq.s32.totalorder %s46, 23
      %p133 = por %p131, %p132
      %p135 = scmp.ne.s32.totalorder %s118, %s134
      %p136 = scmp.eq.s32.totalorder %s46, 0
      %p137 = por %p135, %p136
      %s138 = ssub.s32 %s48, %s55
      %p139 = scmp.eq.s32.totalorder %s138, 0
      %s141 = sadd.s32 %s140, 1
      %s142 = scalar_select %p139, %s140, %s141
      %p145 = pneg %p139
      %p146 = scmp.eq.s32.totalorder %s40, 23
      %p147 = por %p145, %p146
      %p148 = scmp.ne.s32.totalorder %s140, %s143
      %p149 = scmp.eq.s32.totalorder %s40, 0
      %p150 = por %p148, %p149
      %p151 = scmp.ne.s32.totalorder %s140, %s143
      %p152 = scmp.eq.s32.totalorder %s45, 23
      %p153 = por %p151, %p152
      %p154 = scmp.ne.s32.totalorder %s143, %s144
      %p155 = scmp.eq.s32.totalorder %s45, 0
      %p156 = por %p154, %p155
      %p157 = scmp.ne.s32.totalorder %s143, %s144
      %p158 = scmp.eq.s32.totalorder %s46, 23
      %p159 = por %p157, %p158
      %p161 = scmp.ne.s32.totalorder %s144, %s160
      %p162 = scmp.eq.s32.totalorder %s46, 0
      %p163 = por %p161, %p162
      %s164 = ssub.s32 %s48, %s55
      %p165 = scmp.eq.s32.totalorder %s164, 0
      %s167 = sadd.s32 %s166, 1
      %s168 = scalar_select %p165, %s166, %s167
      %p171 = pneg %p165
      %p172 = scmp.eq.s32.totalorder %s40, 23
      %p173 = por %p171, %p172
      %p174 = scmp.ne.s32.totalorder %s166, %s169
      %p175 = scmp.eq.s32.totalorder %s40, 0
      %p176 = por %p174, %p175
      %p177 = scmp.ne.s32.totalorder %s166, %s169
      %p178 = scmp.eq.s32.totalorder %s45, 23
      %p179 = por %p177, %p178
      %p180 = scmp.ne.s32.totalorder %s169, %s170
      %p181 = scmp.eq.s32.totalorder %s45, 0
      %p182 = por %p180, %p181
      %p183 = scmp.ne.s32.totalorder %s169, %s170
      %p184 = scmp.eq.s32.totalorder %s46, 23
      %p185 = por %p183, %p184
      %p187 = scmp.ne.s32.totalorder %s170, %s186
      %p188 = scmp.eq.s32.totalorder %s46, 0
      %p189 = por %p187, %p188
      %s190 = ssub.s32 %s48, %s55
      %p191 = scmp.eq.s32.totalorder %s190, 0
      %s193 = sadd.s32 %s192, 1
      %s194 = scalar_select %p191, %s192, %s193
      %p197 = pneg %p191
      %p198 = scmp.eq.s32.totalorder %s40, 23
      %p199 = por %p197, %p198
      %p200 = scmp.ne.s32.totalorder %s192, %s195
      %p201 = scmp.eq.s32.totalorder %s40, 0
      %p202 = por %p200, %p201
      %p203 = scmp.ne.s32.totalorder %s192, %s195
      %p204 = scmp.eq.s32.totalorder %s45, 23
      %p205 = por %p203, %p204
      %p206 = scmp.ne.s32.totalorder %s195, %s196
      %p207 = scmp.eq.s32.totalorder %s45, 0
      %p208 = por %p206, %p207
      %p209 = scmp.ne.s32.totalorder %s195, %s196
      %p210 = scmp.eq.s32.totalorder %s46, 23
      %p211 = por %p209, %p210
      %p213 = scmp.ne.s32.totalorder %s196, %s212
      %p214 = scmp.eq.s32.totalorder %s46, 0
      %p215 = por %p213, %p214
      %s216 = ssub.s32 %s48, %s55
      %p217 = scmp.eq.s32.totalorder %s216, 0
      %s219 = sadd.s32 %s218, 1
      %s220 = scalar_select %p217, %s218, %s219
      %p223 = pneg %p217
      %p224 = scmp.eq.s32.totalorder %s40, 23
      %p225 = por %p223, %p224
      %p226 = scmp.ne.s32.totalorder %s218, %s221
      %p227 = scmp.eq.s32.totalorder %s40, 0
      %p228 = por %p226, %p227
      %p229 = scmp.ne.s32.totalorder %s218, %s221
      %p230 = scmp.eq.s32.totalorder %s45, 23
      %p231 = por %p229, %p230
      %p232 = scmp.ne.s32.totalorder %s221, %s222
      %p233 = scmp.eq.s32.totalorder %s45, 0
      %p234 = por %p232, %p233
      %p235 = scmp.ne.s32.totalorder %s221, %s222
      %p236 = scmp.eq.s32.totalorder %s46, 23
      %p237 = por %p235, %p236
      %p239 = scmp.ne.s32.totalorder %s222, %s238
      %p240 = scmp.eq.s32.totalorder %s46, 0
      %p241 = por %p239, %p240
      %s242 = ssub.s32 %s48, %s55
      %p243 = scmp.eq.s32.totalorder %s242, 0
      %s245 = sadd.s32 %s244, 1
      %s246 = scalar_select %p243, %s244, %s245
      %p249 = pneg %p243
      %p250 = scmp.eq.s32.totalorder %s40, 23
      %p251 = por %p249, %p250
      %p252 = scmp.ne.s32.totalorder %s244, %s247
      %p253 = scmp.eq.s32.totalorder %s40, 0
      %p254 = por %p252, %p253
      %p255 = scmp.ne.s32.totalorder %s244, %s247
      %p256 = scmp.eq.s32.totalorder %s45, 23
      %p257 = por %p255, %p256
      %p258 = scmp.ne.s32.totalorder %s247, %s248
      %p259 = scmp.eq.s32.totalorder %s45, 0
      %p260 = por %p258, %p259
      %p261 = scmp.ne.s32.totalorder %s247, %s248
      %p262 = scmp.eq.s32.totalorder %s46, 23
      %p263 = por %p261, %p262
      %p265 = scmp.ne.s32.totalorder %s248, %s264
      %p266 = scmp.eq.s32.totalorder %s46, 0
      %p267 = por %p265, %p266
      %s268 = ssub.s32 %s48, %s55
      %p269 = scmp.eq.s32.totalorder %s268, 0
      %s271 = sadd.s32 %s270, 1
      %s272 = scalar_select %p269, %s270, %s271
      %p275 = pneg %p269
      %p276 = scmp.eq.s32.totalorder %s40, 23
      %p277 = por %p275, %p276
      %p278 = scmp.ne.s32.totalorder %s270, %s273
      %p279 = scmp.eq.s32.totalorder %s40, 0
      %p280 = por %p278, %p279
      %p281 = scmp.ne.s32.totalorder %s270, %s273
      %p282 = scmp.eq.s32.totalorder %s45, 23
      %p283 = por %p281, %p282
      %p284 = scmp.ne.s32.totalorder %s273, %s274
      %p285 = scmp.eq.s32.totalorder %s45, 0
      %p286 = por %p284, %p285
      %p287 = scmp.ne.s32.totalorder %s273, %s274
      %p288 = scmp.eq.s32.totalorder %s46, 23
      %p289 = por %p287, %p288
      %p291 = scmp.ne.s32.totalorder %s274, %s290
      %p292 = scmp.eq.s32.totalorder %s46, 0
      %p293 = por %p291, %p292
      %s294 = ssub.s32 %s48, %s55
      %p295 = scmp.eq.s32.totalorder %s294, 0
      %s297 = sadd.s32 %s296, 1
      %s298 = scalar_select %p295, %s296, %s297
      %p301 = pneg %p295
      %p302 = scmp.eq.s32.totalorder %s40, 23
      %p303 = por %p301, %p302
      %p304 = scmp.ne.s32.totalorder %s296, %s299
      %p305 = scmp.eq.s32.totalorder %s40, 0
      %p306 = por %p304, %p305
      %p307 = scmp.ne.s32.totalorder %s296, %s299
      %p308 = scmp.eq.s32.totalorder %s45, 23
      %p309 = por %p307, %p308
      %p310 = scmp.ne.s32.totalorder %s299, %s300
      %p311 = scmp.eq.s32.totalorder %s45, 0
      %p312 = por %p310, %p311
      %p313 = scmp.ne.s32.totalorder %s299, %s300
      %p314 = scmp.eq.s32.totalorder %s46, 23
      %p315 = por %p313, %p314
      %p317 = scmp.ne.s32.totalorder %s300, %s316
      %p318 = scmp.eq.s32.totalorder %s46, 0
      %p319 = por %p317, %p318
      %s320 = ssub.s32 %s48, %s55
      %p321 = scmp.eq.s32.totalorder %s320, 0
      %s323 = sadd.s32 %s322, 1
      %s324 = scalar_select %p321, %s322, %s323
      %p327 = pneg %p321
      %p328 = scmp.eq.s32.totalorder %s40, 23
      %p329 = por %p327, %p328
      %p330 = scmp.ne.s32.totalorder %s322, %s325
      %p331 = scmp.eq.s32.totalorder %s40, 0
      %p332 = por %p330, %p331
      %p333 = scmp.ne.s32.totalorder %s322, %s325
      %p334 = scmp.eq.s32.totalorder %s45, 23
      %p335 = por %p333, %p334
      %p336 = scmp.ne.s32.totalorder %s325, %s326
      %p337 = scmp.eq.s32.totalorder %s45, 0
      %p338 = por %p336, %p337
      %p339 = scmp.ne.s32.totalorder %s325, %s326
      %p340 = scmp.eq.s32.totalorder %s46, 23
      %p341 = por %p339, %p340
      %p343 = scmp.ne.s32.totalorder %s326, %s342
      %p344 = scmp.eq.s32.totalorder %s46, 0
      %p345 = por %p343, %p344
      %s346 = ssub.s32 %s48, %s55
      %p347 = scmp.eq.s32.totalorder %s346, 0
      %s349 = sadd.s32 %s348, 1
      %s350 = scalar_select %p347, %s348, %s349
      %p353 = pneg %p347
      %p354 = scmp.eq.s32.totalorder %s40, 23
      %p355 = por %p353, %p354
      %p356 = scmp.ne.s32.totalorder %s348, %s351
      %p357 = scmp.eq.s32.totalorder %s40, 0
      %p358 = por %p356, %p357
      %p359 = scmp.ne.s32.totalorder %s348, %s351
      %p360 = scmp.eq.s32.totalorder %s45, 23
      %p361 = por %p359, %p360
      %p362 = scmp.ne.s32.totalorder %s351, %s352
      %p363 = scmp.eq.s32.totalorder %s45, 0
      %p364 = por %p362, %p363
      %p365 = scmp.ne.s32.totalorder %s351, %s352
      %p366 = scmp.eq.s32.totalorder %s46, 23
      %p367 = por %p365, %p366
      %p369 = scmp.ne.s32.totalorder %s352, %s368
      %p370 = scmp.eq.s32.totalorder %s46, 0
      %p371 = por %p369, %p370
      %s372 = ssub.s32 %s48, %s55
      %p373 = scmp.eq.s32.totalorder %s372, 0
      %s375 = sadd.s32 %s374, 1
      %s376 = scalar_select %p373, %s374, %s375
      %p379 = pneg %p373
      %p380 = scmp.eq.s32.totalorder %s40, 23
      %p381 = por %p379, %p380
      %p382 = scmp.ne.s32.totalorder %s374, %s377
      %p383 = scmp.eq.s32.totalorder %s40, 0
      %p384 = por %p382, %p383
      %p385 = scmp.ne.s32.totalorder %s374, %s377
      %p386 = scmp.eq.s32.totalorder %s45, 23
      %p387 = por %p385, %p386
      %p388 = scmp.ne.s32.totalorder %s377, %s378
      %p389 = scmp.eq.s32.totalorder %s45, 0
      %p390 = por %p388, %p389
      %p391 = scmp.ne.s32.totalorder %s377, %s378
      %p392 = scmp.eq.s32.totalorder %s46, 23
      %p393 = por %p391, %p392
      %p395 = scmp.ne.s32.totalorder %s378, %s394
      %p396 = scmp.eq.s32.totalorder %s46, 0
      %p397 = por %p395, %p396
      %s398 = ssub.s32 %s47, %s59
      %p399 = scmp.eq.s32.totalorder %s398, 0
      %s401 = sadd.s32 %s400, 1
      %s402 = scalar_select %p399, %s400, %s401
      %p405 = pneg %p399
      %p406 = scmp.eq.s32.totalorder %s40, 23
      %p407 = por %p405, %p406
      %p408 = scmp.ne.s32.totalorder %s400, %s403
      %p409 = scmp.eq.s32.totalorder %s40, 0
      %p410 = por %p408, %p409
      %p411 = scmp.ne.s32.totalorder %s400, %s403
      %p412 = scmp.eq.s32.totalorder %s45, 23
      %p413 = por %p411, %p412
      %p414 = scmp.ne.s32.totalorder %s403, %s404
      %p415 = scmp.eq.s32.totalorder %s45, 0
      %p416 = por %p414, %p415
      %p417 = scmp.ne.s32.totalorder %s403, %s404
      %p418 = scmp.eq.s32.totalorder %s46, 23
      %p419 = por %p417, %p418
      %p421 = scmp.ne.s32.totalorder %s404, %s420
      %p422 = scmp.eq.s32.totalorder %s46, 0
      %p423 = por %p421, %p422
      %p424 = scmp.le.s32.totalorder 1, %s40
      %p425 = scmp.lt.s32.totalorder %s40, 25
      %p426 = pnand %p424, %p425
      %p427 = pneg %p426
      // Predicated region
      $region9: #{la_transformer_test_forward.4} parent=5 // pred_check
        _
      $region10: #{la_transformer_test_forward.4} parent=5 // pred_check_branch
        %429 = sbr.rel (%p426) target = $region12
      $region11: #{la_transformer_test_forward.4} parent=5 // pred_region
        %s430 = ssub.s32 %s40, 1
      $region12: #{la_transformer_test_forward.4} parent=5 // pred_fallthru
        _
      %p431 = scmp.lt.s32.totalorder %s40, 24
      // Predicated region
      $region13: #{la_transformer_test_forward.4} parent=5 // pred_check
        %p432 = pneg %p431
      $region14: #{la_transformer_test_forward.4} parent=5 // pred_check_branch
        %434 = sbr.rel (%p432) target = $region16
      $region15: #{la_transformer_test_forward.4} parent=5 // pred_region
        // Predicated region
        $region17: #{la_transformer_test_forward.4} parent=15 // pred_check
          %p435 = pneg %p72
        $region18: #{la_transformer_test_forward.4} parent=15 // pred_check_branch
          %437 = sbr.rel (%p435) target = $region20
        $region19: #{la_transformer_test_forward.4} parent=15 // pred_region
          %p438 = scmp.lt.s32.totalorder %s47, 1
          %s439 = scalar_select %p438, %s47, 1
          %s440 = smul.addr %s439, 8
          %s441 = scalar_lea.vmem %s0, %s440
        $region20: #{la_transformer_test_forward.4} parent=15 // pred_fallthru
          _
        // Predicated region
        $region21: #{la_transformer_test_forward.4} parent=15 // pred_check
          %p442 = pneg %p98
        $region22: #{la_transformer_test_forward.4} parent=15 // pred_check_branch
          %444 = sbr.rel (%p442) target = $region24
        $region23: #{la_transformer_test_forward.4} parent=15 // pred_region
          %s445 = sand.u32 %s88, 1
          %s446 = scalar_lea.sflag [#allocation4], %s445
          %s447 = sand.u32 %s88, 1
          %s448 = scalar_lea.vmem [#allocation3], %s447
          %s450 = ssub.s32 16, 16
          %451 = vsyncadd %s446, %s450
          %s452 = smul.addr %s48, 16
          %s453 = scalar_lea.hbm %s1, %s452
          %s455 = sshll.u32 %s448, 4
          %s456 = int_to_ptr.vmem [resolvable:$true] %s455
          %458 = dma.hbm_to_vmem [thread:$0]  %s453, 16, %s456, %s446
        $region24: #{la_transformer_test_forward.4} parent=15 // pred_fallthru
          _
        // Predicated region
        $region25: #{la_transformer_test_forward.4} parent=15 // pred_check
          %p459 = pneg %p124
        $region26: #{la_transformer_test_forward.4} parent=15 // pred_check_branch
          %461 = sbr.rel (%p459) target = $region28
        $region27: #{la_transformer_test_forward.4} parent=15 // pred_region
          %s462 = sand.u32 %s40, 1
          %s463 = scalar_lea.sflag [#allocation6], %s462
          %s464 = sand.u32 %s114, 1
          %s465 = scalar_lea.vmem [#allocation5], %s464
          %s467 = ssub.s32 16, 16
          %468 = vsyncadd %s463, %s467
          %s469 = smul.addr %s48, 16
          %s470 = scalar_lea.hbm %s2, %s469
          %s472 = sshll.u32 %s465, 4
          %s473 = int_to_ptr.vmem [resolvable:$true] %s472
          %475 = dma.hbm_to_vmem [thread:$0]  %s470, 16, %s473, %s463
        $region28: #{la_transformer_test_forward.4} parent=15 // pred_fallthru
          _
        // Predicated region
        $region29: #{la_transformer_test_forward.4} parent=15 // pred_check
          %p476 = pneg %p150
        $region30: #{la_transformer_test_forward.4} parent=15 // pred_check_branch
          %478 = sbr.rel (%p476) target = $region32
        $region31: #{la_transformer_test_forward.4} parent=15 // pred_region
          %s479 = sand.u32 %s40, 1
          %s480 = scalar_lea.sflag [#allocation6], %s479
          %s481 = sand.u32 %s140, 1
          %s482 = smul.addr %s481, 192
          %s483 = scalar_lea.vmem [#allocation7], %s482
          %s485 = ssub.s32 3072, 3072
          %486 = vsyncadd %s480, %s485
          %s487 = smul.addr %s48, 48
          %s488 = smul.addr %s487, 64
          %s489 = scalar_lea.hbm %s3, %s488
          %s490 = sshll.u32 %s483, 4
          %s491 = int_to_ptr.vmem [resolvable:$true] %s490
          %496 = dma.hbm_to_vmem [thread:$0]  %s489, 3072, %s491, %s480, 192, 192, 12
        $region32: #{la_transformer_test_forward.4} parent=15 // pred_fallthru
          _
        // Predicated region
        $region33: #{la_transformer_test_forward.4} parent=15 // pred_check
          %p497 = pneg %p176
        $region34: #{la_transformer_test_forward.4} parent=15 // pred_check_branch
          %499 = sbr.rel (%p497) target = $region36
        $region35: #{la_transformer_test_forward.4} parent=15 // pred_region
          %s500 = sand.u32 %s40, 1
          %s501 = scalar_lea.sflag [#allocation9], %s500
          %s502 = sand.u32 %s166, 1
          %s503 = smul.addr %s502, 3
          %s504 = scalar_lea.vmem [#allocation8], %s503
          %s506 = ssub.s32 48, 48
          %507 = vsyncadd %s501, %s506
          %s508 = smul.addr %s48, 3
          %s509 = smul.addr %s508, 16
          %s510 = scalar_lea.hbm %s4, %s509
          %s512 = sshll.u32 %s504, 4
          %s513 = int_to_ptr.vmem [resolvable:$true] %s512
          %515 = dma.hbm_to_vmem [thread:$0]  %s510, 48, %s513, %s501
        $region36: #{la_transformer_test_forward.4} parent=15 // pred_fallthru
          _
        // Predicated region
        $region37: #{la_transformer_test_forward.4} parent=15 // pred_check
          %p516 = pneg %p202
        $region38: #{la_transformer_test_forward.4} parent=15 // pred_check_branch
          %518 = sbr.rel (%p516) target = $region40
        $region39: #{la_transformer_test_forward.4} parent=15 // pred_region
          %s519 = sand.u32 %s40, 1
          %s520 = scalar_lea.sflag [#allocation9], %s519
          %s521 = sand.u32 %s192, 1
          %s522 = smul.addr %s521, 64
          %s523 = scalar_lea.vmem [#allocation10], %s522
          %s525 = ssub.s32 1024, 1024
          %526 = vsyncadd %s520, %s525
          %s527 = smul.addr %s48, 16
          %s528 = smul.addr %s527, 64
          %s529 = scalar_lea.hbm %s5, %s528
          %s530 = sshll.u32 %s523, 4
          %s531 = int_to_ptr.vmem [resolvable:$true] %s530
          %536 = dma.hbm_to_vmem [thread:$0]  %s529, 1024, %s531, %s520, 64, 64, 4
        $region40: #{la_transformer_test_forward.4} parent=15 // pred_fallthru
          _
        // Predicated region
        $region41: #{la_transformer_test_forward.4} parent=15 // pred_check
          %p537 = pneg %p228
        $region42: #{la_transformer_test_forward.4} parent=15 // pred_check_branch
          %539 = sbr.rel (%p537) target = $region44
        $region43: #{la_transformer_test_forward.4} parent=15 // pred_region
          %s540 = sand.u32 %s40, 1
          %s541 = scalar_lea.sflag [#allocation12], %s540
          %s542 = sand.u32 %s218, 1
          %s543 = scalar_lea.vmem [#allocation11], %s542
          %s545 = ssub.s32 16, 16
          %546 = vsyncadd %s541, %s545
          %s547 = smul.addr %s48, 16
          %s548 = scalar_lea.hbm %s6, %s547
          %s550 = sshll.u32 %s543, 4
          %s551 = int_to_ptr.vmem [resolvable:$true] %s550
          %553 = dma.hbm_to_vmem [thread:$0]  %s548, 16, %s551, %s541
        $region44: #{la_transformer_test_forward.4} parent=15 // pred_fallthru
          _
        // Predicated region
        $region45: #{la_transformer_test_forward.4} parent=15 // pred_check
          %p554 = pneg %p254
        $region46: #{la_transformer_test_forward.4} parent=15 // pred_check_branch
          %556 = sbr.rel (%p554) target = $region48
        $region47: #{la_transformer_test_forward.4} parent=15 // pred_region
          %s557 = sand.u32 %s40, 1
          %s558 = scalar_lea.sflag [#allocation12], %s557
          %s559 = sand.u32 %s244, 1
          %s560 = scalar_lea.vmem [#allocation13], %s559
          %s562 = ssub.s32 16, 16
          %563 = vsyncadd %s558, %s562
          %s564 = smul.addr %s48, 16
          %s565 = scalar_lea.hbm %s7, %s564
          %s567 = sshll.u32 %s560, 4
          %s568 = int_to_ptr.vmem [resolvable:$true] %s567
          %570 = dma.hbm_to_vmem [thread:$0]  %s565, 16, %s568, %s558
        $region48: #{la_transformer_test_forward.4} parent=15 // pred_fallthru
          _
        // Predicated region
        $region49: #{la_transformer_test_forward.4} parent=15 // pred_check
          %p571 = pneg %p280
        $region50: #{la_transformer_test_forward.4} parent=15 // pred_check_branch
          %573 = sbr.rel (%p571) target = $region52
        $region51: #{la_transformer_test_forward.4} parent=15 // pred_region
          %s574 = sand.u32 %s40, 1
          %s575 = scalar_lea.sflag [#allocation15], %s574
          %s576 = sand.u32 %s270, 1
          %s577 = scalar_lea.vmem [#allocation14], %s576
          %s579 = ssub.s32 16, 16
          %580 = vsyncadd %s575, %s579
          %s581 = smul.addr %s48, 16
          %s582 = scalar_lea.hbm %s8, %s581
          %s584 = sshll.u32 %s577, 4
          %s585 = int_to_ptr.vmem [resolvable:$true] %s584
          %587 = dma.hbm_to_vmem [thread:$0]  %s582, 16, %s585, %s575
        $region52: #{la_transformer_test_forward.4} parent=15 // pred_fallthru
          _
        // Predicated region
        $region53: #{la_transformer_test_forward.4} parent=15 // pred_check
          %p588 = pneg %p306
        $region54: #{la_transformer_test_forward.4} parent=15 // pred_check_branch
          %590 = sbr.rel (%p588) target = $region56
        $region55: #{la_transformer_test_forward.4} parent=15 // pred_region
          %s591 = sand.u32 %s40, 1
          %s592 = scalar_lea.sflag [#allocation15], %s591
          %s593 = sand.u32 %s296, 1
          %s594 = smul.addr %s593, 256
          %s595 = scalar_lea.vmem [#allocation16], %s594
          %s597 = ssub.s32 4096, 4096
          %598 = vsyncadd %s592, %s597
          %s599 = smul.addr %s48, 64
          %s600 = smul.addr %s599, 64
          %s601 = scalar_lea.hbm %s9, %s600
          %s602 = sshll.u32 %s595, 4
          %s603 = int_to_ptr.vmem [resolvable:$true] %s602
          %608 = dma.hbm_to_vmem [thread:$0]  %s601, 4096, %s603, %s592, 256, 256, 16
        $region56: #{la_transformer_test_forward.4} parent=15 // pred_fallthru
          _
        // Predicated region
        $region57: #{la_transformer_test_forward.4} parent=15 // pred_check
          %p609 = pneg %p332
        $region58: #{la_transformer_test_forward.4} parent=15 // pred_check_branch
          %611 = sbr.rel (%p609) target = $region60
        $region59: #{la_transformer_test_forward.4} parent=15 // pred_region
          %s612 = sand.u32 %s40, 1
          %s613 = scalar_lea.sflag [#allocation18], %s612
          %s614 = sand.u32 %s322, 1
          %s615 = smul.addr %s614, 4
          %s616 = scalar_lea.vmem [#allocation17], %s615
          %s618 = ssub.s32 64, 64
          %619 = vsyncadd %s613, %s618
          %s620 = smul.addr %s48, 4
          %s621 = smul.addr %s620, 16
          %s622 = scalar_lea.hbm %s10, %s621
          %s624 = sshll.u32 %s616, 4
          %s625 = int_to_ptr.vmem [resolvable:$true] %s624
          %627 = dma.hbm_to_vmem [thread:$0]  %s622, 64, %s625, %s613
        $region60: #{la_transformer_test_forward.4} parent=15 // pred_fallthru
          _
        // Predicated region
        $region61: #{la_transformer_test_forward.4} parent=15 // pred_check
          %p628 = pneg %p358
        $region62: #{la_transformer_test_forward.4} parent=15 // pred_check_branch
          %630 = sbr.rel (%p628) target = $region64
        $region63: #{la_transformer_test_forward.4} parent=15 // pred_region
          %s631 = sand.u32 %s40, 1
          %s632 = scalar_lea.sflag [#allocation18], %s631
          %s633 = sand.u32 %s348, 1
          %s634 = smul.addr %s633, 256
          %s635 = scalar_lea.vmem [#allocation19], %s634
          %s637 = ssub.s32 4096, 4096
          %638 = vsyncadd %s632, %s637
          %s639 = smul.addr %s48, 64
          %s640 = smul.addr %s639, 64
          %s641 = scalar_lea.hbm %s11, %s640
          %s642 = sshll.u32 %s635, 4
          %s643 = int_to_ptr.vmem [resolvable:$true] %s642
          %648 = dma.hbm_to_vmem [thread:$0]  %s641, 4096, %s643, %s632, 64, 64, 4
        $region64: #{la_transformer_test_forward.4} parent=15 // pred_fallthru
          _
        // Predicated region
        $region65: #{la_transformer_test_forward.4} parent=15 // pred_check
          %p649 = pneg %p384
        $region66: #{la_transformer_test_forward.4} parent=15 // pred_check_branch
          %651 = sbr.rel (%p649) target = $region68
        $region67: #{la_transformer_test_forward.4} parent=15 // pred_region
          %s652 = sand.u32 %s374, 1
          %s653 = scalar_lea.sflag [#allocation21], %s652
          %s654 = sand.u32 %s374, 1
          %s655 = scalar_lea.vmem [#allocation20], %s654
          %s657 = ssub.s32 16, 16
          %658 = vsyncadd %s653, %s657
          %s659 = smul.addr %s48, 16
          %s660 = scalar_lea.hbm %s12, %s659
          %s662 = sshll.u32 %s655, 4
          %s663 = int_to_ptr.vmem [resolvable:$true] %s662
          %665 = dma.hbm_to_vmem [thread:$0]  %s660, 16, %s663, %s653
        $region68: #{la_transformer_test_forward.4} parent=15 // pred_fallthru
          _
      $region16: #{la_transformer_test_forward.4} parent=5 // pred_fallthru
        _
      %p666 = scmp.le.s32.totalorder 1, %s40
      %p667 = scmp.lt.s32.totalorder %s40, 25
      %p668 = pnand %p666, %p667
      %p669 = pneg %p668
      // Predicated region
      $region69: #{la_transformer_test_forward.4} parent=5 // pred_check
        _
      $region70: #{la_transformer_test_forward.4} parent=5 // pred_check_branch
        %671 = sbr.rel (%p668) target = $region72
      $region71: #{la_transformer_test_forward.4} parent=5 // pred_region
        %s672 = ssub.s32 %s40, 1
        %s673 = sand.u32 %s91, 1
        %s674 = scalar_lea.sflag [#allocation4], %s673
        %s675 = sand.u32 %s91, 1
        %s676 = scalar_lea.vmem [#allocation3], %s675
        // Predicated region
        $region73: #{la_transformer_test_forward.4} parent=71 // pred_check
          %p677 = pneg %p104
        $region74: #{la_transformer_test_forward.4} parent=71 // pred_check_branch
          %679 = sbr.rel (%p677) target = $region76
        $region75: #{la_transformer_test_forward.4} parent=71 // pred_region
          %680 = dma.done %s674, 16
        $region76: #{la_transformer_test_forward.4} parent=71 // pred_fallthru
          _
        %s681 = sand.u32 %s45, 1
        %s682 = scalar_lea.sflag [#allocation6], %s681
        %s683 = sand.u32 %s117, 1
        %s684 = scalar_lea.vmem [#allocation5], %s683
        // Predicated region
        $region77: #{la_transformer_test_forward.4} parent=71 // pred_check
          %p685 = pneg %p130
        $region78: #{la_transformer_test_forward.4} parent=71 // pred_check_branch
          %687 = sbr.rel (%p685) target = $region80
        $region79: #{la_transformer_test_forward.4} parent=71 // pred_region
          %688 = dma.done %s682, 16
        $region80: #{la_transformer_test_forward.4} parent=71 // pred_fallthru
          _
        %s689 = sand.u32 %s45, 1
        %s690 = scalar_lea.sflag [#allocation6], %s689
        %s691 = sand.u32 %s143, 1
        %s692 = smul.addr %s691, 192
        %s693 = scalar_lea.vmem [#allocation7], %s692
        // Predicated region
        $region81: #{la_transformer_test_forward.4} parent=71 // pred_check
          %p694 = pneg %p156
        $region82: #{la_transformer_test_forward.4} parent=71 // pred_check_branch
          %696 = sbr.rel (%p694) target = $region84
        $region83: #{la_transformer_test_forward.4} parent=71 // pred_region
          %697 = dma.done %s690, 3072
        $region84: #{la_transformer_test_forward.4} parent=71 // pred_fallthru
          _
        %s698 = sand.u32 %s45, 1
        %s699 = scalar_lea.sflag [#allocation9], %s698
        %s700 = sand.u32 %s169, 1
        %s701 = smul.addr %s700, 3
        %s702 = scalar_lea.vmem [#allocation8], %s701
        // Predicated region
        $region85: #{la_transformer_test_forward.4} parent=71 // pred_check
          %p703 = pneg %p182
        $region86: #{la_transformer_test_forward.4} parent=71 // pred_check_branch
          %705 = sbr.rel (%p703) target = $region88
        $region87: #{la_transformer_test_forward.4} parent=71 // pred_region
          %706 = dma.done %s699, 48
        $region88: #{la_transformer_test_forward.4} parent=71 // pred_fallthru
          _
        %s707 = sand.u32 %s45, 1
        %s708 = scalar_lea.sflag [#allocation9], %s707
        %s709 = sand.u32 %s195, 1
        %s710 = smul.addr %s709, 64
        %s711 = scalar_lea.vmem [#allocation10], %s710
        // Predicated region
        $region89: #{la_transformer_test_forward.4} parent=71 // pred_check
          %p712 = pneg %p208
        $region90: #{la_transformer_test_forward.4} parent=71 // pred_check_branch
          %714 = sbr.rel (%p712) target = $region92
        $region91: #{la_transformer_test_forward.4} parent=71 // pred_region
          %715 = dma.done %s708, 1024
        $region92: #{la_transformer_test_forward.4} parent=71 // pred_fallthru
          _
        %s716 = sand.u32 %s45, 1
        %s717 = scalar_lea.sflag [#allocation12], %s716
        %s718 = sand.u32 %s221, 1
        %s719 = scalar_lea.vmem [#allocation11], %s718
        // Predicated region
        $region93: #{la_transformer_test_forward.4} parent=71 // pred_check
          %p720 = pneg %p234
        $region94: #{la_transformer_test_forward.4} parent=71 // pred_check_branch
          %722 = sbr.rel (%p720) target = $region96
        $region95: #{la_transformer_test_forward.4} parent=71 // pred_region
          %723 = dma.done %s717, 16
        $region96: #{la_transformer_test_forward.4} parent=71 // pred_fallthru
          _
        %s724 = sand.u32 %s45, 1
        %s725 = scalar_lea.sflag [#allocation12], %s724
        %s726 = sand.u32 %s247, 1
        %s727 = scalar_lea.vmem [#allocation13], %s726
        // Predicated region
        $region97: #{la_transformer_test_forward.4} parent=71 // pred_check
          %p728 = pneg %p260
        $region98: #{la_transformer_test_forward.4} parent=71 // pred_check_branch
          %730 = sbr.rel (%p728) target = $region100
        $region99: #{la_transformer_test_forward.4} parent=71 // pred_region
          %731 = dma.done %s725, 16
        $region100: #{la_transformer_test_forward.4} parent=71 // pred_fallthru
          _
        %s732 = sand.u32 %s45, 1
        %s733 = scalar_lea.sflag [#allocation15], %s732
        %s734 = sand.u32 %s273, 1
        %s735 = scalar_lea.vmem [#allocation14], %s734
        // Predicated region
        $region101: #{la_transformer_test_forward.4} parent=71 // pred_check
          %p736 = pneg %p286
        $region102: #{la_transformer_test_forward.4} parent=71 // pred_check_branch
          %738 = sbr.rel (%p736) target = $region104
        $region103: #{la_transformer_test_forward.4} parent=71 // pred_region
          %739 = dma.done %s733, 16
        $region104: #{la_transformer_test_forward.4} parent=71 // pred_fallthru
          _
        %s740 = sand.u32 %s45, 1
        %s741 = scalar_lea.sflag [#allocation15], %s740
        %s742 = sand.u32 %s299, 1
        %s743 = smul.addr %s742, 256
        %s744 = scalar_lea.vmem [#allocation16], %s743
        // Predicated region
        $region105: #{la_transformer_test_forward.4} parent=71 // pred_check
          %p745 = pneg %p312
        $region106: #{la_transformer_test_forward.4} parent=71 // pred_check_branch
          %747 = sbr.rel (%p745) target = $region108
        $region107: #{la_transformer_test_forward.4} parent=71 // pred_region
          %748 = dma.done %s741, 4096
        $region108: #{la_transformer_test_forward.4} parent=71 // pred_fallthru
          _
        %s749 = sand.u32 %s45, 1
        %s750 = scalar_lea.sflag [#allocation18], %s749
        %s751 = sand.u32 %s325, 1
        %s752 = smul.addr %s751, 4
        %s753 = scalar_lea.vmem [#allocation17], %s752
        // Predicated region
        $region109: #{la_transformer_test_forward.4} parent=71 // pred_check
          %p754 = pneg %p338
        $region110: #{la_transformer_test_forward.4} parent=71 // pred_check_branch
          %756 = sbr.rel (%p754) target = $region112
        $region111: #{la_transformer_test_forward.4} parent=71 // pred_region
          %757 = dma.done %s750, 64
        $region112: #{la_transformer_test_forward.4} parent=71 // pred_fallthru
          _
        %s758 = sand.u32 %s45, 1
        %s759 = scalar_lea.sflag [#allocation18], %s758
        %s760 = sand.u32 %s351, 1
        %s761 = smul.addr %s760, 256
        %s762 = scalar_lea.vmem [#allocation19], %s761
        // Predicated region
        $region113: #{la_transformer_test_forward.4} parent=71 // pred_check
          %p763 = pneg %p364
        $region114: #{la_transformer_test_forward.4} parent=71 // pred_check_branch
          %765 = sbr.rel (%p763) target = $region116
        $region115: #{la_transformer_test_forward.4} parent=71 // pred_region
          %766 = dma.done %s759, 4096
        $region116: #{la_transformer_test_forward.4} parent=71 // pred_fallthru
          _
        %s767 = sand.u32 %s377, 1
        %s768 = scalar_lea.sflag [#allocation21], %s767
        %s769 = sand.u32 %s377, 1
        %s770 = scalar_lea.vmem [#allocation20], %s769
        // Predicated region
        $region117: #{la_transformer_test_forward.4} parent=71 // pred_check
          %p771 = pneg %p390
        $region118: #{la_transformer_test_forward.4} parent=71 // pred_check_branch
          %773 = sbr.rel (%p771) target = $region120
        $region119: #{la_transformer_test_forward.4} parent=71 // pred_region
          %774 = dma.done %s768, 16
        $region120: #{la_transformer_test_forward.4} parent=71 // pred_fallthru
          _
        %p775 = scmp.lt.s32.totalorder %s49, 1
        %s776 = scalar_select %p775, %s49, 1
        %s777 = smul.addr %s776, 8
        %s778 = scalar_lea.vmem %s0, %s777
        %p779 = pneg %p78
        %p780 = pneg %p75
        %s781 = sand.u32 %s91, 1
        %s782 = scalar_lea.sflag [#allocation4], %s781
        %s783 = sand.u32 %s91, 1
        %s784 = scalar_lea.vmem [#allocation3], %s783
        %p785 = pneg %p104
        %p786 = pneg %p101
        %s787 = sand.u32 %s45, 1
        %s788 = scalar_lea.sflag [#allocation6], %s787
        %s789 = sand.u32 %s117, 1
        %s790 = scalar_lea.vmem [#allocation5], %s789
        %p791 = pneg %p130
        %p792 = pneg %p127
        %s793 = sand.u32 %s45, 1
        %s794 = scalar_lea.sflag [#allocation6], %s793
        %s795 = sand.u32 %s143, 1
        %s796 = smul.addr %s795, 192
        %s797 = scalar_lea.vmem [#allocation7], %s796
        %p798 = pneg %p156
        %p799 = pneg %p153
        %s800 = sand.u32 %s45, 1
        %s801 = scalar_lea.sflag [#allocation9], %s800
        %s802 = sand.u32 %s169, 1
        %s803 = smul.addr %s802, 3
        %s804 = scalar_lea.vmem [#allocation8], %s803
        %p805 = pneg %p182
        %p806 = pneg %p179
        %s807 = sand.u32 %s45, 1
        %s808 = scalar_lea.sflag [#allocation9], %s807
        %s809 = sand.u32 %s195, 1
        %s810 = smul.addr %s809, 64
        %s811 = scalar_lea.vmem [#allocation10], %s810
        %p812 = pneg %p208
        %p813 = pneg %p205
        %s814 = sand.u32 %s45, 1
        %s815 = scalar_lea.sflag [#allocation12], %s814
        %s816 = sand.u32 %s221, 1
        %s817 = scalar_lea.vmem [#allocation11], %s816
        %p818 = pneg %p234
        %p819 = pneg %p231
        %s820 = sand.u32 %s45, 1
        %s821 = scalar_lea.sflag [#allocation12], %s820
        %s822 = sand.u32 %s247, 1
        %s823 = scalar_lea.vmem [#allocation13], %s822
        %p824 = pneg %p260
        %p825 = pneg %p257
        %s826 = sand.u32 %s45, 1
        %s827 = scalar_lea.sflag [#allocation15], %s826
        %s828 = sand.u32 %s273, 1
        %s829 = scalar_lea.vmem [#allocation14], %s828
        %p830 = pneg %p286
        %p831 = pneg %p283
        %s832 = sand.u32 %s45, 1
        %s833 = scalar_lea.sflag [#allocation15], %s832
        %s834 = sand.u32 %s299, 1
        %s835 = smul.addr %s834, 256
        %s836 = scalar_lea.vmem [#allocation16], %s835
        %p837 = pneg %p312
        %p838 = pneg %p309
        %s839 = sand.u32 %s45, 1
        %s840 = scalar_lea.sflag [#allocation18], %s839
        %s841 = sand.u32 %s325, 1
        %s842 = smul.addr %s841, 4
        %s843 = scalar_lea.vmem [#allocation17], %s842
        %p844 = pneg %p338
        %p845 = pneg %p335
        %s846 = sand.u32 %s45, 1
        %s847 = scalar_lea.sflag [#allocation18], %s846
        %s848 = sand.u32 %s351, 1
        %s849 = smul.addr %s848, 256
        %s850 = scalar_lea.vmem [#allocation19], %s849
        %p851 = pneg %p364
        %p852 = pneg %p361
        %s853 = sand.u32 %s377, 1
        %s854 = scalar_lea.sflag [#allocation21], %s853
        %s855 = sand.u32 %s377, 1
        %s856 = scalar_lea.vmem [#allocation20], %s855
        %p857 = pneg %p390
        %p858 = pneg %p387
        %p859 = pneg %p416
        %p860 = pneg %p413
        %p861 = scmp.lt.s32.totalorder %s49, 1
        %s862 = scalar_select %p861, %s49, 1
        %s863 = smul.addr %s862, 8
        %s864 = scalar_lea.vmem %s13, %s863
        %p865 = scmp.lt.s32.totalorder %s49, 1
        %s866 = scalar_select %p865, %s49, 1
        %s867 = smul.addr %s866, 8
        %s868 = scalar_lea.vmem %s0, %s867
        %p869 = scmp.lt.s32.totalorder %s49, 1
        %s870 = scalar_select %p869, %s49, 1
        %s871 = smul.addr %s870, 8
        %s872 = scalar_lea.vmem %s13, %s871
        %p874 = scmp.eq.s32.totalorder %s50, 0
        // Predicated region
        $region121: #{la_transformer_test_forward.4} parent=71 // pred_check
          %p875 = pneg %p874
        $region122: #{la_transformer_test_forward.4} parent=71 // pred_check_branch
          %877 = sbr.rel (%p875) target = $region124
        $region123: #{la_transformer_test_forward.4} parent=71 // pred_region
          %v878 = vld [vmem:[%s868] sm:$0x1f]
          %879 = vst [vmem:[#allocation2] sm:$0x1f] %v878
        $region124: #{la_transformer_test_forward.4} parent=71 // pred_fallthru
          _
        %v880 = vld [vmem:[%s676] sm:$0x1]
        %v881 = vld [vmem:[%s684] sm:$0x1]
        %v882 = vld [vmem:[%s693] sm:$0xff]
        %v883 = vld [vmem:[%s693 + $0x8] sm:$0xf]
        %v884 = vld [vmem:[%s693 + $0xc] sm:$0xff]
        %v885 = vld [vmem:[%s693 + $0x14] sm:$0xf]
        %v886 = vld [vmem:[%s693 + $0x18] sm:$0xff]
        %v887 = vld [vmem:[%s693 + $0x20] sm:$0xf]
        %v888 = vld [vmem:[%s693 + $0x24] sm:$0xff]
        %v889 = vld [vmem:[%s693 + $0x2c] sm:$0xf]
        %v890 = vld [vmem:[%s693 + $0x30] sm:$0xff]
        %v891 = vld [vmem:[%s693 + $0x38] sm:$0xf]
        %v892 = vld [vmem:[%s693 + $0x3c] sm:$0xff]
        %v893 = vld [vmem:[%s693 + $0x44] sm:$0xf]
        %v894 = vld [vmem:[%s693 + $0x48] sm:$0xff]
        %v895 = vld [vmem:[%s693 + $0x50] sm:$0xf]
        %v896 = vld [vmem:[%s693 + $0x54] sm:$0xff]
        %v897 = vld [vmem:[%s693 + $0x5c] sm:$0xf]
        %v898 = vld [vmem:[%s693 + $0x60] sm:$0xff]
        %v899 = vld [vmem:[%s693 + $0x68] sm:$0xf]
        %v900 = vld [vmem:[%s693 + $0x6c] sm:$0xff]
        %v901 = vld [vmem:[%s693 + $0x74] sm:$0xf]
        %v902 = vld [vmem:[%s693 + $0x78] sm:$0xff]
        %v903 = vld [vmem:[%s693 + $0x80] sm:$0xf]
        %v904 = vld [vmem:[%s693 + $0x84] sm:$0xff]
        %v905 = vld [vmem:[%s693 + $0x8c] sm:$0xf]
        %v906 = vld [vmem:[%s693 + $0x90] sm:$0xff]
        %v907 = vld [vmem:[%s693 + $0x98] sm:$0xf]
        %v908 = vld [vmem:[%s693 + $0x9c] sm:$0xff]
        %v909 = vld [vmem:[%s693 + $0xa4] sm:$0xf]
        %v910 = vld [vmem:[%s693 + $0xa8] sm:$0xff]
        %v911 = vld [vmem:[%s693 + $0xb0] sm:$0xf]
        %v912 = vld [vmem:[%s693 + $0xb4] sm:$0xff]
        %v913 = vld [vmem:[%s693 + $0xbc] sm:$0xf]
        %v914 = vld [vmem:[%s702] sm:$0x7]
        %v915 = vld [vmem:[%s711] sm:$0xf]
        %v916 = vld [vmem:[%s711 + $0x4] sm:$0xf]
        %v917 = vld [vmem:[%s711 + $0x8] sm:$0xf]
        %v918 = vld [vmem:[%s711 + $0xc] sm:$0xf]
        %v919 = vld [vmem:[%s711 + $0x10] sm:$0xf]
        %v920 = vld [vmem:[%s711 + $0x14] sm:$0xf]
        %v921 = vld [vmem:[%s711 + $0x18] sm:$0xf]
        %v922 = vld [vmem:[%s711 + $0x1c] sm:$0xf]
        %v923 = vld [vmem:[%s711 + $0x20] sm:$0xf]
        %v924 = vld [vmem:[%s711 + $0x24] sm:$0xf]
        %v925 = vld [vmem:[%s711 + $0x28] sm:$0xf]
        %v926 = vld [vmem:[%s711 + $0x2c] sm:$0xf]
        %v927 = vld [vmem:[%s711 + $0x30] sm:$0xf]
        %v928 = vld [vmem:[%s711 + $0x34] sm:$0xf]
        %v929 = vld [vmem:[%s711 + $0x38] sm:$0xf]
        %v930 = vld [vmem:[%s711 + $0x3c] sm:$0xf]
        %v931 = vld [vmem:[%s719] sm:$0x1]
        %v932 = vld [vmem:[%s727] sm:$0x1]
        %v933 = vld [vmem:[%s735] sm:$0x1]
        %v934 = vld [vmem:[%s744] sm:$0xff]
        %v935 = vld [vmem:[%s744 + $0x8] sm:$0xff]
        %v936 = vld [vmem:[%s744 + $0x10] sm:$0xff]
        %v937 = vld [vmem:[%s744 + $0x18] sm:$0xff]
        %v938 = vld [vmem:[%s744 + $0x20] sm:$0xff]
        %v939 = vld [vmem:[%s744 + $0x28] sm:$0xff]
        %v940 = vld [vmem:[%s744 + $0x30] sm:$0xff]
        %v941 = vld [vmem:[%s744 + $0x38] sm:$0xff]
        %v942 = vld [vmem:[%s744 + $0x40] sm:$0xff]
        %v943 = vld [vmem:[%s744 + $0x48] sm:$0xff]
        %v944 = vld [vmem:[%s744 + $0x50] sm:$0xff]
        %v945 = vld [vmem:[%s744 + $0x58] sm:$0xff]
        %v946 = vld [vmem:[%s744 + $0x60] sm:$0xff]
        %v947 = vld [vmem:[%s744 + $0x68] sm:$0xff]
        %v948 = vld [vmem:[%s744 + $0x70] sm:$0xff]
        %v949 = vld [vmem:[%s744 + $0x78] sm:$0xff]
        %v950 = vld [vmem:[%s744 + $0x80] sm:$0xff]
        %v951 = vld [vmem:[%s744 + $0x88] sm:$0xff]
        %v952 = vld [vmem:[%s744 + $0x90] sm:$0xff]
        %v953 = vld [vmem:[%s744 + $0x98] sm:$0xff]
        %v954 = vld [vmem:[%s744 + $0xa0] sm:$0xff]
        %v955 = vld [vmem:[%s744 + $0xa8] sm:$0xff]
        %v956 = vld [vmem:[%s744 + $0xb0] sm:$0xff]
        %v957 = vld [vmem:[%s744 + $0xb8] sm:$0xff]
        %v958 = vld [vmem:[%s744 + $0xc0] sm:$0xff]
        %v959 = vld [vmem:[%s744 + $0xc8] sm:$0xff]
        %v960 = vld [vmem:[%s744 + $0xd0] sm:$0xff]
        %v961 = vld [vmem:[%s744 + $0xd8] sm:$0xff]
        %v962 = vld [vmem:[%s744 + $0xe0] sm:$0xff]
        %v963 = vld [vmem:[%s744 + $0xe8] sm:$0xff]
        %v964 = vld [vmem:[%s744 + $0xf0] sm:$0xff]
        %v965 = vld [vmem:[%s744 + $0xf8] sm:$0xff]
        %v966 = vld [vmem:[%s753] sm:$0xf]
        %v967 = vld [vmem:[%s762] sm:$0xf]
        %v968 = vld [vmem:[%s762 + $0x4] sm:$0xf]
        %v969 = vld [vmem:[%s762 + $0x8] sm:$0xf]
        %v970 = vld [vmem:[%s762 + $0xc] sm:$0xf]
        %v971 = vld [vmem:[%s762 + $0x10] sm:$0xf]
        %v972 = vld [vmem:[%s762 + $0x14] sm:$0xf]
        %v973 = vld [vmem:[%s762 + $0x18] sm:$0xf]
        %v974 = vld [vmem:[%s762 + $0x1c] sm:$0xf]
        %v975 = vld [vmem:[%s762 + $0x20] sm:$0xf]
        %v976 = vld [vmem:[%s762 + $0x24] sm:$0xf]
        %v977 = vld [vmem:[%s762 + $0x28] sm:$0xf]
        %v978 = vld [vmem:[%s762 + $0x2c] sm:$0xf]
        %v979 = vld [vmem:[%s762 + $0x30] sm:$0xf]
        %v980 = vld [vmem:[%s762 + $0x34] sm:$0xf]
        %v981 = vld [vmem:[%s762 + $0x38] sm:$0xf]
        %v982 = vld [vmem:[%s762 + $0x3c] sm:$0xf]
        %v983 = vld [vmem:[%s762 + $0x40] sm:$0xf]
        %v984 = vld [vmem:[%s762 + $0x44] sm:$0xf]
        %v985 = vld [vmem:[%s762 + $0x48] sm:$0xf]
        %v986 = vld [vmem:[%s762 + $0x4c] sm:$0xf]
        %v987 = vld [vmem:[%s762 + $0x50] sm:$0xf]
        %v988 = vld [vmem:[%s762 + $0x54] sm:$0xf]
        %v989 = vld [vmem:[%s762 + $0x58] sm:$0xf]
        %v990 = vld [vmem:[%s762 + $0x5c] sm:$0xf]
        %v991 = vld [vmem:[%s762 + $0x60] sm:$0xf]
        %v992 = vld [vmem:[%s762 + $0x64] sm:$0xf]
        %v993 = vld [vmem:[%s762 + $0x68] sm:$0xf]
        %v994 = vld [vmem:[%s762 + $0x6c] sm:$0xf]
        %v995 = vld [vmem:[%s762 + $0x70] sm:$0xf]
        %v996 = vld [vmem:[%s762 + $0x74] sm:$0xf]
        %v997 = vld [vmem:[%s762 + $0x78] sm:$0xf]
        %v998 = vld [vmem:[%s762 + $0x7c] sm:$0xf]
        %v999 = vld [vmem:[%s762 + $0x80] sm:$0xf]
        %v1000 = vld [vmem:[%s762 + $0x84] sm:$0xf]
        %v1001 = vld [vmem:[%s762 + $0x88] sm:$0xf]
        %v1002 = vld [vmem:[%s762 + $0x8c] sm:$0xf]
        %v1003 = vld [vmem:[%s762 + $0x90] sm:$0xf]
        %v1004 = vld [vmem:[%s762 + $0x94] sm:$0xf]
        %v1005 = vld [vmem:[%s762 + $0x98] sm:$0xf]
        %v1006 = vld [vmem:[%s762 + $0x9c] sm:$0xf]
        %v1007 = vld [vmem:[%s762 + $0xa0] sm:$0xf]
        %v1008 = vld [vmem:[%s762 + $0xa4] sm:$0xf]
        %v1009 = vld [vmem:[%s762 + $0xa8] sm:$0xf]
        %v1010 = vld [vmem:[%s762 + $0xac] sm:$0xf]
        %v1011 = vld [vmem:[%s762 + $0xb0] sm:$0xf]
        %v1012 = vld [vmem:[%s762 + $0xb4] sm:$0xf]
        %v1013 = vld [vmem:[%s762 + $0xb8] sm:$0xf]
        %v1014 = vld [vmem:[%s762 + $0xbc] sm:$0xf]
        %v1015 = vld [vmem:[%s762 + $0xc0] sm:$0xf]
        %v1016 = vld [vmem:[%s762 + $0xc4] sm:$0xf]
        %v1017 = vld [vmem:[%s762 + $0xc8] sm:$0xf]
        %v1018 = vld [vmem:[%s762 + $0xcc] sm:$0xf]
        %v1019 = vld [vmem:[%s762 + $0xd0] sm:$0xf]
        %v1020 = vld [vmem:[%s762 + $0xd4] sm:$0xf]
        %v1021 = vld [vmem:[%s762 + $0xd8] sm:$0xf]
        %v1022 = vld [vmem:[%s762 + $0xdc] sm:$0xf]
        %v1023 = vld [vmem:[%s762 + $0xe0] sm:$0xf]
        %v1024 = vld [vmem:[%s762 + $0xe4] sm:$0xf]
        %v1025 = vld [vmem:[%s762 + $0xe8] sm:$0xf]
        %v1026 = vld [vmem:[%s762 + $0xec] sm:$0xf]
        %v1027 = vld [vmem:[%s762 + $0xf0] sm:$0xf]
        %v1028 = vld [vmem:[%s762 + $0xf4] sm:$0xf]
        %v1029 = vld [vmem:[%s762 + $0xf8] sm:$0xf]
        %v1030 = vld [vmem:[%s762 + $0xfc] sm:$0xf]
        %v1031 = vld [vmem:[%s770] sm:$0x1]
        %v1032 = vld [vmem:[#allocation2] sm:$0x1f]
        %vm1033 = vcmask 1044480
        %v1034 = vsel %vm1033, %v1032, 0.0
        %1035 = vadd.xlane.f32.xlu0 %v1034
        %v1036 = vpop.xlane.xlu0 %1035
        %v1037 = vrcp.pop 128.0
        %v1038 = vmul.f32 %v1036, %v1037
        %v1039 = vsub.f32 %v1032, %v1038
        %v1040 = vmul.f32 %v1039, %v1039
        %v1041 = vsel %vm1033, %v1040, 0.0
        %1042 = vadd.xlane.f32.xlu0 %v1041
        %v1043 = vpop.xlane.xlu0 %1042
        %v1044 = vmul.f32 %v1043, %v1037
        %v1045 = vadd.f32 %v1044, 1e-06
        %v1046 = vrsqrt.pop %v1045
        %v1047 = vmul.f32 %v1039, %v1046
        %v1049 = vlaneseq
        %v1050 = vshrl.u32 %v1049, 7
        %v1051 = vsub.s32 0, %v1050
        %v1052 = vrot.slane %v880, %v1051
        %v1054 = vmul.f32 %v1047, %v1052
        %v1056 = vlaneseq
        %v1057 = vshrl.u32 %v1056, 7
        %v1058 = vsub.s32 0, %v1057
        %v1059 = vrot.slane %v881, %v1058
        %v1061 = vadd.f32 %v1054, %v1059
        %v1062 = vpack.c.bf16 %v1061, %v1061
        %v1064 = vlaneseq
        %v1065 = vshrl.u32 %v1064, 7
        %v1066 = vsub.s32 0, %v1065
        %v1067 = vrot.slane %v914, %v1066
        %v1068 = vlaneseq
        %v1069 = vshrl.u32 %v1068, 7
        %v1070 = vsub.s32 1, %v1069
        %v1071 = vrot.slane %v914, %v1070
        %v1072 = vlaneseq
        %v1073 = vshrl.u32 %v1072, 7
        %v1074 = vsub.s32 2, %v1073
        %v1075 = vrot.slane %v914, %v1074
        %v1111 = vunpack.c.l.b16 %v882
        %v1112 = vunpack.c.h.b16 %v882
        %v1113 = vunpack.c.l.b16 %v883
        %v1114 = vunpack.c.l.b16 %v884
        %v1115 = vunpack.c.h.b16 %v884
        %v1116 = vunpack.c.l.b16 %v885
        %v1117 = vunpack.c.l.b16 %v886
        %v1118 = vunpack.c.h.b16 %v886
        %v1119 = vunpack.c.l.b16 %v887
        %v1120 = vunpack.c.l.b16 %v888
        %v1121 = vunpack.c.h.b16 %v888
        %v1122 = vunpack.c.l.b16 %v889
        %v1123 = vunpack.c.l.b16 %v890
        %v1124 = vunpack.c.h.b16 %v890
        %v1125 = vunpack.c.l.b16 %v891
        %v1126 = vunpack.c.l.b16 %v892
        %v1127 = vunpack.c.h.b16 %v892
        %v1128 = vunpack.c.l.b16 %v893
        %v1129 = vunpack.c.l.b16 %v894
        %v1130 = vunpack.c.h.b16 %v894
        %v1131 = vunpack.c.l.b16 %v895
        %v1132 = vunpack.c.l.b16 %v896
        %v1133 = vunpack.c.h.b16 %v896
        %v1134 = vunpack.c.l.b16 %v897
        %v1135 = vunpack.c.l.b16 %v898
        %v1136 = vunpack.c.h.b16 %v898
        %v1137 = vunpack.c.l.b16 %v899
        %v1138 = vunpack.c.l.b16 %v900
        %v1139 = vunpack.c.h.b16 %v900
        %v1140 = vunpack.c.l.b16 %v901
        %v1141 = vunpack.c.l.b16 %v902
        %v1142 = vunpack.c.h.b16 %v902
        %v1143 = vunpack.c.l.b16 %v903
        %v1144 = vunpack.c.l.b16 %v904
        %v1145 = vunpack.c.h.b16 %v904
        %v1146 = vunpack.c.l.b16 %v905
        %v1147 = vunpack.c.l.b16 %v906
        %v1148 = vunpack.c.h.b16 %v906
        %v1149 = vunpack.c.l.b16 %v907
        %v1150 = vunpack.c.l.b16 %v908
        %v1151 = vunpack.c.h.b16 %v908
        %v1152 = vunpack.c.l.b16 %v909
        %v1153 = vunpack.c.l.b16 %v910
        %v1154 = vunpack.c.h.b16 %v910
        %v1155 = vunpack.c.l.b16 %v911
        %v1156 = vunpack.c.l.b16 %v912
        %v1157 = vunpack.c.h.b16 %v912
        %v1158 = vunpack.c.l.b16 %v913
        %v1159 = vpack.c.b16 %v1114, %v1111
        %v1160 = vpack.c.b16 %v1115, %v1112
        %v1161 = vpack.c.b16 %v1116, %v1113
        %v1162 = vpack.c.b16 %v1120, %v1117
        %v1163 = vpack.c.b16 %v1121, %v1118
        %v1164 = vpack.c.b16 %v1122, %v1119
        %v1165 = vpack.c.b16 %v1126, %v1123
        %v1166 = vpack.c.b16 %v1127, %v1124
        %v1167 = vpack.c.b16 %v1128, %v1125
        %v1168 = vpack.c.b16 %v1132, %v1129
        %v1169 = vpack.c.b16 %v1133, %v1130
        %v1170 = vpack.c.b16 %v1134, %v1131
        %v1171 = vpack.c.b16 %v1138, %v1135
        %v1172 = vpack.c.b16 %v1139, %v1136
        %v1173 = vpack.c.b16 %v1140, %v1137
        %v1174 = vpack.c.b16 %v1144, %v1141
        %v1175 = vpack.c.b16 %v1145, %v1142
        %v1176 = vpack.c.b16 %v1146, %v1143
        %v1177 = vpack.c.b16 %v1150, %v1147
        %v1178 = vpack.c.b16 %v1151, %v1148
        %v1179 = vpack.c.b16 %v1152, %v1149
        %v1180 = vpack.c.b16 %v1156, %v1153
        %v1181 = vpack.c.b16 %v1157, %v1154
        %v1182 = vpack.c.b16 %v1158, %v1155
        %1207 = vmatprep.subr.bf16.mxu0 %v1160
        %1208 = vmatpush1.bf16.msra.mxu0 %v1159
        %1209 = vmatprep.subr.bf16.mxu0 %v1163
        %1210 = vmatpush1.bf16.msra.mxu0 %v1162
        %1211 = vmatprep.subr.bf16.mxu0 %v1166
        %1212 = vmatpush1.bf16.msra.mxu0 %v1165
        %1213 = vmatprep.subr.bf16.mxu0 %v1169
        %1214 = vmatpush1.bf16.msra.mxu0 %v1168
        %1215 = vmatprep.subr.bf16.mxu0 %v1172
        %1216 = vmatpush1.bf16.msra.mxu0 %v1171
        %1217 = vmatprep.subr.bf16.mxu0 %v1175
        %1218 = vmatpush1.bf16.msra.mxu0 %v1174
        %1219 = vmatprep.subr.bf16.mxu0 %v1178
        %1220 = vmatpush1.bf16.msra.mxu0 %v1177
        %1221 = vmatprep.subr.bf16.mxu0 %v1181
        %1222 = vmatpush1.bf16.msra.mxu0 %v1180
        %1223 = vmatprep.subr.bf16.mxu0 0
        %1224 = vmatpush1.bf16.msra.mxu0 0
        %1225 = vmatprep.subr.bf16.mxu0 0
        %1226 = vmatpush1.bf16.msra.mxu0 0
        %1227 = vmatprep.subr.bf16.mxu0 0
        %1228 = vmatpush1.bf16.msra.mxu0 0
        %1229 = vmatprep.subr.bf16.mxu0 0
        %1230 = vmatpush1.bf16.msra.mxu0 0
        %1231 = vmatprep.subr.bf16.mxu0 0
        %1232 = vmatpush1.bf16.msra.mxu0 0
        %1233 = vmatprep.subr.bf16.mxu0 0
        %1234 = vmatpush1.bf16.msra.mxu0 0
        %1235 = vmatprep.subr.bf16.mxu0 0
        %1236 = vmatpush1.bf16.msra.mxu0 0
        %1237 = vmatprep.subr.bf16.mxu0 0
        %1238 = vmatpush1.bf16.msra.mxu0 0
        %1239 = vmatprep.mubr.bf16.mxu0 0
        %1240 = vmatmul.mubr.bf16.gmra.mrb[0].mxu0 %v1062
        %v1241 = vpop.f32.mrb[0].mxu0
        %v1242 = vadd.f32 %v1067, %v1241
        %v1243 = vpop.f32.mrb[0].mxu0
        %v1244 = vadd.f32 %v1071, %v1243
        %v1245 = vpop.f32.mrb[0].mxu0
        %v1246 = vpop.f32.mrb[0].mxu0
        %1247 = vdwg.mxu0
        %1248 = vmatprep.subr.bf16.mxu0 0
        %1249 = vmatpush1.bf16.msra.mxu0 %v1161
        %1250 = vmatprep.subr.bf16.mxu0 0
        %1251 = vmatpush1.bf16.msra.mxu0 %v1164
        %1252 = vmatprep.subr.bf16.mxu0 0
        %1253 = vmatpush1.bf16.msra.mxu0 %v1167
        %1254 = vmatprep.subr.bf16.mxu0 0
        %1255 = vmatpush1.bf16.msra.mxu0 %v1170
        %1256 = vmatprep.subr.bf16.mxu0 0
        %1257 = vmatpush1.bf16.msra.mxu0 %v1173
        %1258 = vmatprep.subr.bf16.mxu0 0
        %1259 = vmatpush1.bf16.msra.mxu0 %v1176
        %1260 = vmatprep.subr.bf16.mxu0 0
        %1261 = vmatpush1.bf16.msra.mxu0 %v1179
        %1262 = vmatprep.subr.bf16.mxu0 0
        %1263 = vmatpush1.bf16.msra.mxu0 %v1182
        %1264 = vmatprep.subr.bf16.mxu0 0
        %1265 = vmatpush1.bf16.msra.mxu0 0
        %1266 = vmatprep.subr.bf16.mxu0 0
        %1267 = vmatpush1.bf16.msra.mxu0 0
        %1268 = vmatprep.subr.bf16.mxu0 0
        %1269 = vmatpush1.bf16.msra.mxu0 0
        %1270 = vmatprep.subr.bf16.mxu0 0
        %1271 = vmatpush1.bf16.msra.mxu0 0
        %1272 = vmatprep.subr.bf16.mxu0 0
        %1273 = vmatpush1.bf16.msra.mxu0 0
        %1274 = vmatprep.subr.bf16.mxu0 0
        %1275 = vmatpush1.bf16.msra.mxu0 0
        %1276 = vmatprep.subr.bf16.mxu0 0
        %1277 = vmatpush1.bf16.msra.mxu0 0
        %1278 = vmatprep.subr.bf16.mxu0 0
        %1279 = vmatpush1.bf16.msra.mxu0 0
        %1280 = vmatprep.mubr.bf16.mxu0 0
        %1281 = vmatmul.mubr.bf16.gmra.mrb[0].mxu0 %v1062
        %v1282 = vpop.f32.mrb[0].mxu0
        %v1283 = vadd.f32 %v1075, %v1282
        %v1284 = vpop.f32.mrb[0].mxu0
        %v1285 = vpop.f32.mrb[0].mxu0
        %v1286 = vpop.f32.mrb[0].mxu0
        %1287 = vdwg.mxu0
        %v1288 = vpack.c.bf16 %v1242, %v1242
        %v1289 = vpack.c.bf16 %v1244, %v1244
        %v1290 = vpack.c.bf16 %v1283, %v1283
        %vm1291 = vcmask 523264
        %v1293 = vsel %vm1291, %v1288, 0
        %v1296 = vsel %vm1291, %v1289, 0
        %1298 = vmatprep.subr.bf16.mxu0 0
        %1299 = vmatpush1.bf16.xpose.msra.mxu0 %v1296
        %1300 = vmatprep.subr.bf16.mxu0 0
        %1301 = vmatpush1.bf16.xpose.msra.mxu0 0
        %1302 = vmatprep.subr.bf16.mxu0 0
        %1303 = vmatpush1.bf16.xpose.msra.mxu0 0
        %1304 = vmatprep.subr.bf16.mxu0 0
        %1305 = vmatpush1.bf16.xpose.msra.mxu0 0
        %1306 = vmatprep.subr.bf16.mxu0 0
        %1307 = vmatpush1.bf16.xpose.msra.mxu0 0
        %1308 = vmatprep.subr.bf16.mxu0 0
        %1309 = vmatpush1.bf16.xpose.msra.mxu0 0
        %1310 = vmatprep.subr.bf16.mxu0 0
        %1311 = vmatpush1.bf16.xpose.msra.mxu0 0
        %1312 = vmatprep.subr.bf16.mxu0 0
        %1313 = vmatpush1.bf16.xpose.msra.mxu0 0
        %1314 = vmatprep.subr.bf16.mxu0 0
        %1315 = vmatpush1.bf16.xpose.msra.mxu0 0
        %1316 = vmatprep.subr.bf16.mxu0 0
        %1317 = vmatpush1.bf16.xpose.msra.mxu0 0
        %1318 = vmatprep.subr.bf16.mxu0 0
        %1319 = vmatpush1.bf16.xpose.msra.mxu0 0
        %1320 = vmatprep.subr.bf16.mxu0 0
        %1321 = vmatpush1.bf16.xpose.msra.mxu0 0
        %1322 = vmatprep.subr.bf16.mxu0 0
        %1323 = vmatpush1.bf16.xpose.msra.mxu0 0
        %1324 = vmatprep.subr.bf16.mxu0 0
        %1325 = vmatpush1.bf16.xpose.msra.mxu0 0
        %1326 = vmatprep.subr.bf16.mxu0 0
        %1327 = vmatpush1.bf16.xpose.msra.mxu0 0
        %1328 = vmatprep.subr.bf16.mxu0 0
        %1329 = vmatpush1.bf16.xpose.msra.mxu0 0
        %1330 = vmatprep.mubr.bf16.mxu0 0
        %1331 = vmatmul.mubr.bf16.gmra.mrb[0].mxu0 %v1293
        %v1332 = vpop.f32.mrb[0].mxu0
        %v1333 = vadd.f32 0.0, %v1332
        %v1334 = vpop.f32.mrb[0].mxu0
        %v1335 = vpop.f32.mrb[0].mxu0
        %v1336 = vpop.f32.mrb[0].mxu0
        %1337 = vdwg.mxu0
        %v1338 = vmul.f32 %v1333, 0.125
        %vm1339 = vcmask 36864
        %v1340 = vsel %vm1339, %v1338, -inf
        %1341 = vmax.xlane.f32.xlu0 %v1340
        %v1342 = vpop.xlane.xlu0 %1341
        %v1343 = vsub.f32 %v1338, %v1342
        %v1344 = vmul.f32 %v1343, 1.442695
        %v1345 = vpow.pop %v1344
        %v1346 = vsel %vm1339, %v1345, 0.0
        %1347 = vadd.xlane.f32.xlu0 %v1346
        %v1348 = vpop.xlane.xlu0 %1347
        %v1349 = vrcp.pop %v1348
        %v1350 = vmul.f32 %v1345, %v1349
        %v1351 = vpack.c.bf16 %v1350, %v1350
        %vm1352 = vcmask 39936
        %v1354 = vsel %vm1352, %v1351, 0
        %vm1356 = vcmask 1041408
        %vm1357 = vcmask 1042432
        %v1358 = vsel %vm1356, 4294967295, 65535
        %v1359 = vsel %vm1357, %v1358, 0
        %v1361 = vand.u32 %v1290, %v1359
        %1363 = vmatprep.subr.bf16.mxu0 0
        %1364 = vmatpush1.bf16.msra.mxu0 %v1361
        %1365 = vmatprep.subr.bf16.mxu0 0
        %1366 = vmatpush1.bf16.msra.mxu0 0
        %1367 = vmatprep.subr.bf16.mxu0 0
        %1368 = vmatpush1.bf16.msra.mxu0 0
        %1369 = vmatprep.subr.bf16.mxu0 0
        %1370 = vmatpush1.bf16.msra.mxu0 0
        %1371 = vmatprep.subr.bf16.mxu0 0
        %1372 = vmatpush1.bf16.msra.mxu0 0
        %1373 = vmatprep.subr.bf16.mxu0 0
        %1374 = vmatpush1.bf16.msra.mxu0 0
        %1375 = vmatprep.subr.bf16.mxu0 0
        %1376 = vmatpush1.bf16.msra.mxu0 0
        %1377 = vmatprep.subr.bf16.mxu0 0
        %1378 = vmatpush1.bf16.msra.mxu0 0
        %1379 = vmatprep.subr.bf16.mxu0 0
        %1380 = vmatpush1.bf16.msra.mxu0 0
        %1381 = vmatprep.subr.bf16.mxu0 0
        %1382 = vmatpush1.bf16.msra.mxu0 0
        %1383 = vmatprep.subr.bf16.mxu0 0
        %1384 = vmatpush1.bf16.msra.mxu0 0
        %1385 = vmatprep.subr.bf16.mxu0 0
        %1386 = vmatpush1.bf16.msra.mxu0 0
        %1387 = vmatprep.subr.bf16.mxu0 0
        %1388 = vmatpush1.bf16.msra.mxu0 0
        %1389 = vmatprep.subr.bf16.mxu0 0
        %1390 = vmatpush1.bf16.msra.mxu0 0
        %1391 = vmatprep.subr.bf16.mxu0 0
        %1392 = vmatpush1.bf16.msra.mxu0 0
        %1393 = vmatprep.subr.bf16.mxu0 0
        %1394 = vmatpush1.bf16.msra.mxu0 0
        %1395 = vmatprep.mubr.bf16.mxu0 0
        %1396 = vmatmul.mubr.bf16.gmra.mrb[0].mxu0 %v1354
        %v1397 = vpop.f32.mrb[0].mxu0
        %v1398 = vadd.f32 0.0, %v1397
        %v1399 = vpop.f32.mrb[0].mxu0
        %v1400 = vpop.f32.mrb[0].mxu0
        %v1401 = vpop.f32.mrb[0].mxu0
        %1402 = vdwg.mxu0
        %1404 = vrot.lane.b32.xlu0 %v1288, 64
        %v1405 = vpop.permute.xlu0 %1404
        %1407 = vrot.lane.b32.xlu0 %v1289, 64
        %v1408 = vpop.permute.xlu0 %1407
        %v1410 = vsel %vm1291, %v1405, 0
        %v1413 = vsel %vm1291, %v1408, 0
        %1415 = vmatprep.subr.bf16.mxu0 0
        %1416 = vmatpush1.bf16.xpose.msra.mxu0 %v1413
        %1417 = vmatprep.subr.bf16.mxu0 0
        %1418 = vmatpush1.bf16.xpose.msra.mxu0 0
        %1419 = vmatprep.subr.bf16.mxu0 0
        %1420 = vmatpush1.bf16.xpose.msra.mxu0 0
        %1421 = vmatprep.subr.bf16.mxu0 0
        %1422 = vmatpush1.bf16.xpose.msra.mxu0 0
        %1423 = vmatprep.subr.bf16.mxu0 0
        %1424 = vmatpush1.bf16.xpose.msra.mxu0 0
        %1425 = vmatprep.subr.bf16.mxu0 0
        %1426 = vmatpush1.bf16.xpose.msra.mxu0 0
        %1427 = vmatprep.subr.bf16.mxu0 0
        %1428 = vmatpush1.bf16.xpose.msra.mxu0 0
        %1429 = vmatprep.subr.bf16.mxu0 0
        %1430 = vmatpush1.bf16.xpose.msra.mxu0 0
        %1431 = vmatprep.subr.bf16.mxu0 0
        %1432 = vmatpush1.bf16.xpose.msra.mxu0 0
        %1433 = vmatprep.subr.bf16.mxu0 0
        %1434 = vmatpush1.bf16.xpose.msra.mxu0 0
        %1435 = vmatprep.subr.bf16.mxu0 0
        %1436 = vmatpush1.bf16.xpose.msra.mxu0 0
        %1437 = vmatprep.subr.bf16.mxu0 0
        %1438 = vmatpush1.bf16.xpose.msra.mxu0 0
        %1439 = vmatprep.subr.bf16.mxu0 0
        %1440 = vmatpush1.bf16.xpose.msra.mxu0 0
        %1441 = vmatprep.subr.bf16.mxu0 0
        %1442 = vmatpush1.bf16.xpose.msra.mxu0 0
        %1443 = vmatprep.subr.bf16.mxu0 0
        %1444 = vmatpush1.bf16.xpose.msra.mxu0 0
        %1445 = vmatprep.subr.bf16.mxu0 0
        %1446 = vmatpush1.bf16.xpose.msra.mxu0 0
        %1447 = vmatprep.mubr.bf16.mxu0 0
        %1448 = vmatmul.mubr.bf16.gmra.mrb[0].mxu0 %v1410
        %v1449 = vpop.f32.mrb[0].mxu0
        %v1450 = vadd.f32 0.0, %v1449
        %v1451 = vpop.f32.mrb[0].mxu0
        %v1452 = vpop.f32.mrb[0].mxu0
        %v1453 = vpop.f32.mrb[0].mxu0
        %1454 = vdwg.mxu0
        %v1455 = vmul.f32 %v1450, 0.125
        %v1456 = vsel %vm1339, %v1455, -inf
        %1457 = vmax.xlane.f32.xlu0 %v1456
        %v1458 = vpop.xlane.xlu0 %1457
        %v1459 = vsub.f32 %v1455, %v1458
        %v1460 = vmul.f32 %v1459, 1.442695
        %v1461 = vpow.pop %v1460
        %v1462 = vsel %vm1339, %v1461, 0.0
        %1463 = vadd.xlane.f32.xlu0 %v1462
        %v1464 = vpop.xlane.xlu0 %1463
        %v1465 = vrcp.pop %v1464
        %v1466 = vmul.f32 %v1461, %v1465
        %v1467 = vpack.c.bf16 %v1466, %v1466
        %1469 = vrot.lane.b32.xlu0 %v1290, 64
        %v1470 = vpop.permute.xlu0 %1469
        %v1472 = vsel %vm1352, %v1467, 0
        %v1475 = vand.u32 %v1470, %v1359
        %1477 = vmatprep.subr.bf16.mxu0 0
        %1478 = vmatpush1.bf16.msra.mxu0 %v1475
        %1479 = vmatprep.subr.bf16.mxu0 0
        %1480 = vmatpush1.bf16.msra.mxu0 0
        %1481 = vmatprep.subr.bf16.mxu0 0
        %1482 = vmatpush1.bf16.msra.mxu0 0
        %1483 = vmatprep.subr.bf16.mxu0 0
        %1484 = vmatpush1.bf16.msra.mxu0 0
        %1485 = vmatprep.subr.bf16.mxu0 0
        %1486 = vmatpush1.bf16.msra.mxu0 0
        %1487 = vmatprep.subr.bf16.mxu0 0
        %1488 = vmatpush1.bf16.msra.mxu0 0
        %1489 = vmatprep.subr.bf16.mxu0 0
        %1490 = vmatpush1.bf16.msra.mxu0 0
        %1491 = vmatprep.subr.bf16.mxu0 0
        %1492 = vmatpush1.bf16.msra.mxu0 0
        %1493 = vmatprep.subr.bf16.mxu0 0
        %1494 = vmatpush1.bf16.msra.mxu0 0
        %1495 = vmatprep.subr.bf16.mxu0 0
        %1496 = vmatpush1.bf16.msra.mxu0 0
        %1497 = vmatprep.subr.bf16.mxu0 0
        %1498 = vmatpush1.bf16.msra.mxu0 0
        %1499 = vmatprep.subr.bf16.mxu0 0
        %1500 = vmatpush1.bf16.msra.mxu0 0
        %1501 = vmatprep.subr.bf16.mxu0 0
        %1502 = vmatpush1.bf16.msra.mxu0 0
        %1503 = vmatprep.subr.bf16.mxu0 0
        %1504 = vmatpush1.bf16.msra.mxu0 0
        %1505 = vmatprep.subr.bf16.mxu0 0
        %1506 = vmatpush1.bf16.msra.mxu0 0
        %1507 = vmatprep.subr.bf16.mxu0 0
        %1508 = vmatpush1.bf16.msra.mxu0 0
        %1509 = vmatprep.mubr.bf16.mxu0 0
        %1510 = vmatmul.mubr.bf16.gmra.mrb[0].mxu0 %v1472
        %v1511 = vpop.f32.mrb[0].mxu0
        %v1512 = vadd.f32 0.0, %v1511
        %v1513 = vpop.f32.mrb[0].mxu0
        %v1514 = vpop.f32.mrb[0].mxu0
        %v1515 = vpop.f32.mrb[0].mxu0
        %1516 = vdwg.mxu0
        %1518 = vrot.lane.b32.xlu0 %v1512, 64
        %v1519 = vpop.permute.xlu0 %1518
        %v1521 = vsel %vm1291, %v1398, %v1519
        %v1522 = vpack.c.bf16 %v1521, %v1521
        %v1524 = vlaneseq
        %v1525 = vshrl.u32 %v1524, 7
        %v1526 = vsub.s32 0, %v1525
        %v1527 = vrot.slane %v931, %v1526
        %v1545 = vunpack.c.l.b16 %v915
        %v1546 = vunpack.c.l.b16 %v916
        %v1547 = vunpack.c.l.b16 %v917
        %v1548 = vunpack.c.l.b16 %v918
        %v1549 = vunpack.c.l.b16 %v919
        %v1550 = vunpack.c.l.b16 %v920
        %v1551 = vunpack.c.l.b16 %v921
        %v1552 = vunpack.c.l.b16 %v922
        %v1553 = vunpack.c.l.b16 %v923
        %v1554 = vunpack.c.l.b16 %v924
        %v1555 = vunpack.c.l.b16 %v925
        %v1556 = vunpack.c.l.b16 %v926
        %v1557 = vunpack.c.l.b16 %v927
        %v1558 = vunpack.c.l.b16 %v928
        %v1559 = vunpack.c.l.b16 %v929
        %v1560 = vunpack.c.l.b16 %v930
        %v1561 = vpack.c.b16 %v1546, %v1545
        %v1562 = vpack.c.b16 %v1548, %v1547
        %v1563 = vpack.c.b16 %v1550, %v1549
        %v1564 = vpack.c.b16 %v1552, %v1551
        %v1565 = vpack.c.b16 %v1554, %v1553
        %v1566 = vpack.c.b16 %v1556, %v1555
        %v1567 = vpack.c.b16 %v1558, %v1557
        %v1568 = vpack.c.b16 %v1560, %v1559
        %1577 = vmatprep.subr.bf16.mxu0 0
        %1578 = vmatpush1.bf16.msra.mxu0 %v1561
        %1579 = vmatprep.subr.bf16.mxu0 0
        %1580 = vmatpush1.bf16.msra.mxu0 %v1562
        %1581 = vmatprep.subr.bf16.mxu0 0
        %1582 = vmatpush1.bf16.msra.mxu0 %v1563
        %1583 = vmatprep.subr.bf16.mxu0 0
        %1584 = vmatpush1.bf16.msra.mxu0 %v1564
        %1585 = vmatprep.subr.bf16.mxu0 0
        %1586 = vmatpush1.bf16.msra.mxu0 %v1565
        %1587 = vmatprep.subr.bf16.mxu0 0
        %1588 = vmatpush1.bf16.msra.mxu0 %v1566
        %1589 = vmatprep.subr.bf16.mxu0 0
        %1590 = vmatpush1.bf16.msra.mxu0 %v1567
        %1591 = vmatprep.subr.bf16.mxu0 0
        %1592 = vmatpush1.bf16.msra.mxu0 %v1568
        %1593 = vmatprep.subr.bf16.mxu0 0
        %1594 = vmatpush1.bf16.msra.mxu0 0
        %1595 = vmatprep.subr.bf16.mxu0 0
        %1596 = vmatpush1.bf16.msra.mxu0 0
        %1597 = vmatprep.subr.bf16.mxu0 0
        %1598 = vmatpush1.bf16.msra.mxu0 0
        %1599 = vmatprep.subr.bf16.mxu0 0
        %1600 = vmatpush1.bf16.msra.mxu0 0
        %1601 = vmatprep.subr.bf16.mxu0 0
        %1602 = vmatpush1.bf16.msra.mxu0 0
        %1603 = vmatprep.subr.bf16.mxu0 0
        %1604 = vmatpush1.bf16.msra.mxu0 0
        %1605 = vmatprep.subr.bf16.mxu0 0
        %1606 = vmatpush1.bf16.msra.mxu0 0
        %1607 = vmatprep.subr.bf16.mxu0 0
        %1608 = vmatpush1.bf16.msra.mxu0 0
        %1609 = vmatprep.mubr.bf16.mxu0 0
        %1610 = vmatmul.mubr.bf16.gmra.mrb[0].mxu0 %v1522
        %v1611 = vpop.f32.mrb[0].mxu0
        %v1612 = vadd.f32 %v1527, %v1611
        %v1613 = vpop.f32.mrb[0].mxu0
        %v1614 = vpop.f32.mrb[0].mxu0
        %v1615 = vpop.f32.mrb[0].mxu0
        %1616 = vdwg.mxu0
        %v1617 = vadd.f32 %v1032, %v1612
        %v1618 = vsel %vm1033, %v1617, 0.0
        %1619 = vadd.xlane.f32.xlu0 %v1618
        %v1620 = vpop.xlane.xlu0 %1619
        %v1621 = vmul.f32 %v1620, %v1037
        %v1622 = vsub.f32 %v1617, %v1621
        %v1623 = vmul.f32 %v1622, %v1622
        %v1624 = vsel %vm1033, %v1623, 0.0
        %1625 = vadd.xlane.f32.xlu0 %v1624
        %v1626 = vpop.xlane.xlu0 %1625
        %v1627 = vmul.f32 %v1626, %v1037
        %v1628 = vadd.f32 %v1627, 1e-06
        %v1629 = vrsqrt.pop %v1628
        %v1630 = vmul.f32 %v1622, %v1629
        %v1632 = vlaneseq
        %v1633 = vshrl.u32 %v1632, 7
        %v1634 = vsub.s32 0, %v1633
        %v1635 = vrot.slane %v932, %v1634
        %v1637 = vmul.f32 %v1630, %v1635
        %v1639 = vlaneseq
        %v1640 = vshrl.u32 %v1639, 7
        %v1641 = vsub.s32 0, %v1640
        %v1642 = vrot.slane %v933, %v1641
        %v1644 = vadd.f32 %v1637, %v1642
        %v1645 = vpack.c.bf16 %v1644, %v1644
        %v1647 = vlaneseq
        %v1648 = vshrl.u32 %v1647, 7
        %v1649 = vsub.s32 0, %v1648
        %v1650 = vrot.slane %v966, %v1649
        %v1651 = vlaneseq
        %v1652 = vshrl.u32 %v1651, 7
        %v1653 = vsub.s32 1, %v1652
        %v1654 = vrot.slane %v966, %v1653
        %v1655 = vlaneseq
        %v1656 = vshrl.u32 %v1655, 7
        %v1657 = vsub.s32 2, %v1656
        %v1658 = vrot.slane %v966, %v1657
        %v1659 = vlaneseq
        %v1660 = vshrl.u32 %v1659, 7
        %v1661 = vsub.s32 3, %v1660
        %v1662 = vrot.slane %v966, %v1661
        %v1699 = vunpack.c.l.b16 %v934
        %v1700 = vunpack.c.h.b16 %v934
        %v1701 = vunpack.c.l.b16 %v935
        %v1702 = vunpack.c.h.b16 %v935
        %v1703 = vunpack.c.l.b16 %v936
        %v1704 = vunpack.c.h.b16 %v936
        %v1705 = vunpack.c.l.b16 %v937
        %v1706 = vunpack.c.h.b16 %v937
        %v1707 = vunpack.c.l.b16 %v938
        %v1708 = vunpack.c.h.b16 %v938
        %v1709 = vunpack.c.l.b16 %v939
        %v1710 = vunpack.c.h.b16 %v939
        %v1711 = vunpack.c.l.b16 %v940
        %v1712 = vunpack.c.h.b16 %v940
        %v1713 = vunpack.c.l.b16 %v941
        %v1714 = vunpack.c.h.b16 %v941
        %v1715 = vunpack.c.l.b16 %v942
        %v1716 = vunpack.c.h.b16 %v942
        %v1717 = vunpack.c.l.b16 %v943
        %v1718 = vunpack.c.h.b16 %v943
        %v1719 = vunpack.c.l.b16 %v944
        %v1720 = vunpack.c.h.b16 %v944
        %v1721 = vunpack.c.l.b16 %v945
        %v1722 = vunpack.c.h.b16 %v945
        %v1723 = vunpack.c.l.b16 %v946
        %v1724 = vunpack.c.h.b16 %v946
        %v1725 = vunpack.c.l.b16 %v947
        %v1726 = vunpack.c.h.b16 %v947
        %v1727 = vunpack.c.l.b16 %v948
        %v1728 = vunpack.c.h.b16 %v948
        %v1729 = vunpack.c.l.b16 %v949
        %v1730 = vunpack.c.h.b16 %v949
        %v1731 = vunpack.c.l.b16 %v950
        %v1732 = vunpack.c.h.b16 %v950
        %v1733 = vunpack.c.l.b16 %v951
        %v1734 = vunpack.c.h.b16 %v951
        %v1735 = vunpack.c.l.b16 %v952
        %v1736 = vunpack.c.h.b16 %v952
        %v1737 = vunpack.c.l.b16 %v953
        %v1738 = vunpack.c.h.b16 %v953
        %v1739 = vunpack.c.l.b16 %v954
        %v1740 = vunpack.c.h.b16 %v954
        %v1741 = vunpack.c.l.b16 %v955
        %v1742 = vunpack.c.h.b16 %v955
        %v1743 = vunpack.c.l.b16 %v956
        %v1744 = vunpack.c.h.b16 %v956
        %v1745 = vunpack.c.l.b16 %v957
        %v1746 = vunpack.c.h.b16 %v957
        %v1747 = vunpack.c.l.b16 %v958
        %v1748 = vunpack.c.h.b16 %v958
        %v1749 = vunpack.c.l.b16 %v959
        %v1750 = vunpack.c.h.b16 %v959
        %v1751 = vunpack.c.l.b16 %v960
        %v1752 = vunpack.c.h.b16 %v960
        %v1753 = vunpack.c.l.b16 %v961
        %v1754 = vunpack.c.h.b16 %v961
        %v1755 = vunpack.c.l.b16 %v962
        %v1756 = vunpack.c.h.b16 %v962
        %v1757 = vunpack.c.l.b16 %v963
        %v1758 = vunpack.c.h.b16 %v963
        %v1759 = vunpack.c.l.b16 %v964
        %v1760 = vunpack.c.h.b16 %v964
        %v1761 = vunpack.c.l.b16 %v965
        %v1762 = vunpack.c.h.b16 %v965
        %v1763 = vpack.c.b16 %v1703, %v1699
        %v1764 = vpack.c.b16 %v1704, %v1700
        %v1765 = vpack.c.b16 %v1705, %v1701
        %v1766 = vpack.c.b16 %v1706, %v1702
        %v1767 = vpack.c.b16 %v1711, %v1707
        %v1768 = vpack.c.b16 %v1712, %v1708
        %v1769 = vpack.c.b16 %v1713, %v1709
        %v1770 = vpack.c.b16 %v1714, %v1710
        %v1771 = vpack.c.b16 %v1719, %v1715
        %v1772 = vpack.c.b16 %v1720, %v1716
        %v1773 = vpack.c.b16 %v1721, %v1717
        %v1774 = vpack.c.b16 %v1722, %v1718
        %v1775 = vpack.c.b16 %v1727, %v1723
        %v1776 = vpack.c.b16 %v1728, %v1724
        %v1777 = vpack.c.b16 %v1729, %v1725
        %v1778 = vpack.c.b16 %v1730, %v1726
        %v1779 = vpack.c.b16 %v1735, %v1731
        %v1780 = vpack.c.b16 %v1736, %v1732
        %v1781 = vpack.c.b16 %v1737, %v1733
        %v1782 = vpack.c.b16 %v1738, %v1734
        %v1783 = vpack.c.b16 %v1743, %v1739
        %v1784 = vpack.c.b16 %v1744, %v1740
        %v1785 = vpack.c.b16 %v1745, %v1741
        %v1786 = vpack.c.b16 %v1746, %v1742
        %v1787 = vpack.c.b16 %v1751, %v1747
        %v1788 = vpack.c.b16 %v1752, %v1748
        %v1789 = vpack.c.b16 %v1753, %v1749
        %v1790 = vpack.c.b16 %v1754, %v1750
        %v1791 = vpack.c.b16 %v1759, %v1755
        %v1792 = vpack.c.b16 %v1760, %v1756
        %v1793 = vpack.c.b16 %v1761, %v1757
        %v1794 = vpack.c.b16 %v1762, %v1758
        %1827 = vmatprep.subr.bf16.mxu0 %v1764
        %1828 = vmatpush1.bf16.msra.mxu0 %v1763
        %1829 = vmatprep.subr.bf16.mxu0 %v1768
        %1830 = vmatpush1.bf16.msra.mxu0 %v1767
        %1831 = vmatprep.subr.bf16.mxu0 %v1772
        %1832 = vmatpush1.bf16.msra.mxu0 %v1771
        %1833 = vmatprep.subr.bf16.mxu0 %v1776
        %1834 = vmatpush1.bf16.msra.mxu0 %v1775
        %1835 = vmatprep.subr.bf16.mxu0 %v1780
        %1836 = vmatpush1.bf16.msra.mxu0 %v1779
        %1837 = vmatprep.subr.bf16.mxu0 %v1784
        %1838 = vmatpush1.bf16.msra.mxu0 %v1783
        %1839 = vmatprep.subr.bf16.mxu0 %v1788
        %1840 = vmatpush1.bf16.msra.mxu0 %v1787
        %1841 = vmatprep.subr.bf16.mxu0 %v1792
        %1842 = vmatpush1.bf16.msra.mxu0 %v1791
        %1843 = vmatprep.subr.bf16.mxu0 0
        %1844 = vmatpush1.bf16.msra.mxu0 0
        %1845 = vmatprep.subr.bf16.mxu0 0
        %1846 = vmatpush1.bf16.msra.mxu0 0
        %1847 = vmatprep.subr.bf16.mxu0 0
        %1848 = vmatpush1.bf16.msra.mxu0 0
        %1849 = vmatprep.subr.bf16.mxu0 0
        %1850 = vmatpush1.bf16.msra.mxu0 0
        %1851 = vmatprep.subr.bf16.mxu0 0
        %1852 = vmatpush1.bf16.msra.mxu0 0
        %1853 = vmatprep.subr.bf16.mxu0 0
        %1854 = vmatpush1.bf16.msra.mxu0 0
        %1855 = vmatprep.subr.bf16.mxu0 0
        %1856 = vmatpush1.bf16.msra.mxu0 0
        %1857 = vmatprep.subr.bf16.mxu0 0
        %1858 = vmatpush1.bf16.msra.mxu0 0
        %1859 = vmatprep.mubr.bf16.mxu0 0
        %1860 = vmatmul.mubr.bf16.gmra.mrb[0].mxu0 %v1645
        %v1861 = vpop.f32.mrb[0].mxu0
        %v1862 = vadd.f32 %v1650, %v1861
        %v1863 = vpop.f32.mrb[0].mxu0
        %v1864 = vadd.f32 %v1654, %v1863
        %v1865 = vpop.f32.mrb[0].mxu0
        %v1866 = vpop.f32.mrb[0].mxu0
        %1867 = vdwg.mxu0
        %1868 = vmatprep.subr.bf16.mxu0 %v1766
        %1869 = vmatpush1.bf16.msra.mxu0 %v1765
        %1870 = vmatprep.subr.bf16.mxu0 %v1770
        %1871 = vmatpush1.bf16.msra.mxu0 %v1769
        %1872 = vmatprep.subr.bf16.mxu0 %v1774
        %1873 = vmatpush1.bf16.msra.mxu0 %v1773
        %1874 = vmatprep.subr.bf16.mxu0 %v1778
        %1875 = vmatpush1.bf16.msra.mxu0 %v1777
        %1876 = vmatprep.subr.bf16.mxu0 %v1782
        %1877 = vmatpush1.bf16.msra.mxu0 %v1781
        %1878 = vmatprep.subr.bf16.mxu0 %v1786
        %1879 = vmatpush1.bf16.msra.mxu0 %v1785
        %1880 = vmatprep.subr.bf16.mxu0 %v1790
        %1881 = vmatpush1.bf16.msra.mxu0 %v1789
        %1882 = vmatprep.subr.bf16.mxu0 %v1794
        %1883 = vmatpush1.bf16.msra.mxu0 %v1793
        %1884 = vmatprep.subr.bf16.mxu0 0
        %1885 = vmatpush1.bf16.msra.mxu0 0
        %1886 = vmatprep.subr.bf16.mxu0 0
        %1887 = vmatpush1.bf16.msra.mxu0 0
        %1888 = vmatprep.subr.bf16.mxu0 0
        %1889 = vmatpush1.bf16.msra.mxu0 0
        %1890 = vmatprep.subr.bf16.mxu0 0
        %1891 = vmatpush1.bf16.msra.mxu0 0
        %1892 = vmatprep.subr.bf16.mxu0 0
        %1893 = vmatpush1.bf16.msra.mxu0 0
        %1894 = vmatprep.subr.bf16.mxu0 0
        %1895 = vmatpush1.bf16.msra.mxu0 0
        %1896 = vmatprep.subr.bf16.mxu0 0
        %1897 = vmatpush1.bf16.msra.mxu0 0
        %1898 = vmatprep.subr.bf16.mxu0 0
        %1899 = vmatpush1.bf16.msra.mxu0 0
        %1900 = vmatprep.mubr.bf16.mxu0 0
        %1901 = vmatmul.mubr.bf16.gmra.mrb[0].mxu0 %v1645
        %v1902 = vpop.f32.mrb[0].mxu0
        %v1903 = vadd.f32 %v1658, %v1902
        %v1904 = vpop.f32.mrb[0].mxu0
        %v1905 = vadd.f32 %v1662, %v1904
        %v1906 = vpop.f32.mrb[0].mxu0
        %v1907 = vpop.f32.mrb[0].mxu0
        %1908 = vdwg.mxu0
        %v1909 = vmul.f32 %v1862, 0.5
        %v1910 = vmul.f32 %v1864, 0.5
        %v1911 = vmul.f32 %v1903, 0.5
        %v1912 = vmul.f32 %v1905, 0.5
        %v1913 = vmul.f32 %v1862, 0.044715
        %v1914 = vmul.f32 %v1864, 0.044715
        %v1915 = vmul.f32 %v1903, 0.044715
        %v1916 = vmul.f32 %v1905, 0.044715
        %v1917 = vmul.f32 %v1913, %v1862
        %v1918 = vmul.f32 %v1914, %v1864
        %v1919 = vmul.f32 %v1915, %v1903
        %v1920 = vmul.f32 %v1916, %v1905
        %v1921 = vmul.f32 %v1917, %v1862
        %v1922 = vmul.f32 %v1918, %v1864
        %v1923 = vmul.f32 %v1919, %v1903
        %v1924 = vmul.f32 %v1920, %v1905
        %v1925 = vadd.f32 %v1862, %v1921
        %v1926 = vadd.f32 %v1864, %v1922
        %v1927 = vadd.f32 %v1903, %v1923
        %v1928 = vadd.f32 %v1905, %v1924
        %v1929 = vmul.f32 %v1925, 0.7978846
        %v1930 = vmul.f32 %v1926, 0.7978846
        %v1931 = vmul.f32 %v1927, 0.7978846
        %v1932 = vmul.f32 %v1928, 0.7978846
        %v1933 = vtanh.pop %v1929
        %v1934 = vtanh.pop %v1930
        %v1935 = vtanh.pop %v1931
        %v1936 = vtanh.pop %v1932
        %v1937 = vadd.f32 %v1933, 1.0
        %v1938 = vadd.f32 %v1934, 1.0
        %v1939 = vadd.f32 %v1935, 1.0
        %v1940 = vadd.f32 %v1936, 1.0
        %v1941 = vmul.f32 %v1909, %v1937
        %v1942 = vmul.f32 %v1910, %v1938
        %v1943 = vmul.f32 %v1911, %v1939
        %v1944 = vmul.f32 %v1912, %v1940
        %v1945 = vpack.c.bf16 %v1941, %v1941
        %v1946 = vpack.c.bf16 %v1942, %v1942
        %v1947 = vpack.c.bf16 %v1943, %v1943
        %v1948 = vpack.c.bf16 %v1944, %v1944
        %v1950 = vlaneseq
        %v1951 = vshrl.u32 %v1950, 7
        %v1952 = vsub.s32 0, %v1951
        %v1953 = vrot.slane %v1031, %v1952
        %v2019 = vunpack.c.l.b16 %v967
        %v2020 = vunpack.c.l.b16 %v968
        %v2021 = vunpack.c.l.b16 %v969
        %v2022 = vunpack.c.l.b16 %v970
        %v2023 = vunpack.c.l.b16 %v971
        %v2024 = vunpack.c.l.b16 %v972
        %v2025 = vunpack.c.l.b16 %v973
        %v2026 = vunpack.c.l.b16 %v974
        %v2027 = vunpack.c.l.b16 %v975
        %v2028 = vunpack.c.l.b16 %v976
        %v2029 = vunpack.c.l.b16 %v977
        %v2030 = vunpack.c.l.b16 %v978
        %v2031 = vunpack.c.l.b16 %v979
        %v2032 = vunpack.c.l.b16 %v980
        %v2033 = vunpack.c.l.b16 %v981
        %v2034 = vunpack.c.l.b16 %v982
        %v2035 = vunpack.c.l.b16 %v983
        %v2036 = vunpack.c.l.b16 %v984
        %v2037 = vunpack.c.l.b16 %v985
        %v2038 = vunpack.c.l.b16 %v986
        %v2039 = vunpack.c.l.b16 %v987
        %v2040 = vunpack.c.l.b16 %v988
        %v2041 = vunpack.c.l.b16 %v989
        %v2042 = vunpack.c.l.b16 %v990
        %v2043 = vunpack.c.l.b16 %v991
        %v2044 = vunpack.c.l.b16 %v992
        %v2045 = vunpack.c.l.b16 %v993
        %v2046 = vunpack.c.l.b16 %v994
        %v2047 = vunpack.c.l.b16 %v995
        %v2048 = vunpack.c.l.b16 %v996
        %v2049 = vunpack.c.l.b16 %v997
        %v2050 = vunpack.c.l.b16 %v998
        %v2051 = vunpack.c.l.b16 %v999
        %v2052 = vunpack.c.l.b16 %v1000
        %v2053 = vunpack.c.l.b16 %v1001
        %v2054 = vunpack.c.l.b16 %v1002
        %v2055 = vunpack.c.l.b16 %v1003
        %v2056 = vunpack.c.l.b16 %v1004
        %v2057 = vunpack.c.l.b16 %v1005
        %v2058 = vunpack.c.l.b16 %v1006
        %v2059 = vunpack.c.l.b16 %v1007
        %v2060 = vunpack.c.l.b16 %v1008
        %v2061 = vunpack.c.l.b16 %v1009
        %v2062 = vunpack.c.l.b16 %v1010
        %v2063 = vunpack.c.l.b16 %v1011
        %v2064 = vunpack.c.l.b16 %v1012
        %v2065 = vunpack.c.l.b16 %v1013
        %v2066 = vunpack.c.l.b16 %v1014
        %v2067 = vunpack.c.l.b16 %v1015
        %v2068 = vunpack.c.l.b16 %v1016
        %v2069 = vunpack.c.l.b16 %v1017
        %v2070 = vunpack.c.l.b16 %v1018
        %v2071 = vunpack.c.l.b16 %v1019
        %v2072 = vunpack.c.l.b16 %v1020
        %v2073 = vunpack.c.l.b16 %v1021
        %v2074 = vunpack.c.l.b16 %v1022
        %v2075 = vunpack.c.l.b16 %v1023
        %v2076 = vunpack.c.l.b16 %v1024
        %v2077 = vunpack.c.l.b16 %v1025
        %v2078 = vunpack.c.l.b16 %v1026
        %v2079 = vunpack.c.l.b16 %v1027
        %v2080 = vunpack.c.l.b16 %v1028
        %v2081 = vunpack.c.l.b16 %v1029
        %v2082 = vunpack.c.l.b16 %v1030
        %v2083 = vpack.c.b16 %v2020, %v2019
        %v2084 = vpack.c.b16 %v2022, %v2021
        %v2085 = vpack.c.b16 %v2024, %v2023
        %v2086 = vpack.c.b16 %v2026, %v2025
        %v2087 = vpack.c.b16 %v2028, %v2027
        %v2088 = vpack.c.b16 %v2030, %v2029
        %v2089 = vpack.c.b16 %v2032, %v2031
        %v2090 = vpack.c.b16 %v2034, %v2033
        %v2091 = vpack.c.b16 %v2036, %v2035
        %v2092 = vpack.c.b16 %v2038, %v2037
        %v2093 = vpack.c.b16 %v2040, %v2039
        %v2094 = vpack.c.b16 %v2042, %v2041
        %v2095 = vpack.c.b16 %v2044, %v2043
        %v2096 = vpack.c.b16 %v2046, %v2045
        %v2097 = vpack.c.b16 %v2048, %v2047
        %v2098 = vpack.c.b16 %v2050, %v2049
        %v2099 = vpack.c.b16 %v2052, %v2051
        %v2100 = vpack.c.b16 %v2054, %v2053
        %v2101 = vpack.c.b16 %v2056, %v2055
        %v2102 = vpack.c.b16 %v2058, %v2057
        %v2103 = vpack.c.b16 %v2060, %v2059
        %v2104 = vpack.c.b16 %v2062, %v2061
        %v2105 = vpack.c.b16 %v2064, %v2063
        %v2106 = vpack.c.b16 %v2066, %v2065
        %v2107 = vpack.c.b16 %v2068, %v2067
        %v2108 = vpack.c.b16 %v2070, %v2069
        %v2109 = vpack.c.b16 %v2072, %v2071
        %v2110 = vpack.c.b16 %v2074, %v2073
        %v2111 = vpack.c.b16 %v2076, %v2075
        %v2112 = vpack.c.b16 %v2078, %v2077
        %v2113 = vpack.c.b16 %v2080, %v2079
        %v2114 = vpack.c.b16 %v2082, %v2081
        %2147 = vmatprep.subr.bf16.mxu0 0
        %2148 = vmatpush1.bf16.msra.mxu0 %v2083
        %2149 = vmatprep.subr.bf16.mxu0 0
        %2150 = vmatpush1.bf16.msra.mxu0 %v2084
        %2151 = vmatprep.subr.bf16.mxu0 0
        %2152 = vmatpush1.bf16.msra.mxu0 %v2085
        %2153 = vmatprep.subr.bf16.mxu0 0
        %2154 = vmatpush1.bf16.msra.mxu0 %v2086
        %2155 = vmatprep.subr.bf16.mxu0 0
        %2156 = vmatpush1.bf16.msra.mxu0 %v2087
        %2157 = vmatprep.subr.bf16.mxu0 0
        %2158 = vmatpush1.bf16.msra.mxu0 %v2088
        %2159 = vmatprep.subr.bf16.mxu0 0
        %2160 = vmatpush1.bf16.msra.mxu0 %v2089
        %2161 = vmatprep.subr.bf16.mxu0 0
        %2162 = vmatpush1.bf16.msra.mxu0 %v2090
        %2163 = vmatprep.subr.bf16.mxu0 0
        %2164 = vmatpush1.bf16.msra.mxu0 %v2091
        %2165 = vmatprep.subr.bf16.mxu0 0
        %2166 = vmatpush1.bf16.msra.mxu0 %v2092
        %2167 = vmatprep.subr.bf16.mxu0 0
        %2168 = vmatpush1.bf16.msra.mxu0 %v2093
        %2169 = vmatprep.subr.bf16.mxu0 0
        %2170 = vmatpush1.bf16.msra.mxu0 %v2094
        %2171 = vmatprep.subr.bf16.mxu0 0
        %2172 = vmatpush1.bf16.msra.mxu0 %v2095
        %2173 = vmatprep.subr.bf16.mxu0 0
        %2174 = vmatpush1.bf16.msra.mxu0 %v2096
        %2175 = vmatprep.subr.bf16.mxu0 0
        %2176 = vmatpush1.bf16.msra.mxu0 %v2097
        %2177 = vmatprep.subr.bf16.mxu0 0
        %2178 = vmatpush1.bf16.msra.mxu0 %v2098
        %2179 = vmatprep.mubr.bf16.mxu0 %v1946
        %2180 = vmatmul.mubr.bf16.gmra.mrb[0].mxu0 %v1945
        %v2181 = vpop.f32.mrb[0].mxu0
        %v2182 = vadd.f32 %v1953, %v2181
        %v2183 = vpop.f32.mrb[0].mxu0
        %v2184 = vpop.f32.mrb[0].mxu0
        %v2185 = vpop.f32.mrb[0].mxu0
        %2186 = vdwg.mxu0
        %2187 = vmatprep.subr.bf16.mxu0 0
        %2188 = vmatpush1.bf16.msra.mxu0 %v2099
        %2189 = vmatprep.subr.bf16.mxu0 0
        %2190 = vmatpush1.bf16.msra.mxu0 %v2100
        %2191 = vmatprep.subr.bf16.mxu0 0
        %2192 = vmatpush1.bf16.msra.mxu0 %v2101
        %2193 = vmatprep.subr.bf16.mxu0 0
        %2194 = vmatpush1.bf16.msra.mxu0 %v2102
        %2195 = vmatprep.subr.bf16.mxu0 0
        %2196 = vmatpush1.bf16.msra.mxu0 %v2103
        %2197 = vmatprep.subr.bf16.mxu0 0
        %2198 = vmatpush1.bf16.msra.mxu0 %v2104
        %2199 = vmatprep.subr.bf16.mxu0 0
        %2200 = vmatpush1.bf16.msra.mxu0 %v2105
        %2201 = vmatprep.subr.bf16.mxu0 0
        %2202 = vmatpush1.bf16.msra.mxu0 %v2106
        %2203 = vmatprep.subr.bf16.mxu0 0
        %2204 = vmatpush1.bf16.msra.mxu0 %v2107
        %2205 = vmatprep.subr.bf16.mxu0 0
        %2206 = vmatpush1.bf16.msra.mxu0 %v2108
        %2207 = vmatprep.subr.bf16.mxu0 0
        %2208 = vmatpush1.bf16.msra.mxu0 %v2109
        %2209 = vmatprep.subr.bf16.mxu0 0
        %2210 = vmatpush1.bf16.msra.mxu0 %v2110
        %2211 = vmatprep.subr.bf16.mxu0 0
        %2212 = vmatpush1.bf16.msra.mxu0 %v2111
        %2213 = vmatprep.subr.bf16.mxu0 0
        %2214 = vmatpush1.bf16.msra.mxu0 %v2112
        %2215 = vmatprep.subr.bf16.mxu0 0
        %2216 = vmatpush1.bf16.msra.mxu0 %v2113
        %2217 = vmatprep.subr.bf16.mxu0 0
        %2218 = vmatpush1.bf16.msra.mxu0 %v2114
        %2219 = vmatprep.mubr.bf16.mxu0 %v1948
        %2220 = vmatmul.mubr.bf16.gmra.mrb[0].mxu0 %v1947
        %v2221 = vpop.f32.mrb[0].mxu0
        %v2222 = vadd.f32 %v2182, %v2221
        %v2223 = vpop.f32.mrb[0].mxu0
        %v2224 = vpop.f32.mrb[0].mxu0
        %v2225 = vpop.f32.mrb[0].mxu0
        %2226 = vdwg.mxu0
        %v2227 = vadd.f32 %v1617, %v2222
        %2228 = vst [vmem:[#allocation2] sm:$0x1f] %v2227
        %p2229 = scmp.eq.s32.totalorder %s50, 11
        // Predicated region
        $region125: #{la_transformer_test_forward.4} parent=71 // pred_check
          %p2230 = pneg %p2229
        $region126: #{la_transformer_test_forward.4} parent=71 // pred_check_branch
          %2232 = sbr.rel (%p2230) target = $region128
        $region127: #{la_transformer_test_forward.4} parent=71 // pred_region
          %2233 = vst [vmem:[%s872] sm:$0x1f] %v2227
        $region128: #{la_transformer_test_forward.4} parent=71 // pred_fallthru
          _
        %p2234 = scmp.lt.s32.totalorder %s49, 1
        %s2235 = scalar_select %p2234, %s49, 1
        %s2236 = smul.addr %s2235, 8
        %s2237 = scalar_lea.vmem %s13, %s2236
        // Predicated region
        $region129: #{la_transformer_test_forward.4} parent=71 // pred_check
          %p2238 = pneg %p413
        $region130: #{la_transformer_test_forward.4} parent=71 // pred_check_branch
          %2240 = sbr.rel (%p2238) target = $region132
        $region131: #{la_transformer_test_forward.4} parent=71 // pred_region
          _
        $region132: #{la_transformer_test_forward.4} parent=71 // pred_fallthru
          _
      $region72: #{la_transformer_test_forward.4} parent=5 // pred_fallthru
        _
      %p2241 = scmp.le.s32.totalorder 2, %s40
      // Predicated region
      $region133: #{la_transformer_test_forward.4} parent=5 // pred_check
        %p2242 = pneg %p2241
      $region134: #{la_transformer_test_forward.4} parent=5 // pred_check_branch
        %2244 = sbr.rel (%p2242) target = $region136
      $region135: #{la_transformer_test_forward.4} parent=5 // pred_region
        %s2245 = ssub.s32 %s40, 2
        // Predicated region
        $region137: #{la_transformer_test_forward.4} parent=135 // pred_check
          %p2246 = pneg %p419
        $region138: #{la_transformer_test_forward.4} parent=135 // pred_check_branch
          %2248 = sbr.rel (%p2246) target = $region140
        $region139: #{la_transformer_test_forward.4} parent=135 // pred_region
          %p2249 = scmp.lt.s32.totalorder %s51, 1
          %s2250 = scalar_select %p2249, %s51, 1
          %s2251 = smul.addr %s2250, 8
          %s2252 = scalar_lea.vmem %s13, %s2251
        $region140: #{la_transformer_test_forward.4} parent=135 // pred_fallthru
          _
      $region136: #{la_transformer_test_forward.4} parent=5 // pred_fallthru
        _
    $region6: #{la_transformer_test_forward.4} parent=1 // loop_footer
      %s44 = sadd.s32 1, %s40
    $region7: #{la_transformer_test_forward.4} parent=1 // loop_footer_branch
      %39 = sbr.rel target = $region3
    $region8: #{la_transformer_test_forward.4} parent=1 // loop_exit
      _
    %2253 = vsyncpa [#allocation4], 1
    %s2254 = scalar_lea.sflag [#allocation4], 1
    %2255 = vsyncpa %s2254, 1
    %2256 = vsyncpa [#allocation6], 1
    %s2257 = scalar_lea.sflag [#allocation6], 1
    %2258 = vsyncpa %s2257, 1
    %2259 = vsyncpa [#allocation9], 1
    %s2260 = scalar_lea.sflag [#allocation9], 1
    %2261 = vsyncpa %s2260, 1
    %2262 = vsyncpa [#allocation12], 1
    %s2263 = scalar_lea.sflag [#allocation12], 1
    %2264 = vsyncpa %s2263, 1
    %2265 = vsyncpa [#allocation15], 1
    %s2266 = scalar_lea.sflag [#allocation15], 1
    %2267 = vsyncpa %s2266, 1
    %2268 = vsyncpa [#allocation18], 1
    %s2269 = scalar_lea.sflag [#allocation18], 1
    %2270 = vsyncpa %s2269, 1
    %2271 = vsyncpa [#allocation21], 1
    %s2272 = scalar_lea.sflag [#allocation21], 1
    %2273 = vsyncpa %s2272, 1

</llo_original>
